<compile_context>
chip_gen: v7x
topology: tpu7x:2x2x1
jax: 0.10.0
libtpu: 0.0.40
codegen_flags: <defaults>
</compile_context>

<pallas_src>
import functools
import math

import numpy as np
import jax
import jax.numpy as jnp
from jax.experimental import pallas as pl
from jax.experimental.pallas import tpu as pltpu


def _round_up(v, m):
    return (v + m - 1) // m * m


# ---------------------------------------------------------------------------
# Fused encoder-stage kernel (polyphase):
#     conv3x3 -> ReLU -> conv3x3 -> 2x2 maxpool (values + argmax indices)
# ---------------------------------------------------------------------------

def _stage_kernel(geo_ref, x_ref, w1_ref, b1_ref, w2_ref, b2_ref,
                  y_ref, idx_ref, col1_ref, col2_ref,
                  *, ph, pw, W, N, c_in, c_mid):
    """One batch-chunk per grid step.

    Layout: every activation is carried as its four 2x2 phases (phase index
    = 2*dy + dx); each phase is a (C, N) tile with the phase grid (ph, pw)
    flattened row-major on lanes and nb batch images packed along lanes
    (lane = b*ph*pw + r*pw + c, padded up to N, a multiple of 128).

    geo_ref  : (8, N)  int32   rows 0..3 = [r, c, pooled base flat idx, valid]
    x_ref    : (1, 4, c_in, N) f32   input phases
    w1_ref   : (c_mid, 9*c_in)  bf16  column = (ky*3+kx)*c_in + ci
    b1_ref   : (c_mid, 1) f32
    w2_ref   : (c_out, 9*c_mid) bf16
    b2_ref   : (c_out, 1) f32
    y_ref    : (1, c_out, N) f32   pooled values (lane dense, N % 128 == 0)
    idx_ref  : (1, c_out, N) int32 PyTorch-style flat argmax indices
    col1/2   : VMEM f32 scratch holding the im2col of all 4 output phases
    """
    r = geo_ref[0:1, :]
    c = geo_ref[1:2, :]
    base = geo_ref[2:3, :]
    valid = geo_ref[3:4, :] > 0

    def conv(phases, cin, w_ref, b_ref, col_ref, relu):
        # phases: list of 4 (cin, N) f32 values, phase index = 2*py + px.
        memo = {}

        def shifted(pin, qy, qx):
            """Input phase `pin`, shifted by (qy, qx) on the phase grid and
            zero padded at the phase-grid boundary.  <= 16 distinct values."""
            key = (pin, qy, qx)
            if key not in memo:
                v = phases[pin]
                a = qy * pw + qx
                if a != 0:
                    # roll(v, (-a) % N)[p] == v[p + a]; quarter-width XLU rotate.
                    v = pltpu.roll(v, shift=(-a) % N, axis=1)
                m = (valid & (r + qy >= 0) & (r + qy < ph)
                     & (c + qx >= 0) & (c + qx < pw))
                memo[key] = jnp.where(m, v, 0.0)
            return memo[key]

        # Write the 36 (4 output phases x 9 taps) im2col row blocks straight
        # into VMEM scratch: bounded vreg live ranges, no concatenate copy.
        for py in range(2):
            for px in range(2):
                po = 2 * py + px
                for ky in range(3):
                    for kx in range(3):
                        sy, sx = py + ky - 1, px + kx - 1
                        tap = shifted(2 * (sy % 2) + (sx % 2), sy // 2, sx // 2)
                        row0 = (po * 9 + ky * 3 + kx) * cin
                        col_ref[pl.ds(row0, cin), :] = tap

        wmat = w_ref[...]                                   # bf16 (Cout, 9*cin)
        bias = b_ref[...]                                   # f32  (Cout, 1)
        outs = []
        for po in range(4):
            col = col_ref[pl.ds(po * 9 * cin, 9 * cin), :].astype(jnp.bfloat16)
            o = jnp.dot(wmat, col, preferred_element_type=jnp.float32) + bias
            if relu:
                o = jnp.maximum(o, 0.0)
            outs.append(o)                                  # (Cout, N) f32
        return outs

    x_phases = [x_ref[0, p] for p in range(4)]
    h1 = conv(x_phases, c_in, w1_ref, b1_ref, col1_ref, relu=True)
    h2 = conv(h1, c_mid, w2_ref, b2_ref, col2_ref, relu=False)

    # 2x2 max pool + argmax: the 4 conv2 phase outputs ARE the 4 window
    # candidates, already in pooled lane order -> pure VPU, no gather/matmul.
    p00, p01, p10, p11 = h2                                  # phase = 2*dy + dx
    m0 = jnp.maximum(p00, p01)
    dx0 = jnp.where(p00 >= p01, 0, 1)
    m1 = jnp.maximum(p10, p11)
    dx1 = jnp.where(p10 >= p11, 0, 1)
    top = m0 >= m1
    vmax = jnp.maximum(m0, m1)
    dy = jnp.where(top, 0, 1)
    dx = jnp.where(top, dx0, dx1)

    y_ref[0] = vmax.astype(y_ref.dtype)
    idx_ref[0] = (base + dy * W + dx).astype(jnp.int32)      # ints never hit MXU


# ---------------------------------------------------------------------------
# Wrapper for one encoder stage
# ---------------------------------------------------------------------------

def _pack_weight(w_oihw, cin_p, cout_p):
    """(Cout, Cin, 3, 3) -> (cout_p, 9*cin_p) bf16, column = (ky*3+kx)*cin_p+ci."""
    cout, cin, kh, kw = w_oihw.shape
    wt = jnp.transpose(w_oihw, (0, 2, 3, 1))                # (Cout, ky, kx, Cin)
    wt = jnp.pad(wt, ((0, cout_p - cout), (0, 0), (0, 0), (0, cin_p - cin)))
    return wt.reshape(cout_p, kh * kw * cin_p).astype(jnp.bfloat16)


def _pack_bias(b, cout_p):
    return jnp.pad(b, (0, cout_p - b.shape[0])).reshape(cout_p, 1).astype(jnp.float32)


def _geometry(nb, ph, pw, W, N):
    """Trace-time numpy constants: phase-grid row/col, pooled base idx, valid."""
    P = ph * pw
    lane = np.arange(N)
    flat = lane % P
    r = flat // pw
    c = flat % pw
    valid = (lane < nb * P).astype(np.int64)
    base = (2 * r * W + 2 * c) * valid
    geo = np.zeros((8, N), np.int32)
    geo[0], geo[1], geo[2], geo[3] = r, c, base, valid
    return jnp.asarray(geo)


def encoder_stage(x_nchw, w1, b1, w2, b2):
    """conv3x3 -> ReLU -> conv3x3 -> maxpool2x2 with PyTorch-style indices."""
    B, Cin, H, W = x_nchw.shape
    assert H % 2 == 0 and W % 2 == 0
    ph, pw = H // 2, W // 2                  # phase grid == pooled grid
    P = ph * pw
    Cmid, Cout = w1.shape[0], w2.shape[0]
    Cin_p = _round_up(Cin, 8)
    Cmid_p = _round_up(Cmid, 8)
    Cout_p = _round_up(Cout, 8)

    # Pack as many batch images as possible along lanes of one grid step.
    nb = B
    while nb > 1 and (B % nb != 0 or nb * P > 4096):
        nb -= 1
    num_chunks = B // nb
    N = _round_up(nb * P, 128)               # lane-dense (>=128) outputs

    # Polyphase split of the stage input: a strided slice on the NCHW tensor
    # that already lives in HBM between pallas_calls (O(input) traffic, zero
    # kernel cost) -- this is what replaces the old in-kernel selection matmul.
    xp = jnp.stack([x_nchw[:, :, py::2, px::2].reshape(B, Cin, P)
                    for py in range(2) for px in range(2)], axis=1)
    if Cin_p != Cin:
        xp = jnp.pad(xp, ((0, 0), (0, 0), (0, Cin_p - Cin), (0, 0)))
    xp = xp.reshape(num_chunks, nb, 4, Cin_p, P).transpose(0, 2, 3, 1, 4)
    xp = xp.reshape(num_chunks, 4, Cin_p, nb * P)
    if N != nb * P:
        xp = jnp.pad(xp, ((0, 0), (0, 0), (0, 0), (0, N - nb * P)))

    geo = _geometry(nb, ph, pw, W, N)
    w1m = _pack_weight(w1, Cin_p, Cmid_p)
    w2m = _pack_weight(w2, Cmid_p, Cout_p)
    b1c = _pack_bias(b1, Cmid_p)
    b2c = _pack_bias(b2, Cout_p)

    kernel = functools.partial(_stage_kernel, ph=ph, pw=pw, W=W, N=N,
                               c_in=Cin_p, c_mid=Cmid_p)
    y, idx = pl.pallas_call(
        kernel,
        out_shape=(jax.ShapeDtypeStruct((num_chunks, Cout_p, N), jnp.float32),
                   jax.ShapeDtypeStruct((num_chunks, Cout_p, N), jnp.int32)),
        grid=(num_chunks,),
        in_specs=[
            pl.BlockSpec((8, N), lambda i: (0, 0)),                   # geo
            pl.BlockSpec((1, 4, Cin_p, N), lambda i: (i, 0, 0, 0)),   # x phases
            pl.BlockSpec((Cmid_p, 9 * Cin_p), lambda i: (0, 0)),      # w1
            pl.BlockSpec((Cmid_p, 1), lambda i: (0, 0)),              # b1
            pl.BlockSpec((Cout_p, 9 * Cmid_p), lambda i: (0, 0)),     # w2
            pl.BlockSpec((Cout_p, 1), lambda i: (0, 0)),              # b2
        ],
        out_specs=(pl.BlockSpec((1, Cout_p, N), lambda i: (i, 0, 0)),
                   pl.BlockSpec((1, Cout_p, N), lambda i: (i, 0, 0))),
        scratch_shapes=[pltpu.VMEM((36 * Cin_p, N), jnp.float32),
                        pltpu.VMEM((36 * Cmid_p, N), jnp.float32)],
        compiler_params=pltpu.CompilerParams(
            dimension_semantics=("parallel",)),
    )(geo, xp, w1m, b1c, w2m, b2c)

    def unpack(a, dtype):
        a = a[:, :Cout, :nb * P].reshape(num_chunks, Cout, nb, P)
        a = a.transpose(0, 2, 1, 3).reshape(B, Cout, ph, pw)
        return a.astype(dtype)

    return unpack(y, jnp.float32), unpack(idx, jnp.int32)


# ---------------------------------------------------------------------------
# SegNetEncoder: parameters + forward
#   layers are ConvBlocks: Conv(cin->cout,3,p=1) -> ReLU -> Conv(cout->cout,3,p=1)
# ---------------------------------------------------------------------------

def _init_conv(key, cin, cout, k=3):
    kw, kb = jax.random.split(key)
    bound = 1.0 / math.sqrt(cin * k * k)
    w = jax.random.uniform(kw, (cout, cin, k, k), jnp.float32, -bound, bound)
    b = jax.random.uniform(kb, (cout,), jnp.float32, -bound, bound)
    return w, b


def init_encoder(key, in_channels, out_channels, channel_expansion, num_blocks):
    specs, prev = [], None
    for n in range(num_blocks):
        cin = prev if prev is not None else in_channels
        cout = out_channels if n == 0 else out_channels * n * channel_expansion
        specs.append((cin, cout))
        prev = cout
    keys = jax.random.split(key, 2 * num_blocks)
    blocks = []
    for i, (cin, cout) in enumerate(specs):
        w1, b1 = _init_conv(keys[2 * i], cin, cout)
        w2, b2 = _init_conv(keys[2 * i + 1], cout, cout)
        blocks.append((w1, b1, w2, b2))
    return blocks


def segnet_encoder_forward(x_nchw, blocks):
    """Matches SegNetEncoder.forward: returns (x, [pool indices per stage])."""
    indices = []
    x = x_nchw
    for (w1, b1, w2, b2) in blocks:
        x, idx = encoder_stage(x, w1, b1, w2, b2)
        indices.append(idx)
    return x, indices


# ---------------------------------------------------------------------------
# Pure-JAX reference (f32, HIGHEST precision) for validation
# ---------------------------------------------------------------------------

def reference_forward(x, blocks):
    dn = ('NCHW', 'OIHW', 'NCHW')
    pre_list, pooled_list = [], []
    for (w1, b1, w2, b2) in blocks:
        x = jax.lax.conv_general_dilated(x, w1, (1, 1), 'SAME', dimension_numbers=dn,
                                         precision=jax.lax.Precision.HIGHEST)
        x = jnp.maximum(x + b1[None, :, None, None], 0.0)
        x = jax.lax.conv_general_dilated(x, w2, (1, 1), 'SAME', dimension_numbers=dn,
                                         precision=jax.lax.Precision.HIGHEST)
        x = x + b2[None, :, None, None]
        pre_list.append(x)
        B, C, H, W = x.shape
        win = x.reshape(B, C, H // 2, 2, W // 2, 2).transpose(0, 1, 2, 4, 3, 5)
        x = win.reshape(B, C, H // 2, W // 2, 4).max(axis=-1)
        pooled_list.append(x)
    return x, pre_list, pooled_list


# ---------------------------------------------------------------------------
# main
# ---------------------------------------------------------------------------

if __name__ == "__main__":
    key = jax.random.PRNGKey(0)
    kp, kx = jax.random.split(key)

    cfg = dict(in_channels=4, out_channels=8, channel_expansion=2, num_blocks=2)
    blocks = init_encoder(kp, **cfg)

    x = jax.random.normal(kx, (2, 4, 16, 16), jnp.float32)      # NCHW like PyTorch

    fwd = jax.jit(segnet_encoder_forward)
    y, indices = fwd(x, blocks)
    jax.block_until_ready((y, indices))

    assert y.shape == (2, 16, 4, 4) and y.dtype == jnp.float32, y.shape
    assert indices[0].shape == (2, 8, 8, 8) and indices[0].dtype == jnp.int32
    assert indices[1].shape == (2, 16, 4, 4) and indices[1].dtype == jnp.int32

    # --- validate against a pure-JAX f32/HIGHEST reference -----------------
    # Tolerances account for the (intentional) bf16 MXU operands in the kernel.
    y_ref, pre_refs, pooled_refs = reference_forward(x, blocks)
    max_err = float(jnp.max(jnp.abs(y - y_ref)))
    assert max_err < 5e-2, max_err

    for s, idx_k in enumerate(indices):
        B, C, h, w = idx_k.shape
        Hs, Ws = 2 * h, 2 * w
        r, c = idx_k // Ws, idx_k % Ws
        ii = jnp.arange(h)[None, None, :, None]
        jj = jnp.arange(w)[None, None, None, :]
        # index lands inside the correct 2x2 window
        assert bool(jnp.all((r // 2 == ii) & (c // 2 == jj)))
        # the value at the index equals the window max (up to bf16 noise)
        pre_flat = pre_refs[s].reshape(B, C, Hs * Ws)
        gathered = jnp.take_along_axis(pre_flat, idx_k.reshape(B, C, h * w), axis=-1)
        gerr = float(jnp.max(jnp.abs(gathered.reshape(B, C, h, w) - pooled_refs[s])))
        assert gerr < 5e-2, (s, gerr)

    print("KERNEL_OK")
</pallas_src>

<mosaic_0001>
module attributes {stable_mosaic.version = 11 : i64} {
  func.func @_stage_kernel(%arg0: i32, %arg1: memref<8x128xi32, #tpu.memory_space<vmem>>, %arg2: memref<1x4x8x128xf32, #tpu.memory_space<vmem>>, %arg3: memref<8x72xbf16, #tpu.memory_space<vmem>>, %arg4: memref<8x1xf32, #tpu.memory_space<vmem>>, %arg5: memref<8x72xbf16, #tpu.memory_space<vmem>>, %arg6: memref<8x1xf32, #tpu.memory_space<vmem>>, %arg7: memref<1x8x128xf32, #tpu.memory_space<vmem>>, %arg8: memref<1x8x128xi32, #tpu.memory_space<vmem>>, %arg9: memref<288x128xf32, #tpu.memory_space<vmem>>, %arg10: memref<288x128xf32, #tpu.memory_space<vmem>>) attributes {dimension_semantics = [#tpu.dimension_semantics<parallel>], iteration_bounds = array<i64: 1>, scalar_prefetch = 0 : i64, scratch_operands = 2 : i64, tpu.core_type = #tpu.core_type<tc>, window_params = [{pipeline_mode = #tpu.pipeline_mode<synchronous>, transform_indices = @transform_0, window_bounds = array<i64: 8, 128>}, {transform_indices = @transform_1, window_bounds = array<i64: 1, 4, 8, 128>}, {pipeline_mode = #tpu.pipeline_mode<synchronous>, transform_indices = @transform_2, window_bounds = array<i64: 8, 72>}, {pipeline_mode = #tpu.pipeline_mode<synchronous>, transform_indices = @transform_3, window_bounds = array<i64: 8, 1>}, {pipeline_mode = #tpu.pipeline_mode<synchronous>, transform_indices = @transform_4, window_bounds = array<i64: 8, 72>}, {pipeline_mode = #tpu.pipeline_mode<synchronous>, transform_indices = @transform_5, window_bounds = array<i64: 8, 1>}, {transform_indices = @transform_6, window_bounds = array<i64: 1, 8, 128>}, {transform_indices = @transform_7, window_bounds = array<i64: 1, 8, 128>}]} {
    %c0 = arith.constant 0 : index
    %c0_0 = arith.constant 0 : index
    %0 = vector.load %arg1[%c0, %c0_0] : memref<8x128xi32, #tpu.memory_space<vmem>>, vector<1x128xi32>
    %c1 = arith.constant 1 : index
    %c0_1 = arith.constant 0 : index
    %1 = vector.load %arg1[%c1, %c0_1] : memref<8x128xi32, #tpu.memory_space<vmem>>, vector<1x128xi32>
    %c2 = arith.constant 2 : index
    %c0_2 = arith.constant 0 : index
    %2 = vector.load %arg1[%c2, %c0_2] : memref<8x128xi32, #tpu.memory_space<vmem>>, vector<1x128xi32>
    %c3 = arith.constant 3 : index
    %c0_3 = arith.constant 0 : index
    %3 = vector.load %arg1[%c3, %c0_3] : memref<8x128xi32, #tpu.memory_space<vmem>>, vector<1x128xi32>
    %c0_i32 = arith.constant 0 : i32
    %4 = vector.broadcast %c0_i32 : i32 to vector<1x128xi32>
    %5 = arith.cmpi sgt, %3, %4 : vector<1x128xi32>
    %c0_4 = arith.constant 0 : index
    %c0_5 = arith.constant 0 : index
    %c0_6 = arith.constant 0 : index
    %c0_7 = arith.constant 0 : index
    %6 = vector.load %arg2[%c0_4, %c0_5, %c0_6, %c0_7] : memref<1x4x8x128xf32, #tpu.memory_space<vmem>>, vector<1x1x8x128xf32>
    %7 = vector.shape_cast %6 : vector<1x1x8x128xf32> to vector<8x128xf32>
    %c0_8 = arith.constant 0 : index
    %c1_9 = arith.constant 1 : index
    %c0_10 = arith.constant 0 : index
    %c0_11 = arith.constant 0 : index
    %8 = vector.load %arg2[%c0_8, %c1_9, %c0_10, %c0_11] : memref<1x4x8x128xf32, #tpu.memory_space<vmem>>, vector<1x1x8x128xf32>
    %9 = vector.shape_cast %8 : vector<1x1x8x128xf32> to vector<8x128xf32>
    %c0_12 = arith.constant 0 : index
    %c2_13 = arith.constant 2 : index
    %c0_14 = arith.constant 0 : index
    %c0_15 = arith.constant 0 : index
    %10 = vector.load %arg2[%c0_12, %c2_13, %c0_14, %c0_15] : memref<1x4x8x128xf32, #tpu.memory_space<vmem>>, vector<1x1x8x128xf32>
    %11 = vector.shape_cast %10 : vector<1x1x8x128xf32> to vector<8x128xf32>
    %c0_16 = arith.constant 0 : index
    %c3_17 = arith.constant 3 : index
    %c0_18 = arith.constant 0 : index
    %c0_19 = arith.constant 0 : index
    %12 = vector.load %arg2[%c0_16, %c3_17, %c0_18, %c0_19] : memref<1x4x8x128xf32, #tpu.memory_space<vmem>>, vector<1x1x8x128xf32>
    %13 = vector.shape_cast %12 : vector<1x1x8x128xf32> to vector<8x128xf32>
    %c9_i32 = arith.constant 9 : i32
    %14 = tpu.dynamic_rotate %13 by %c9_i32 dim 1 : vector<8x128xf32>, i32 -> vector<8x128xf32>
    %c-1_i32 = arith.constant -1 : i32
    %15 = vector.broadcast %c-1_i32 : i32 to vector<1x128xi32>
    %16 = arith.addi %0, %15 : vector<1x128xi32>
    %c0_i32_20 = arith.constant 0 : i32
    %17 = vector.broadcast %c0_i32_20 : i32 to vector<1x128xi32>
    %18 = arith.cmpi sge, %16, %17 : vector<1x128xi32>
    %19 = arith.andi %5, %18 : vector<1x128xi1>
    %c-1_i32_21 = arith.constant -1 : i32
    %20 = vector.broadcast %c-1_i32_21 : i32 to vector<1x128xi32>
    %21 = arith.addi %0, %20 : vector<1x128xi32>
    %c8_i32 = arith.constant 8 : i32
    %22 = vector.broadcast %c8_i32 : i32 to vector<1x128xi32>
    %23 = arith.cmpi slt, %21, %22 : vector<1x128xi32>
    %24 = arith.andi %19, %23 : vector<1x128xi1>
    %c-1_i32_22 = arith.constant -1 : i32
    %25 = vector.broadcast %c-1_i32_22 : i32 to vector<1x128xi32>
    %26 = arith.addi %1, %25 : vector<1x128xi32>
    %c0_i32_23 = arith.constant 0 : i32
    %27 = vector.broadcast %c0_i32_23 : i32 to vector<1x128xi32>
    %28 = arith.cmpi sge, %26, %27 : vector<1x128xi32>
    %29 = arith.andi %24, %28 : vector<1x128xi1>
    %c-1_i32_24 = arith.constant -1 : i32
    %30 = vector.broadcast %c-1_i32_24 : i32 to vector<1x128xi32>
    %31 = arith.addi %1, %30 : vector<1x128xi32>
    %c8_i32_25 = arith.constant 8 : i32
    %32 = vector.broadcast %c8_i32_25 : i32 to vector<1x128xi32>
    %33 = arith.cmpi slt, %31, %32 : vector<1x128xi32>
    %34 = arith.andi %29, %33 : vector<1x128xi1>
    %cst = arith.constant 0.000000e+00 : f32
    %35 = vector.shape_cast %34 : vector<1x128xi1> to vector<1x128xi1>
    %36 = vector.broadcast %35 : vector<1x128xi1> to vector<8x128xi1>
    %37 = vector.broadcast %cst : f32 to vector<8x128xf32>
    %38 = arith.select %36, %14, %37 : vector<8x128xi1>, vector<8x128xf32>
    %c0_26 = arith.constant 0 : index
    %c0_27 = arith.constant 0 : index
    %39 = vector.load %arg9[%c0_26, %c0_27] : memref<288x128xf32, #tpu.memory_space<vmem>>, vector<8x128xf32>
    tpu.vector_store %arg9[%c0_26, %c0_27], %38 {strides = array<i32>} : memref<288x128xf32, #tpu.memory_space<vmem>>, vector<8x128xf32>,
    %c8_i32_28 = arith.constant 8 : i32
    %40 = tpu.dynamic_rotate %11 by %c8_i32_28 dim 1 : vector<8x128xf32>, i32 -> vector<8x128xf32>
    %c-1_i32_29 = arith.constant -1 : i32
    %41 = vector.broadcast %c-1_i32_29 : i32 to vector<1x128xi32>
    %42 = arith.addi %0, %41 : vector<1x128xi32>
    %c0_i32_30 = arith.constant 0 : i32
    %43 = vector.broadcast %c0_i32_30 : i32 to vector<1x128xi32>
    %44 = arith.cmpi sge, %42, %43 : vector<1x128xi32>
    %45 = arith.andi %5, %44 : vector<1x128xi1>
    %c-1_i32_31 = arith.constant -1 : i32
    %46 = vector.broadcast %c-1_i32_31 : i32 to vector<1x128xi32>
    %47 = arith.addi %0, %46 : vector<1x128xi32>
    %c8_i32_32 = arith.constant 8 : i32
    %48 = vector.broadcast %c8_i32_32 : i32 to vector<1x128xi32>
    %49 = arith.cmpi slt, %47, %48 : vector<1x128xi32>
    %50 = arith.andi %45, %49 : vector<1x128xi1>
    %c0_i32_33 = arith.constant 0 : i32
    %51 = vector.broadcast %c0_i32_33 : i32 to vector<1x128xi32>
    %52 = arith.addi %1, %51 : vector<1x128xi32>
    %c0_i32_34 = arith.constant 0 : i32
    %53 = vector.broadcast %c0_i32_34 : i32 to vector<1x128xi32>
    %54 = arith.cmpi sge, %52, %53 : vector<1x128xi32>
    %55 = arith.andi %50, %54 : vector<1x128xi1>
    %c0_i32_35 = arith.constant 0 : i32
    %56 = vector.broadcast %c0_i32_35 : i32 to vector<1x128xi32>
    %57 = arith.addi %1, %56 : vector<1x128xi32>
    %c8_i32_36 = arith.constant 8 : i32
    %58 = vector.broadcast %c8_i32_36 : i32 to vector<1x128xi32>
    %59 = arith.cmpi slt, %57, %58 : vector<1x128xi32>
    %60 = arith.andi %55, %59 : vector<1x128xi1>
    %cst_37 = arith.constant 0.000000e+00 : f32
    %61 = vector.shape_cast %60 : vector<1x128xi1> to vector<1x128xi1>
    %62 = vector.broadcast %61 : vector<1x128xi1> to vector<8x128xi1>
    %63 = vector.broadcast %cst_37 : f32 to vector<8x128xf32>
    %64 = arith.select %62, %40, %63 : vector<8x128xi1>, vector<8x128xf32>
    %c8 = arith.constant 8 : index
    %c0_38 = arith.constant 0 : index
    %65 = vector.load %arg9[%c8, %c0_38] : memref<288x128xf32, #tpu.memory_space<vmem>>, vector<8x128xf32>
    tpu.vector_store %arg9[%c8, %c0_38], %64 {strides = array<i32>} : memref<288x128xf32, #tpu.memory_space<vmem>>, vector<8x128xf32>,
    %c8_i32_39 = arith.constant 8 : i32
    %66 = tpu.dynamic_rotate %13 by %c8_i32_39 dim 1 : vector<8x128xf32>, i32 -> vector<8x128xf32>
    %c-1_i32_40 = arith.constant -1 : i32
    %67 = vector.broadcast %c-1_i32_40 : i32 to vector<1x128xi32>
    %68 = arith.addi %0, %67 : vector<1x128xi32>
    %c0_i32_41 = arith.constant 0 : i32
    %69 = vector.broadcast %c0_i32_41 : i32 to vector<1x128xi32>
    %70 = arith.cmpi sge, %68, %69 : vector<1x128xi32>
    %71 = arith.andi %5, %70 : vector<1x128xi1>
    %c-1_i32_42 = arith.constant -1 : i32
    %72 = vector.broadcast %c-1_i32_42 : i32 to vector<1x128xi32>
    %73 = arith.addi %0, %72 : vector<1x128xi32>
    %c8_i32_43 = arith.constant 8 : i32
    %74 = vector.broadcast %c8_i32_43 : i32 to vector<1x128xi32>
    %75 = arith.cmpi slt, %73, %74 : vector<1x128xi32>
    %76 = arith.andi %71, %75 : vector<1x128xi1>
    %c0_i32_44 = arith.constant 0 : i32
    %77 = vector.broadcast %c0_i32_44 : i32 to vector<1x128xi32>
    %78 = arith.addi %1, %77 : vector<1x128xi32>
    %c0_i32_45 = arith.constant 0 : i32
    %79 = vector.broadcast %c0_i32_45 : i32 to vector<1x128xi32>
    %80 = arith.cmpi sge, %78, %79 : vector<1x128xi32>
    %81 = arith.andi %76, %80 : vector<1x128xi1>
    %c0_i32_46 = arith.constant 0 : i32
    %82 = vector.broadcast %c0_i32_46 : i32 to vector<1x128xi32>
    %83 = arith.addi %1, %82 : vector<1x128xi32>
    %c8_i32_47 = arith.constant 8 : i32
    %84 = vector.broadcast %c8_i32_47 : i32 to vector<1x128xi32>
    %85 = arith.cmpi slt, %83, %84 : vector<1x128xi32>
    %86 = arith.andi %81, %85 : vector<1x128xi1>
    %cst_48 = arith.constant 0.000000e+00 : f32
    %87 = vector.shape_cast %86 : vector<1x128xi1> to vector<1x128xi1>
    %88 = vector.broadcast %87 : vector<1x128xi1> to vector<8x128xi1>
    %89 = vector.broadcast %cst_48 : f32 to vector<8x128xf32>
    %90 = arith.select %88, %66, %89 : vector<8x128xi1>, vector<8x128xf32>
    %c16 = arith.constant 16 : index
    %c0_49 = arith.constant 0 : index
    %91 = vector.load %arg9[%c16, %c0_49] : memref<288x128xf32, #tpu.memory_space<vmem>>, vector<8x128xf32>
    tpu.vector_store %arg9[%c16, %c0_49], %90 {strides = array<i32>} : memref<288x128xf32, #tpu.memory_space<vmem>>, vector<8x128xf32>,
    %c1_i32 = arith.constant 1 : i32
    %92 = tpu.dynamic_rotate %9 by %c1_i32 dim 1 : vector<8x128xf32>, i32 -> vector<8x128xf32>
    %c0_i32_50 = arith.constant 0 : i32
    %93 = vector.broadcast %c0_i32_50 : i32 to vector<1x128xi32>
    %94 = arith.addi %0, %93 : vector<1x128xi32>
    %c0_i32_51 = arith.constant 0 : i32
    %95 = vector.broadcast %c0_i32_51 : i32 to vector<1x128xi32>
    %96 = arith.cmpi sge, %94, %95 : vector<1x128xi32>
    %97 = arith.andi %5, %96 : vector<1x128xi1>
    %c0_i32_52 = arith.constant 0 : i32
    %98 = vector.broadcast %c0_i32_52 : i32 to vector<1x128xi32>
    %99 = arith.addi %0, %98 : vector<1x128xi32>
    %c8_i32_53 = arith.constant 8 : i32
    %100 = vector.broadcast %c8_i32_53 : i32 to vector<1x128xi32>
    %101 = arith.cmpi slt, %99, %100 : vector<1x128xi32>
    %102 = arith.andi %97, %101 : vector<1x128xi1>
    %c-1_i32_54 = arith.constant -1 : i32
    %103 = vector.broadcast %c-1_i32_54 : i32 to vector<1x128xi32>
    %104 = arith.addi %1, %103 : vector<1x128xi32>
    %c0_i32_55 = arith.constant 0 : i32
    %105 = vector.broadcast %c0_i32_55 : i32 to vector<1x128xi32>
    %106 = arith.cmpi sge, %104, %105 : vector<1x128xi32>
    %107 = arith.andi %102, %106 : vector<1x128xi1>
    %c-1_i32_56 = arith.constant -1 : i32
    %108 = vector.broadcast %c-1_i32_56 : i32 to vector<1x128xi32>
    %109 = arith.addi %1, %108 : vector<1x128xi32>
    %c8_i32_57 = arith.constant 8 : i32
    %110 = vector.broadcast %c8_i32_57 : i32 to vector<1x128xi32>
    %111 = arith.cmpi slt, %109, %110 : vector<1x128xi32>
    %112 = arith.andi %107, %111 : vector<1x128xi1>
    %cst_58 = arith.constant 0.000000e+00 : f32
    %113 = vector.shape_cast %112 : vector<1x128xi1> to vector<1x128xi1>
    %114 = vector.broadcast %113 : vector<1x128xi1> to vector<8x128xi1>
    %115 = vector.broadcast %cst_58 : f32 to vector<8x128xf32>
    %116 = arith.select %114, %92, %115 : vector<8x128xi1>, vector<8x128xf32>
    %c24 = arith.constant 24 : index
    %c0_59 = arith.constant 0 : index
    %117 = vector.load %arg9[%c24, %c0_59] : memref<288x128xf32, #tpu.memory_space<vmem>>, vector<8x128xf32>
    tpu.vector_store %arg9[%c24, %c0_59], %116 {strides = array<i32>} : memref<288x128xf32, #tpu.memory_space<vmem>>, vector<8x128xf32>,
    %c0_i32_60 = arith.constant 0 : i32
    %118 = vector.broadcast %c0_i32_60 : i32 to vector<1x128xi32>
    %119 = arith.addi %0, %118 : vector<1x128xi32>
    %c0_i32_61 = arith.constant 0 : i32
    %120 = vector.broadcast %c0_i32_61 : i32 to vector<1x128xi32>
    %121 = arith.cmpi sge, %119, %120 : vector<1x128xi32>
    %122 = arith.andi %5, %121 : vector<1x128xi1>
    %c0_i32_62 = arith.constant 0 : i32
    %123 = vector.broadcast %c0_i32_62 : i32 to vector<1x128xi32>
    %124 = arith.addi %0, %123 : vector<1x128xi32>
    %c8_i32_63 = arith.constant 8 : i32
    %125 = vector.broadcast %c8_i32_63 : i32 to vector<1x128xi32>
    %126 = arith.cmpi slt, %124, %125 : vector<1x128xi32>
    %127 = arith.andi %122, %126 : vector<1x128xi1>
    %c0_i32_64 = arith.constant 0 : i32
    %128 = vector.broadcast %c0_i32_64 : i32 to vector<1x128xi32>
    %129 = arith.addi %1, %128 : vector<1x128xi32>
    %c0_i32_65 = arith.constant 0 : i32
    %130 = vector.broadcast %c0_i32_65 : i32 to vector<1x128xi32>
    %131 = arith.cmpi sge, %129, %130 : vector<1x128xi32>
    %132 = arith.andi %127, %131 : vector<1x128xi1>
    %c0_i32_66 = arith.constant 0 : i32
    %133 = vector.broadcast %c0_i32_66 : i32 to vector<1x128xi32>
    %134 = arith.addi %1, %133 : vector<1x128xi32>
    %c8_i32_67 = arith.constant 8 : i32
    %135 = vector.broadcast %c8_i32_67 : i32 to vector<1x128xi32>
    %136 = arith.cmpi slt, %134, %135 : vector<1x128xi32>
    %137 = arith.andi %132, %136 : vector<1x128xi1>
    %cst_68 = arith.constant 0.000000e+00 : f32
    %138 = vector.shape_cast %137 : vector<1x128xi1> to vector<1x128xi1>
    %139 = vector.broadcast %138 : vector<1x128xi1> to vector<8x128xi1>
    %140 = vector.broadcast %cst_68 : f32 to vector<8x128xf32>
    %141 = arith.select %139, %7, %140 : vector<8x128xi1>, vector<8x128xf32>
    %c32 = arith.constant 32 : index
    %c0_69 = arith.constant 0 : index
    %142 = vector.load %arg9[%c32, %c0_69] : memref<288x128xf32, #tpu.memory_space<vmem>>, vector<8x128xf32>
    tpu.vector_store %arg9[%c32, %c0_69], %141 {strides = array<i32>} : memref<288x128xf32, #tpu.memory_space<vmem>>, vector<8x128xf32>,
    %c0_i32_70 = arith.constant 0 : i32
    %143 = vector.broadcast %c0_i32_70 : i32 to vector<1x128xi32>
    %144 = arith.addi %0, %143 : vector<1x128xi32>
    %c0_i32_71 = arith.constant 0 : i32
    %145 = vector.broadcast %c0_i32_71 : i32 to vector<1x128xi32>
    %146 = arith.cmpi sge, %144, %145 : vector<1x128xi32>
    %147 = arith.andi %5, %146 : vector<1x128xi1>
    %c0_i32_72 = arith.constant 0 : i32
    %148 = vector.broadcast %c0_i32_72 : i32 to vector<1x128xi32>
    %149 = arith.addi %0, %148 : vector<1x128xi32>
    %c8_i32_73 = arith.constant 8 : i32
    %150 = vector.broadcast %c8_i32_73 : i32 to vector<1x128xi32>
    %151 = arith.cmpi slt, %149, %150 : vector<1x128xi32>
    %152 = arith.andi %147, %151 : vector<1x128xi1>
    %c0_i32_74 = arith.constant 0 : i32
    %153 = vector.broadcast %c0_i32_74 : i32 to vector<1x128xi32>
    %154 = arith.addi %1, %153 : vector<1x128xi32>
    %c0_i32_75 = arith.constant 0 : i32
    %155 = vector.broadcast %c0_i32_75 : i32 to vector<1x128xi32>
    %156 = arith.cmpi sge, %154, %155 : vector<1x128xi32>
    %157 = arith.andi %152, %156 : vector<1x128xi1>
    %c0_i32_76 = arith.constant 0 : i32
    %158 = vector.broadcast %c0_i32_76 : i32 to vector<1x128xi32>
    %159 = arith.addi %1, %158 : vector<1x128xi32>
    %c8_i32_77 = arith.constant 8 : i32
    %160 = vector.broadcast %c8_i32_77 : i32 to vector<1x128xi32>
    %161 = arith.cmpi slt, %159, %160 : vector<1x128xi32>
    %162 = arith.andi %157, %161 : vector<1x128xi1>
    %cst_78 = arith.constant 0.000000e+00 : f32
    %163 = vector.shape_cast %162 : vector<1x128xi1> to vector<1x128xi1>
    %164 = vector.broadcast %163 : vector<1x128xi1> to vector<8x128xi1>
    %165 = vector.broadcast %cst_78 : f32 to vector<8x128xf32>
    %166 = arith.select %164, %9, %165 : vector<8x128xi1>, vector<8x128xf32>
    %c40 = arith.constant 40 : index
    %c0_79 = arith.constant 0 : index
    %167 = vector.load %arg9[%c40, %c0_79] : memref<288x128xf32, #tpu.memory_space<vmem>>, vector<8x128xf32>
    tpu.vector_store %arg9[%c40, %c0_79], %166 {strides = array<i32>} : memref<288x128xf32, #tpu.memory_space<vmem>>, vector<8x128xf32>,
    %c1_i32_80 = arith.constant 1 : i32
    %168 = tpu.dynamic_rotate %13 by %c1_i32_80 dim 1 : vector<8x128xf32>, i32 -> vector<8x128xf32>
    %c0_i32_81 = arith.constant 0 : i32
    %169 = vector.broadcast %c0_i32_81 : i32 to vector<1x128xi32>
    %170 = arith.addi %0, %169 : vector<1x128xi32>
    %c0_i32_82 = arith.constant 0 : i32
    %171 = vector.broadcast %c0_i32_82 : i32 to vector<1x128xi32>
    %172 = arith.cmpi sge, %170, %171 : vector<1x128xi32>
    %173 = arith.andi %5, %172 : vector<1x128xi1>
    %c0_i32_83 = arith.constant 0 : i32
    %174 = vector.broadcast %c0_i32_83 : i32 to vector<1x128xi32>
    %175 = arith.addi %0, %174 : vector<1x128xi32>
    %c8_i32_84 = arith.constant 8 : i32
    %176 = vector.broadcast %c8_i32_84 : i32 to vector<1x128xi32>
    %177 = arith.cmpi slt, %175, %176 : vector<1x128xi32>
    %178 = arith.andi %173, %177 : vector<1x128xi1>
    %c-1_i32_85 = arith.constant -1 : i32
    %179 = vector.broadcast %c-1_i32_85 : i32 to vector<1x128xi32>
    %180 = arith.addi %1, %179 : vector<1x128xi32>
    %c0_i32_86 = arith.constant 0 : i32
    %181 = vector.broadcast %c0_i32_86 : i32 to vector<1x128xi32>
    %182 = arith.cmpi sge, %180, %181 : vector<1x128xi32>
    %183 = arith.andi %178, %182 : vector<1x128xi1>
    %c-1_i32_87 = arith.constant -1 : i32
    %184 = vector.broadcast %c-1_i32_87 : i32 to vector<1x128xi32>
    %185 = arith.addi %1, %184 : vector<1x128xi32>
    %c8_i32_88 = arith.constant 8 : i32
    %186 = vector.broadcast %c8_i32_88 : i32 to vector<1x128xi32>
    %187 = arith.cmpi slt, %185, %186 : vector<1x128xi32>
    %188 = arith.andi %183, %187 : vector<1x128xi1>
    %cst_89 = arith.constant 0.000000e+00 : f32
    %189 = vector.shape_cast %188 : vector<1x128xi1> to vector<1x128xi1>
    %190 = vector.broadcast %189 : vector<1x128xi1> to vector<8x128xi1>
    %191 = vector.broadcast %cst_89 : f32 to vector<8x128xf32>
    %192 = arith.select %190, %168, %191 : vector<8x128xi1>, vector<8x128xf32>
    %c48 = arith.constant 48 : index
    %c0_90 = arith.constant 0 : index
    %193 = vector.load %arg9[%c48, %c0_90] : memref<288x128xf32, #tpu.memory_space<vmem>>, vector<8x128xf32>
    tpu.vector_store %arg9[%c48, %c0_90], %192 {strides = array<i32>} : memref<288x128xf32, #tpu.memory_space<vmem>>, vector<8x128xf32>,
    %c0_i32_91 = arith.constant 0 : i32
    %194 = vector.broadcast %c0_i32_91 : i32 to vector<1x128xi32>
    %195 = arith.addi %0, %194 : vector<1x128xi32>
    %c0_i32_92 = arith.constant 0 : i32
    %196 = vector.broadcast %c0_i32_92 : i32 to vector<1x128xi32>
    %197 = arith.cmpi sge, %195, %196 : vector<1x128xi32>
    %198 = arith.andi %5, %197 : vector<1x128xi1>
    %c0_i32_93 = arith.constant 0 : i32
    %199 = vector.broadcast %c0_i32_93 : i32 to vector<1x128xi32>
    %200 = arith.addi %0, %199 : vector<1x128xi32>
    %c8_i32_94 = arith.constant 8 : i32
    %201 = vector.broadcast %c8_i32_94 : i32 to vector<1x128xi32>
    %202 = arith.cmpi slt, %200, %201 : vector<1x128xi32>
    %203 = arith.andi %198, %202 : vector<1x128xi1>
    %c0_i32_95 = arith.constant 0 : i32
    %204 = vector.broadcast %c0_i32_95 : i32 to vector<1x128xi32>
    %205 = arith.addi %1, %204 : vector<1x128xi32>
    %c0_i32_96 = arith.constant 0 : i32
    %206 = vector.broadcast %c0_i32_96 : i32 to vector<1x128xi32>
    %207 = arith.cmpi sge, %205, %206 : vector<1x128xi32>
    %208 = arith.andi %203, %207 : vector<1x128xi1>
    %c0_i32_97 = arith.constant 0 : i32
    %209 = vector.broadcast %c0_i32_97 : i32 to vector<1x128xi32>
    %210 = arith.addi %1, %209 : vector<1x128xi32>
    %c8_i32_98 = arith.constant 8 : i32
    %211 = vector.broadcast %c8_i32_98 : i32 to vector<1x128xi32>
    %212 = arith.cmpi slt, %210, %211 : vector<1x128xi32>
    %213 = arith.andi %208, %212 : vector<1x128xi1>
    %cst_99 = arith.constant 0.000000e+00 : f32
    %214 = vector.shape_cast %213 : vector<1x128xi1> to vector<1x128xi1>
    %215 = vector.broadcast %214 : vector<1x128xi1> to vector<8x128xi1>
    %216 = vector.broadcast %cst_99 : f32 to vector<8x128xf32>
    %217 = arith.select %215, %11, %216 : vector<8x128xi1>, vector<8x128xf32>
    %c56 = arith.constant 56 : index
    %c0_100 = arith.constant 0 : index
    %218 = vector.load %arg9[%c56, %c0_100] : memref<288x128xf32, #tpu.memory_space<vmem>>, vector<8x128xf32>
    tpu.vector_store %arg9[%c56, %c0_100], %217 {strides = array<i32>} : memref<288x128xf32, #tpu.memory_space<vmem>>, vector<8x128xf32>,
    %c0_i32_101 = arith.constant 0 : i32
    %219 = vector.broadcast %c0_i32_101 : i32 to vector<1x128xi32>
    %220 = arith.addi %0, %219 : vector<1x128xi32>
    %c0_i32_102 = arith.constant 0 : i32
    %221 = vector.broadcast %c0_i32_102 : i32 to vector<1x128xi32>
    %222 = arith.cmpi sge, %220, %221 : vector<1x128xi32>
    %223 = arith.andi %5, %222 : vector<1x128xi1>
    %c0_i32_103 = arith.constant 0 : i32
    %224 = vector.broadcast %c0_i32_103 : i32 to vector<1x128xi32>
    %225 = arith.addi %0, %224 : vector<1x128xi32>
    %c8_i32_104 = arith.constant 8 : i32
    %226 = vector.broadcast %c8_i32_104 : i32 to vector<1x128xi32>
    %227 = arith.cmpi slt, %225, %226 : vector<1x128xi32>
    %228 = arith.andi %223, %227 : vector<1x128xi1>
    %c0_i32_105 = arith.constant 0 : i32
    %229 = vector.broadcast %c0_i32_105 : i32 to vector<1x128xi32>
    %230 = arith.addi %1, %229 : vector<1x128xi32>
    %c0_i32_106 = arith.constant 0 : i32
    %231 = vector.broadcast %c0_i32_106 : i32 to vector<1x128xi32>
    %232 = arith.cmpi sge, %230, %231 : vector<1x128xi32>
    %233 = arith.andi %228, %232 : vector<1x128xi1>
    %c0_i32_107 = arith.constant 0 : i32
    %234 = vector.broadcast %c0_i32_107 : i32 to vector<1x128xi32>
    %235 = arith.addi %1, %234 : vector<1x128xi32>
    %c8_i32_108 = arith.constant 8 : i32
    %236 = vector.broadcast %c8_i32_108 : i32 to vector<1x128xi32>
    %237 = arith.cmpi slt, %235, %236 : vector<1x128xi32>
    %238 = arith.andi %233, %237 : vector<1x128xi1>
    %cst_109 = arith.constant 0.000000e+00 : f32
    %239 = vector.shape_cast %238 : vector<1x128xi1> to vector<1x128xi1>
    %240 = vector.broadcast %239 : vector<1x128xi1> to vector<8x128xi1>
    %241 = vector.broadcast %cst_109 : f32 to vector<8x128xf32>
    %242 = arith.select %240, %13, %241 : vector<8x128xi1>, vector<8x128xf32>
    %c64 = arith.constant 64 : index
    %c0_110 = arith.constant 0 : index
    %243 = vector.load %arg9[%c64, %c0_110] : memref<288x128xf32, #tpu.memory_space<vmem>>, vector<8x128xf32>
    tpu.vector_store %arg9[%c64, %c0_110], %242 {strides = array<i32>} : memref<288x128xf32, #tpu.memory_space<vmem>>, vector<8x128xf32>,
    %c72 = arith.constant 72 : index
    %c0_111 = arith.constant 0 : index
    %244 = vector.load %arg9[%c72, %c0_111] : memref<288x128xf32, #tpu.memory_space<vmem>>, vector<8x128xf32>
    tpu.vector_store %arg9[%c72, %c0_111], %64 {strides = array<i32>} : memref<288x128xf32, #tpu.memory_space<vmem>>, vector<8x128xf32>,
    %c80 = arith.constant 80 : index
    %c0_112 = arith.constant 0 : index
    %245 = vector.load %arg9[%c80, %c0_112] : memref<288x128xf32, #tpu.memory_space<vmem>>, vector<8x128xf32>
    tpu.vector_store %arg9[%c80, %c0_112], %90 {strides = array<i32>} : memref<288x128xf32, #tpu.memory_space<vmem>>, vector<8x128xf32>,
    %c7_i32 = arith.constant 7 : i32
    %246 = tpu.dynamic_rotate %11 by %c7_i32 dim 1 : vector<8x128xf32>, i32 -> vector<8x128xf32>
    %c-1_i32_113 = arith.constant -1 : i32
    %247 = vector.broadcast %c-1_i32_113 : i32 to vector<1x128xi32>
    %248 = arith.addi %0, %247 : vector<1x128xi32>
    %c0_i32_114 = arith.constant 0 : i32
    %249 = vector.broadcast %c0_i32_114 : i32 to vector<1x128xi32>
    %250 = arith.cmpi sge, %248, %249 : vector<1x128xi32>
    %251 = arith.andi %5, %250 : vector<1x128xi1>
    %c-1_i32_115 = arith.constant -1 : i32
    %252 = vector.broadcast %c-1_i32_115 : i32 to vector<1x128xi32>
    %253 = arith.addi %0, %252 : vector<1x128xi32>
    %c8_i32_116 = arith.constant 8 : i32
    %254 = vector.broadcast %c8_i32_116 : i32 to vector<1x128xi32>
    %255 = arith.cmpi slt, %253, %254 : vector<1x128xi32>
    %256 = arith.andi %251, %255 : vector<1x128xi1>
    %c1_i32_117 = arith.constant 1 : i32
    %257 = vector.broadcast %c1_i32_117 : i32 to vector<1x128xi32>
    %258 = arith.addi %1, %257 : vector<1x128xi32>
    %c0_i32_118 = arith.constant 0 : i32
    %259 = vector.broadcast %c0_i32_118 : i32 to vector<1x128xi32>
    %260 = arith.cmpi sge, %258, %259 : vector<1x128xi32>
    %261 = arith.andi %256, %260 : vector<1x128xi1>
    %c1_i32_119 = arith.constant 1 : i32
    %262 = vector.broadcast %c1_i32_119 : i32 to vector<1x128xi32>
    %263 = arith.addi %1, %262 : vector<1x128xi32>
    %c8_i32_120 = arith.constant 8 : i32
    %264 = vector.broadcast %c8_i32_120 : i32 to vector<1x128xi32>
    %265 = arith.cmpi slt, %263, %264 : vector<1x128xi32>
    %266 = arith.andi %261, %265 : vector<1x128xi1>
    %cst_121 = arith.constant 0.000000e+00 : f32
    %267 = vector.shape_cast %266 : vector<1x128xi1> to vector<1x128xi1>
    %268 = vector.broadcast %267 : vector<1x128xi1> to vector<8x128xi1>
    %269 = vector.broadcast %cst_121 : f32 to vector<8x128xf32>
    %270 = arith.select %268, %246, %269 : vector<8x128xi1>, vector<8x128xf32>
    %c88 = arith.constant 88 : index
    %c0_122 = arith.constant 0 : index
    %271 = vector.load %arg9[%c88, %c0_122] : memref<288x128xf32, #tpu.memory_space<vmem>>, vector<8x128xf32>
    tpu.vector_store %arg9[%c88, %c0_122], %270 {strides = array<i32>} : memref<288x128xf32, #tpu.memory_space<vmem>>, vector<8x128xf32>,
    %c96 = arith.constant 96 : index
    %c0_123 = arith.constant 0 : index
    %272 = vector.load %arg9[%c96, %c0_123] : memref<288x128xf32, #tpu.memory_space<vmem>>, vector<8x128xf32>
    tpu.vector_store %arg9[%c96, %c0_123], %141 {strides = array<i32>} : memref<288x128xf32, #tpu.memory_space<vmem>>, vector<8x128xf32>,
    %c104 = arith.constant 104 : index
    %c0_124 = arith.constant 0 : index
    %273 = vector.load %arg9[%c104, %c0_124] : memref<288x128xf32, #tpu.memory_space<vmem>>, vector<8x128xf32>
    tpu.vector_store %arg9[%c104, %c0_124], %166 {strides = array<i32>} : memref<288x128xf32, #tpu.memory_space<vmem>>, vector<8x128xf32>,
    %c127_i32 = arith.constant 127 : i32
    %274 = tpu.dynamic_rotate %7 by %c127_i32 dim 1 : vector<8x128xf32>, i32 -> vector<8x128xf32>
    %c0_i32_125 = arith.constant 0 : i32
    %275 = vector.broadcast %c0_i32_125 : i32 to vector<1x128xi32>
    %276 = arith.addi %0, %275 : vector<1x128xi32>
    %c0_i32_126 = arith.constant 0 : i32
    %277 = vector.broadcast %c0_i32_126 : i32 to vector<1x128xi32>
    %278 = arith.cmpi sge, %276, %277 : vector<1x128xi32>
    %279 = arith.andi %5, %278 : vector<1x128xi1>
    %c0_i32_127 = arith.constant 0 : i32
    %280 = vector.broadcast %c0_i32_127 : i32 to vector<1x128xi32>
    %281 = arith.addi %0, %280 : vector<1x128xi32>
    %c8_i32_128 = arith.constant 8 : i32
    %282 = vector.broadcast %c8_i32_128 : i32 to vector<1x128xi32>
    %283 = arith.cmpi slt, %281, %282 : vector<1x128xi32>
    %284 = arith.andi %279, %283 : vector<1x128xi1>
    %c1_i32_129 = arith.constant 1 : i32
    %285 = vector.broadcast %c1_i32_129 : i32 to vector<1x128xi32>
    %286 = arith.addi %1, %285 : vector<1x128xi32>
    %c0_i32_130 = arith.constant 0 : i32
    %287 = vector.broadcast %c0_i32_130 : i32 to vector<1x128xi32>
    %288 = arith.cmpi sge, %286, %287 : vector<1x128xi32>
    %289 = arith.andi %284, %288 : vector<1x128xi1>
    %c1_i32_131 = arith.constant 1 : i32
    %290 = vector.broadcast %c1_i32_131 : i32 to vector<1x128xi32>
    %291 = arith.addi %1, %290 : vector<1x128xi32>
    %c8_i32_132 = arith.constant 8 : i32
    %292 = vector.broadcast %c8_i32_132 : i32 to vector<1x128xi32>
    %293 = arith.cmpi slt, %291, %292 : vector<1x128xi32>
    %294 = arith.andi %289, %293 : vector<1x128xi1>
    %cst_133 = arith.constant 0.000000e+00 : f32
    %295 = vector.shape_cast %294 : vector<1x128xi1> to vector<1x128xi1>
    %296 = vector.broadcast %295 : vector<1x128xi1> to vector<8x128xi1>
    %297 = vector.broadcast %cst_133 : f32 to vector<8x128xf32>
    %298 = arith.select %296, %274, %297 : vector<8x128xi1>, vector<8x128xf32>
    %c112 = arith.constant 112 : index
    %c0_134 = arith.constant 0 : index
    %299 = vector.load %arg9[%c112, %c0_134] : memref<288x128xf32, #tpu.memory_space<vmem>>, vector<8x128xf32>
    tpu.vector_store %arg9[%c112, %c0_134], %298 {strides = array<i32>} : memref<288x128xf32, #tpu.memory_space<vmem>>, vector<8x128xf32>,
    %c120 = arith.constant 120 : index
    %c0_135 = arith.constant 0 : index
    %300 = vector.load %arg9[%c120, %c0_135] : memref<288x128xf32, #tpu.memory_space<vmem>>, vector<8x128xf32>
    tpu.vector_store %arg9[%c120, %c0_135], %217 {strides = array<i32>} : memref<288x128xf32, #tpu.memory_space<vmem>>, vector<8x128xf32>,
    %c128 = arith.constant 128 : index
    %c0_136 = arith.constant 0 : index
    %301 = vector.load %arg9[%c128, %c0_136] : memref<288x128xf32, #tpu.memory_space<vmem>>, vector<8x128xf32>
    tpu.vector_store %arg9[%c128, %c0_136], %242 {strides = array<i32>} : memref<288x128xf32, #tpu.memory_space<vmem>>, vector<8x128xf32>,
    %c127_i32_137 = arith.constant 127 : i32
    %302 = tpu.dynamic_rotate %11 by %c127_i32_137 dim 1 : vector<8x128xf32>, i32 -> vector<8x128xf32>
    %c0_i32_138 = arith.constant 0 : i32
    %303 = vector.broadcast %c0_i32_138 : i32 to vector<1x128xi32>
    %304 = arith.addi %0, %303 : vector<1x128xi32>
    %c0_i32_139 = arith.constant 0 : i32
    %305 = vector.broadcast %c0_i32_139 : i32 to vector<1x128xi32>
    %306 = arith.cmpi sge, %304, %305 : vector<1x128xi32>
    %307 = arith.andi %5, %306 : vector<1x128xi1>
    %c0_i32_140 = arith.constant 0 : i32
    %308 = vector.broadcast %c0_i32_140 : i32 to vector<1x128xi32>
    %309 = arith.addi %0, %308 : vector<1x128xi32>
    %c8_i32_141 = arith.constant 8 : i32
    %310 = vector.broadcast %c8_i32_141 : i32 to vector<1x128xi32>
    %311 = arith.cmpi slt, %309, %310 : vector<1x128xi32>
    %312 = arith.andi %307, %311 : vector<1x128xi1>
    %c1_i32_142 = arith.constant 1 : i32
    %313 = vector.broadcast %c1_i32_142 : i32 to vector<1x128xi32>
    %314 = arith.addi %1, %313 : vector<1x128xi32>
    %c0_i32_143 = arith.constant 0 : i32
    %315 = vector.broadcast %c0_i32_143 : i32 to vector<1x128xi32>
    %316 = arith.cmpi sge, %314, %315 : vector<1x128xi32>
    %317 = arith.andi %312, %316 : vector<1x128xi1>
    %c1_i32_144 = arith.constant 1 : i32
    %318 = vector.broadcast %c1_i32_144 : i32 to vector<1x128xi32>
    %319 = arith.addi %1, %318 : vector<1x128xi32>
    %c8_i32_145 = arith.constant 8 : i32
    %320 = vector.broadcast %c8_i32_145 : i32 to vector<1x128xi32>
    %321 = arith.cmpi slt, %319, %320 : vector<1x128xi32>
    %322 = arith.andi %317, %321 : vector<1x128xi1>
    %cst_146 = arith.constant 0.000000e+00 : f32
    %323 = vector.shape_cast %322 : vector<1x128xi1> to vector<1x128xi1>
    %324 = vector.broadcast %323 : vector<1x128xi1> to vector<8x128xi1>
    %325 = vector.broadcast %cst_146 : f32 to vector<8x128xf32>
    %326 = arith.select %324, %302, %325 : vector<8x128xi1>, vector<8x128xf32>
    %c136 = arith.constant 136 : index
    %c0_147 = arith.constant 0 : index
    %327 = vector.load %arg9[%c136, %c0_147] : memref<288x128xf32, #tpu.memory_space<vmem>>, vector<8x128xf32>
    tpu.vector_store %arg9[%c136, %c0_147], %326 {strides = array<i32>} : memref<288x128xf32, #tpu.memory_space<vmem>>, vector<8x128xf32>,
    %c144 = arith.constant 144 : index
    %c0_148 = arith.constant 0 : index
    %328 = vector.load %arg9[%c144, %c0_148] : memref<288x128xf32, #tpu.memory_space<vmem>>, vector<8x128xf32>
    tpu.vector_store %arg9[%c144, %c0_148], %116 {strides = array<i32>} : memref<288x128xf32, #tpu.memory_space<vmem>>, vector<8x128xf32>,
    %c152 = arith.constant 152 : index
    %c0_149 = arith.constant 0 : index
    %329 = vector.load %arg9[%c152, %c0_149] : memref<288x128xf32, #tpu.memory_space<vmem>>, vector<8x128xf32>
    tpu.vector_store %arg9[%c152, %c0_149], %141 {strides = array<i32>} : memref<288x128xf32, #tpu.memory_space<vmem>>, vector<8x128xf32>,
    %c160 = arith.constant 160 : index
    %c0_150 = arith.constant 0 : index
    %330 = vector.load %arg9[%c160, %c0_150] : memref<288x128xf32, #tpu.memory_space<vmem>>, vector<8x128xf32>
    tpu.vector_store %arg9[%c160, %c0_150], %166 {strides = array<i32>} : memref<288x128xf32, #tpu.memory_space<vmem>>, vector<8x128xf32>,
    %c168 = arith.constant 168 : index
    %c0_151 = arith.constant 0 : index
    %331 = vector.load %arg9[%c168, %c0_151] : memref<288x128xf32, #tpu.memory_space<vmem>>, vector<8x128xf32>
    tpu.vector_store %arg9[%c168, %c0_151], %192 {strides = array<i32>} : memref<288x128xf32, #tpu.memory_space<vmem>>, vector<8x128xf32>,
    %c176 = arith.constant 176 : index
    %c0_152 = arith.constant 0 : index
    %332 = vector.load %arg9[%c176, %c0_152] : memref<288x128xf32, #tpu.memory_space<vmem>>, vector<8x128xf32>
    tpu.vector_store %arg9[%c176, %c0_152], %217 {strides = array<i32>} : memref<288x128xf32, #tpu.memory_space<vmem>>, vector<8x128xf32>,
    %c184 = arith.constant 184 : index
    %c0_153 = arith.constant 0 : index
    %333 = vector.load %arg9[%c184, %c0_153] : memref<288x128xf32, #tpu.memory_space<vmem>>, vector<8x128xf32>
    tpu.vector_store %arg9[%c184, %c0_153], %242 {strides = array<i32>} : memref<288x128xf32, #tpu.memory_space<vmem>>, vector<8x128xf32>,
    %c121_i32 = arith.constant 121 : i32
    %334 = tpu.dynamic_rotate %9 by %c121_i32 dim 1 : vector<8x128xf32>, i32 -> vector<8x128xf32>
    %c1_i32_154 = arith.constant 1 : i32
    %335 = vector.broadcast %c1_i32_154 : i32 to vector<1x128xi32>
    %336 = arith.addi %0, %335 : vector<1x128xi32>
    %c0_i32_155 = arith.constant 0 : i32
    %337 = vector.broadcast %c0_i32_155 : i32 to vector<1x128xi32>
    %338 = arith.cmpi sge, %336, %337 : vector<1x128xi32>
    %339 = arith.andi %5, %338 : vector<1x128xi1>
    %c1_i32_156 = arith.constant 1 : i32
    %340 = vector.broadcast %c1_i32_156 : i32 to vector<1x128xi32>
    %341 = arith.addi %0, %340 : vector<1x128xi32>
    %c8_i32_157 = arith.constant 8 : i32
    %342 = vector.broadcast %c8_i32_157 : i32 to vector<1x128xi32>
    %343 = arith.cmpi slt, %341, %342 : vector<1x128xi32>
    %344 = arith.andi %339, %343 : vector<1x128xi1>
    %c-1_i32_158 = arith.constant -1 : i32
    %345 = vector.broadcast %c-1_i32_158 : i32 to vector<1x128xi32>
    %346 = arith.addi %1, %345 : vector<1x128xi32>
    %c0_i32_159 = arith.constant 0 : i32
    %347 = vector.broadcast %c0_i32_159 : i32 to vector<1x128xi32>
    %348 = arith.cmpi sge, %346, %347 : vector<1x128xi32>
    %349 = arith.andi %344, %348 : vector<1x128xi1>
    %c-1_i32_160 = arith.constant -1 : i32
    %350 = vector.broadcast %c-1_i32_160 : i32 to vector<1x128xi32>
    %351 = arith.addi %1, %350 : vector<1x128xi32>
    %c8_i32_161 = arith.constant 8 : i32
    %352 = vector.broadcast %c8_i32_161 : i32 to vector<1x128xi32>
    %353 = arith.cmpi slt, %351, %352 : vector<1x128xi32>
    %354 = arith.andi %349, %353 : vector<1x128xi1>
    %cst_162 = arith.constant 0.000000e+00 : f32
    %355 = vector.shape_cast %354 : vector<1x128xi1> to vector<1x128xi1>
    %356 = vector.broadcast %355 : vector<1x128xi1> to vector<8x128xi1>
    %357 = vector.broadcast %cst_162 : f32 to vector<8x128xf32>
    %358 = arith.select %356, %334, %357 : vector<8x128xi1>, vector<8x128xf32>
    %c192 = arith.constant 192 : index
    %c0_163 = arith.constant 0 : index
    %359 = vector.load %arg9[%c192, %c0_163] : memref<288x128xf32, #tpu.memory_space<vmem>>, vector<8x128xf32>
    tpu.vector_store %arg9[%c192, %c0_163], %358 {strides = array<i32>} : memref<288x128xf32, #tpu.memory_space<vmem>>, vector<8x128xf32>,
    %c120_i32 = arith.constant 120 : i32
    %360 = tpu.dynamic_rotate %7 by %c120_i32 dim 1 : vector<8x128xf32>, i32 -> vector<8x128xf32>
    %c1_i32_164 = arith.constant 1 : i32
    %361 = vector.broadcast %c1_i32_164 : i32 to vector<1x128xi32>
    %362 = arith.addi %0, %361 : vector<1x128xi32>
    %c0_i32_165 = arith.constant 0 : i32
    %363 = vector.broadcast %c0_i32_165 : i32 to vector<1x128xi32>
    %364 = arith.cmpi sge, %362, %363 : vector<1x128xi32>
    %365 = arith.andi %5, %364 : vector<1x128xi1>
    %c1_i32_166 = arith.constant 1 : i32
    %366 = vector.broadcast %c1_i32_166 : i32 to vector<1x128xi32>
    %367 = arith.addi %0, %366 : vector<1x128xi32>
    %c8_i32_167 = arith.constant 8 : i32
    %368 = vector.broadcast %c8_i32_167 : i32 to vector<1x128xi32>
    %369 = arith.cmpi slt, %367, %368 : vector<1x128xi32>
    %370 = arith.andi %365, %369 : vector<1x128xi1>
    %c0_i32_168 = arith.constant 0 : i32
    %371 = vector.broadcast %c0_i32_168 : i32 to vector<1x128xi32>
    %372 = arith.addi %1, %371 : vector<1x128xi32>
    %c0_i32_169 = arith.constant 0 : i32
    %373 = vector.broadcast %c0_i32_169 : i32 to vector<1x128xi32>
    %374 = arith.cmpi sge, %372, %373 : vector<1x128xi32>
    %375 = arith.andi %370, %374 : vector<1x128xi1>
    %c0_i32_170 = arith.constant 0 : i32
    %376 = vector.broadcast %c0_i32_170 : i32 to vector<1x128xi32>
    %377 = arith.addi %1, %376 : vector<1x128xi32>
    %c8_i32_171 = arith.constant 8 : i32
    %378 = vector.broadcast %c8_i32_171 : i32 to vector<1x128xi32>
    %379 = arith.cmpi slt, %377, %378 : vector<1x128xi32>
    %380 = arith.andi %375, %379 : vector<1x128xi1>
    %cst_172 = arith.constant 0.000000e+00 : f32
    %381 = vector.shape_cast %380 : vector<1x128xi1> to vector<1x128xi1>
    %382 = vector.broadcast %381 : vector<1x128xi1> to vector<8x128xi1>
    %383 = vector.broadcast %cst_172 : f32 to vector<8x128xf32>
    %384 = arith.select %382, %360, %383 : vector<8x128xi1>, vector<8x128xf32>
    %c200 = arith.constant 200 : index
    %c0_173 = arith.constant 0 : index
    %385 = vector.load %arg9[%c200, %c0_173] : memref<288x128xf32, #tpu.memory_space<vmem>>, vector<8x128xf32>
    tpu.vector_store %arg9[%c200, %c0_173], %384 {strides = array<i32>} : memref<288x128xf32, #tpu.memory_space<vmem>>, vector<8x128xf32>,
    %c120_i32_174 = arith.constant 120 : i32
    %386 = tpu.dynamic_rotate %9 by %c120_i32_174 dim 1 : vector<8x128xf32>, i32 -> vector<8x128xf32>
    %c1_i32_175 = arith.constant 1 : i32
    %387 = vector.broadcast %c1_i32_175 : i32 to vector<1x128xi32>
    %388 = arith.addi %0, %387 : vector<1x128xi32>
    %c0_i32_176 = arith.constant 0 : i32
    %389 = vector.broadcast %c0_i32_176 : i32 to vector<1x128xi32>
    %390 = arith.cmpi sge, %388, %389 : vector<1x128xi32>
    %391 = arith.andi %5, %390 : vector<1x128xi1>
    %c1_i32_177 = arith.constant 1 : i32
    %392 = vector.broadcast %c1_i32_177 : i32 to vector<1x128xi32>
    %393 = arith.addi %0, %392 : vector<1x128xi32>
    %c8_i32_178 = arith.constant 8 : i32
    %394 = vector.broadcast %c8_i32_178 : i32 to vector<1x128xi32>
    %395 = arith.cmpi slt, %393, %394 : vector<1x128xi32>
    %396 = arith.andi %391, %395 : vector<1x128xi1>
    %c0_i32_179 = arith.constant 0 : i32
    %397 = vector.broadcast %c0_i32_179 : i32 to vector<1x128xi32>
    %398 = arith.addi %1, %397 : vector<1x128xi32>
    %c0_i32_180 = arith.constant 0 : i32
    %399 = vector.broadcast %c0_i32_180 : i32 to vector<1x128xi32>
    %400 = arith.cmpi sge, %398, %399 : vector<1x128xi32>
    %401 = arith.andi %396, %400 : vector<1x128xi1>
    %c0_i32_181 = arith.constant 0 : i32
    %402 = vector.broadcast %c0_i32_181 : i32 to vector<1x128xi32>
    %403 = arith.addi %1, %402 : vector<1x128xi32>
    %c8_i32_182 = arith.constant 8 : i32
    %404 = vector.broadcast %c8_i32_182 : i32 to vector<1x128xi32>
    %405 = arith.cmpi slt, %403, %404 : vector<1x128xi32>
    %406 = arith.andi %401, %405 : vector<1x128xi1>
    %cst_183 = arith.constant 0.000000e+00 : f32
    %407 = vector.shape_cast %406 : vector<1x128xi1> to vector<1x128xi1>
    %408 = vector.broadcast %407 : vector<1x128xi1> to vector<8x128xi1>
    %409 = vector.broadcast %cst_183 : f32 to vector<8x128xf32>
    %410 = arith.select %408, %386, %409 : vector<8x128xi1>, vector<8x128xf32>
    %c208 = arith.constant 208 : index
    %c0_184 = arith.constant 0 : index
    %411 = vector.load %arg9[%c208, %c0_184] : memref<288x128xf32, #tpu.memory_space<vmem>>, vector<8x128xf32>
    tpu.vector_store %arg9[%c208, %c0_184], %410 {strides = array<i32>} : memref<288x128xf32, #tpu.memory_space<vmem>>, vector<8x128xf32>,
    %c216 = arith.constant 216 : index
    %c0_185 = arith.constant 0 : index
    %412 = vector.load %arg9[%c216, %c0_185] : memref<288x128xf32, #tpu.memory_space<vmem>>, vector<8x128xf32>
    tpu.vector_store %arg9[%c216, %c0_185], %141 {strides = array<i32>} : memref<288x128xf32, #tpu.memory_space<vmem>>, vector<8x128xf32>,
    %c224 = arith.constant 224 : index
    %c0_186 = arith.constant 0 : index
    %413 = vector.load %arg9[%c224, %c0_186] : memref<288x128xf32, #tpu.memory_space<vmem>>, vector<8x128xf32>
    tpu.vector_store %arg9[%c224, %c0_186], %166 {strides = array<i32>} : memref<288x128xf32, #tpu.memory_space<vmem>>, vector<8x128xf32>,
    %c232 = arith.constant 232 : index
    %c0_187 = arith.constant 0 : index
    %414 = vector.load %arg9[%c232, %c0_187] : memref<288x128xf32, #tpu.memory_space<vmem>>, vector<8x128xf32>
    tpu.vector_store %arg9[%c232, %c0_187], %298 {strides = array<i32>} : memref<288x128xf32, #tpu.memory_space<vmem>>, vector<8x128xf32>,
    %c240 = arith.constant 240 : index
    %c0_188 = arith.constant 0 : index
    %415 = vector.load %arg9[%c240, %c0_188] : memref<288x128xf32, #tpu.memory_space<vmem>>, vector<8x128xf32>
    tpu.vector_store %arg9[%c240, %c0_188], %217 {strides = array<i32>} : memref<288x128xf32, #tpu.memory_space<vmem>>, vector<8x128xf32>,
    %c248 = arith.constant 248 : index
    %c0_189 = arith.constant 0 : index
    %416 = vector.load %arg9[%c248, %c0_189] : memref<288x128xf32, #tpu.memory_space<vmem>>, vector<8x128xf32>
    tpu.vector_store %arg9[%c248, %c0_189], %242 {strides = array<i32>} : memref<288x128xf32, #tpu.memory_space<vmem>>, vector<8x128xf32>,
    %c256 = arith.constant 256 : index
    %c0_190 = arith.constant 0 : index
    %417 = vector.load %arg9[%c256, %c0_190] : memref<288x128xf32, #tpu.memory_space<vmem>>, vector<8x128xf32>
    tpu.vector_store %arg9[%c256, %c0_190], %326 {strides = array<i32>} : memref<288x128xf32, #tpu.memory_space<vmem>>, vector<8x128xf32>,
    %c264 = arith.constant 264 : index
    %c0_191 = arith.constant 0 : index
    %418 = vector.load %arg9[%c264, %c0_191] : memref<288x128xf32, #tpu.memory_space<vmem>>, vector<8x128xf32>
    tpu.vector_store %arg9[%c264, %c0_191], %384 {strides = array<i32>} : memref<288x128xf32, #tpu.memory_space<vmem>>, vector<8x128xf32>,
    %c272 = arith.constant 272 : index
    %c0_192 = arith.constant 0 : index
    %419 = vector.load %arg9[%c272, %c0_192] : memref<288x128xf32, #tpu.memory_space<vmem>>, vector<8x128xf32>
    tpu.vector_store %arg9[%c272, %c0_192], %410 {strides = array<i32>} : memref<288x128xf32, #tpu.memory_space<vmem>>, vector<8x128xf32>,
    %c119_i32 = arith.constant 119 : i32
    %420 = tpu.dynamic_rotate %7 by %c119_i32 dim 1 : vector<8x128xf32>, i32 -> vector<8x128xf32>
    %c1_i32_193 = arith.constant 1 : i32
    %421 = vector.broadcast %c1_i32_193 : i32 to vector<1x128xi32>
    %422 = arith.addi %0, %421 : vector<1x128xi32>
    %c0_i32_194 = arith.constant 0 : i32
    %423 = vector.broadcast %c0_i32_194 : i32 to vector<1x128xi32>
    %424 = arith.cmpi sge, %422, %423 : vector<1x128xi32>
    %425 = arith.andi %5, %424 : vector<1x128xi1>
    %c1_i32_195 = arith.constant 1 : i32
    %426 = vector.broadcast %c1_i32_195 : i32 to vector<1x128xi32>
    %427 = arith.addi %0, %426 : vector<1x128xi32>
    %c8_i32_196 = arith.constant 8 : i32
    %428 = vector.broadcast %c8_i32_196 : i32 to vector<1x128xi32>
    %429 = arith.cmpi slt, %427, %428 : vector<1x128xi32>
    %430 = arith.andi %425, %429 : vector<1x128xi1>
    %c1_i32_197 = arith.constant 1 : i32
    %431 = vector.broadcast %c1_i32_197 : i32 to vector<1x128xi32>
    %432 = arith.addi %1, %431 : vector<1x128xi32>
    %c0_i32_198 = arith.constant 0 : i32
    %433 = vector.broadcast %c0_i32_198 : i32 to vector<1x128xi32>
    %434 = arith.cmpi sge, %432, %433 : vector<1x128xi32>
    %435 = arith.andi %430, %434 : vector<1x128xi1>
    %c1_i32_199 = arith.constant 1 : i32
    %436 = vector.broadcast %c1_i32_199 : i32 to vector<1x128xi32>
    %437 = arith.addi %1, %436 : vector<1x128xi32>
    %c8_i32_200 = arith.constant 8 : i32
    %438 = vector.broadcast %c8_i32_200 : i32 to vector<1x128xi32>
    %439 = arith.cmpi slt, %437, %438 : vector<1x128xi32>
    %440 = arith.andi %435, %439 : vector<1x128xi1>
    %cst_201 = arith.constant 0.000000e+00 : f32
    %441 = vector.shape_cast %440 : vector<1x128xi1> to vector<1x128xi1>
    %442 = vector.broadcast %441 : vector<1x128xi1> to vector<8x128xi1>
    %443 = vector.broadcast %cst_201 : f32 to vector<8x128xf32>
    %444 = arith.select %442, %420, %443 : vector<8x128xi1>, vector<8x128xf32>
    %c280 = arith.constant 280 : index
    %c0_202 = arith.constant 0 : index
    %445 = vector.load %arg9[%c280, %c0_202] : memref<288x128xf32, #tpu.memory_space<vmem>>, vector<8x128xf32>
    tpu.vector_store %arg9[%c280, %c0_202], %444 {strides = array<i32>} : memref<288x128xf32, #tpu.memory_space<vmem>>, vector<8x128xf32>,
    %c0_203 = arith.constant 0 : index
    %c0_204 = arith.constant 0 : index
    %446 = vector.load %arg3[%c0_203, %c0_204] : memref<8x72xbf16, #tpu.memory_space<vmem>>, vector<8x72xbf16>
    %c0_205 = arith.constant 0 : index
    %c0_206 = arith.constant 0 : index
    %447 = vector.load %arg4[%c0_205, %c0_206] : memref<8x1xf32, #tpu.memory_space<vmem>>, vector<8x1xf32>
    %c0_207 = arith.constant 0 : index
    %c0_208 = arith.constant 0 : index
    %448 = vector.load %arg9[%c0_207, %c0_208] : memref<288x128xf32, #tpu.memory_space<vmem>>, vector<72x128xf32>
    %449 = arith.truncf %448 : vector<72x128xf32> to vector<72x128xbf16>
    %cst_209 = arith.constant dense<0.000000e+00> : vector<8x128xf32>
    %450 = tpu.matmul %446, %449, %cst_209 {dimension_numbers = #tpu.dot_dimension_numbers<[1], [0], [0], [1], [0, 0, 1, 1], [], []>} : vector<8x72xbf16>, vector<72x128xbf16>, vector<8x128xf32> -> vector<8x128xf32>
    %451 = vector.broadcast %447 : vector<8x1xf32> to vector<8x128xf32>
    %452 = arith.addf %450, %451 : vector<8x128xf32>
    %cst_210 = arith.constant 0.000000e+00 : f32
    %453 = vector.broadcast %cst_210 : f32 to vector<8x128xf32>
    %454 = arith.maximumf %452, %453 : vector<8x128xf32>
    %c72_211 = arith.constant 72 : index
    %c0_212 = arith.constant 0 : index
    %455 = vector.load %arg9[%c72_211, %c0_212] : memref<288x128xf32, #tpu.memory_space<vmem>>, vector<72x128xf32>
    %456 = arith.truncf %455 : vector<72x128xf32> to vector<72x128xbf16>
    %cst_213 = arith.constant dense<0.000000e+00> : vector<8x128xf32>
    %457 = tpu.matmul %446, %456, %cst_213 {dimension_numbers = #tpu.dot_dimension_numbers<[1], [0], [0], [1], [0, 0, 1, 1], [], []>} : vector<8x72xbf16>, vector<72x128xbf16>, vector<8x128xf32> -> vector<8x128xf32>
    %458 = vector.broadcast %447 : vector<8x1xf32> to vector<8x128xf32>
    %459 = arith.addf %457, %458 : vector<8x128xf32>
    %cst_214 = arith.constant 0.000000e+00 : f32
    %460 = vector.broadcast %cst_214 : f32 to vector<8x128xf32>
    %461 = arith.maximumf %459, %460 : vector<8x128xf32>
    %c144_215 = arith.constant 144 : index
    %c0_216 = arith.constant 0 : index
    %462 = vector.load %arg9[%c144_215, %c0_216] : memref<288x128xf32, #tpu.memory_space<vmem>>, vector<72x128xf32>
    %463 = arith.truncf %462 : vector<72x128xf32> to vector<72x128xbf16>
    %cst_217 = arith.constant dense<0.000000e+00> : vector<8x128xf32>
    %464 = tpu.matmul %446, %463, %cst_217 {dimension_numbers = #tpu.dot_dimension_numbers<[1], [0], [0], [1], [0, 0, 1, 1], [], []>} : vector<8x72xbf16>, vector<72x128xbf16>, vector<8x128xf32> -> vector<8x128xf32>
    %465 = vector.broadcast %447 : vector<8x1xf32> to vector<8x128xf32>
    %466 = arith.addf %464, %465 : vector<8x128xf32>
    %cst_218 = arith.constant 0.000000e+00 : f32
    %467 = vector.broadcast %cst_218 : f32 to vector<8x128xf32>
    %468 = arith.maximumf %466, %467 : vector<8x128xf32>
    %c216_219 = arith.constant 216 : index
    %c0_220 = arith.constant 0 : index
    %469 = vector.load %arg9[%c216_219, %c0_220] : memref<288x128xf32, #tpu.memory_space<vmem>>, vector<72x128xf32>
    %470 = arith.truncf %469 : vector<72x128xf32> to vector<72x128xbf16>
    %cst_221 = arith.constant dense<0.000000e+00> : vector<8x128xf32>
    %471 = tpu.matmul %446, %470, %cst_221 {dimension_numbers = #tpu.dot_dimension_numbers<[1], [0], [0], [1], [0, 0, 1, 1], [], []>} : vector<8x72xbf16>, vector<72x128xbf16>, vector<8x128xf32> -> vector<8x128xf32>
    %472 = vector.broadcast %447 : vector<8x1xf32> to vector<8x128xf32>
    %473 = arith.addf %471, %472 : vector<8x128xf32>
    %cst_222 = arith.constant 0.000000e+00 : f32
    %474 = vector.broadcast %cst_222 : f32 to vector<8x128xf32>
    %475 = arith.maximumf %473, %474 : vector<8x128xf32>
    %c9_i32_223 = arith.constant 9 : i32
    %476 = tpu.dynamic_rotate %475 by %c9_i32_223 dim 1 : vector<8x128xf32>, i32 -> vector<8x128xf32>
    %c-1_i32_224 = arith.constant -1 : i32
    %477 = vector.broadcast %c-1_i32_224 : i32 to vector<1x128xi32>
    %478 = arith.addi %0, %477 : vector<1x128xi32>
    %c0_i32_225 = arith.constant 0 : i32
    %479 = vector.broadcast %c0_i32_225 : i32 to vector<1x128xi32>
    %480 = arith.cmpi sge, %478, %479 : vector<1x128xi32>
    %481 = arith.andi %5, %480 : vector<1x128xi1>
    %c-1_i32_226 = arith.constant -1 : i32
    %482 = vector.broadcast %c-1_i32_226 : i32 to vector<1x128xi32>
    %483 = arith.addi %0, %482 : vector<1x128xi32>
    %c8_i32_227 = arith.constant 8 : i32
    %484 = vector.broadcast %c8_i32_227 : i32 to vector<1x128xi32>
    %485 = arith.cmpi slt, %483, %484 : vector<1x128xi32>
    %486 = arith.andi %481, %485 : vector<1x128xi1>
    %c-1_i32_228 = arith.constant -1 : i32
    %487 = vector.broadcast %c-1_i32_228 : i32 to vector<1x128xi32>
    %488 = arith.addi %1, %487 : vector<1x128xi32>
    %c0_i32_229 = arith.constant 0 : i32
    %489 = vector.broadcast %c0_i32_229 : i32 to vector<1x128xi32>
    %490 = arith.cmpi sge, %488, %489 : vector<1x128xi32>
    %491 = arith.andi %486, %490 : vector<1x128xi1>
    %c-1_i32_230 = arith.constant -1 : i32
    %492 = vector.broadcast %c-1_i32_230 : i32 to vector<1x128xi32>
    %493 = arith.addi %1, %492 : vector<1x128xi32>
    %c8_i32_231 = arith.constant 8 : i32
    %494 = vector.broadcast %c8_i32_231 : i32 to vector<1x128xi32>
    %495 = arith.cmpi slt, %493, %494 : vector<1x128xi32>
    %496 = arith.andi %491, %495 : vector<1x128xi1>
    %cst_232 = arith.constant 0.000000e+00 : f32
    %497 = vector.shape_cast %496 : vector<1x128xi1> to vector<1x128xi1>
    %498 = vector.broadcast %497 : vector<1x128xi1> to vector<8x128xi1>
    %499 = vector.broadcast %cst_232 : f32 to vector<8x128xf32>
    %500 = arith.select %498, %476, %499 : vector<8x128xi1>, vector<8x128xf32>
    %c0_233 = arith.constant 0 : index
    %c0_234 = arith.constant 0 : index
    %501 = vector.load %arg10[%c0_233, %c0_234] : memref<288x128xf32, #tpu.memory_space<vmem>>, vector<8x128xf32>
    tpu.vector_store %arg10[%c0_233, %c0_234], %500 {strides = array<i32>} : memref<288x128xf32, #tpu.memory_space<vmem>>, vector<8x128xf32>,
    %c8_i32_235 = arith.constant 8 : i32
    %502 = tpu.dynamic_rotate %468 by %c8_i32_235 dim 1 : vector<8x128xf32>, i32 -> vector<8x128xf32>
    %c-1_i32_236 = arith.constant -1 : i32
    %503 = vector.broadcast %c-1_i32_236 : i32 to vector<1x128xi32>
    %504 = arith.addi %0, %503 : vector<1x128xi32>
    %c0_i32_237 = arith.constant 0 : i32
    %505 = vector.broadcast %c0_i32_237 : i32 to vector<1x128xi32>
    %506 = arith.cmpi sge, %504, %505 : vector<1x128xi32>
    %507 = arith.andi %5, %506 : vector<1x128xi1>
    %c-1_i32_238 = arith.constant -1 : i32
    %508 = vector.broadcast %c-1_i32_238 : i32 to vector<1x128xi32>
    %509 = arith.addi %0, %508 : vector<1x128xi32>
    %c8_i32_239 = arith.constant 8 : i32
    %510 = vector.broadcast %c8_i32_239 : i32 to vector<1x128xi32>
    %511 = arith.cmpi slt, %509, %510 : vector<1x128xi32>
    %512 = arith.andi %507, %511 : vector<1x128xi1>
    %c0_i32_240 = arith.constant 0 : i32
    %513 = vector.broadcast %c0_i32_240 : i32 to vector<1x128xi32>
    %514 = arith.addi %1, %513 : vector<1x128xi32>
    %c0_i32_241 = arith.constant 0 : i32
    %515 = vector.broadcast %c0_i32_241 : i32 to vector<1x128xi32>
    %516 = arith.cmpi sge, %514, %515 : vector<1x128xi32>
    %517 = arith.andi %512, %516 : vector<1x128xi1>
    %c0_i32_242 = arith.constant 0 : i32
    %518 = vector.broadcast %c0_i32_242 : i32 to vector<1x128xi32>
    %519 = arith.addi %1, %518 : vector<1x128xi32>
    %c8_i32_243 = arith.constant 8 : i32
    %520 = vector.broadcast %c8_i32_243 : i32 to vector<1x128xi32>
    %521 = arith.cmpi slt, %519, %520 : vector<1x128xi32>
    %522 = arith.andi %517, %521 : vector<1x128xi1>
    %cst_244 = arith.constant 0.000000e+00 : f32
    %523 = vector.shape_cast %522 : vector<1x128xi1> to vector<1x128xi1>
    %524 = vector.broadcast %523 : vector<1x128xi1> to vector<8x128xi1>
    %525 = vector.broadcast %cst_244 : f32 to vector<8x128xf32>
    %526 = arith.select %524, %502, %525 : vector<8x128xi1>, vector<8x128xf32>
    %c8_245 = arith.constant 8 : index
    %c0_246 = arith.constant 0 : index
    %527 = vector.load %arg10[%c8_245, %c0_246] : memref<288x128xf32, #tpu.memory_space<vmem>>, vector<8x128xf32>
    tpu.vector_store %arg10[%c8_245, %c0_246], %526 {strides = array<i32>} : memref<288x128xf32, #tpu.memory_space<vmem>>, vector<8x128xf32>,
    %c8_i32_247 = arith.constant 8 : i32
    %528 = tpu.dynamic_rotate %475 by %c8_i32_247 dim 1 : vector<8x128xf32>, i32 -> vector<8x128xf32>
    %c-1_i32_248 = arith.constant -1 : i32
    %529 = vector.broadcast %c-1_i32_248 : i32 to vector<1x128xi32>
    %530 = arith.addi %0, %529 : vector<1x128xi32>
    %c0_i32_249 = arith.constant 0 : i32
    %531 = vector.broadcast %c0_i32_249 : i32 to vector<1x128xi32>
    %532 = arith.cmpi sge, %530, %531 : vector<1x128xi32>
    %533 = arith.andi %5, %532 : vector<1x128xi1>
    %c-1_i32_250 = arith.constant -1 : i32
    %534 = vector.broadcast %c-1_i32_250 : i32 to vector<1x128xi32>
    %535 = arith.addi %0, %534 : vector<1x128xi32>
    %c8_i32_251 = arith.constant 8 : i32
    %536 = vector.broadcast %c8_i32_251 : i32 to vector<1x128xi32>
    %537 = arith.cmpi slt, %535, %536 : vector<1x128xi32>
    %538 = arith.andi %533, %537 : vector<1x128xi1>
    %c0_i32_252 = arith.constant 0 : i32
    %539 = vector.broadcast %c0_i32_252 : i32 to vector<1x128xi32>
    %540 = arith.addi %1, %539 : vector<1x128xi32>
    %c0_i32_253 = arith.constant 0 : i32
    %541 = vector.broadcast %c0_i32_253 : i32 to vector<1x128xi32>
    %542 = arith.cmpi sge, %540, %541 : vector<1x128xi32>
    %543 = arith.andi %538, %542 : vector<1x128xi1>
    %c0_i32_254 = arith.constant 0 : i32
    %544 = vector.broadcast %c0_i32_254 : i32 to vector<1x128xi32>
    %545 = arith.addi %1, %544 : vector<1x128xi32>
    %c8_i32_255 = arith.constant 8 : i32
    %546 = vector.broadcast %c8_i32_255 : i32 to vector<1x128xi32>
    %547 = arith.cmpi slt, %545, %546 : vector<1x128xi32>
    %548 = arith.andi %543, %547 : vector<1x128xi1>
    %cst_256 = arith.constant 0.000000e+00 : f32
    %549 = vector.shape_cast %548 : vector<1x128xi1> to vector<1x128xi1>
    %550 = vector.broadcast %549 : vector<1x128xi1> to vector<8x128xi1>
    %551 = vector.broadcast %cst_256 : f32 to vector<8x128xf32>
    %552 = arith.select %550, %528, %551 : vector<8x128xi1>, vector<8x128xf32>
    %c16_257 = arith.constant 16 : index
    %c0_258 = arith.constant 0 : index
    %553 = vector.load %arg10[%c16_257, %c0_258] : memref<288x128xf32, #tpu.memory_space<vmem>>, vector<8x128xf32>
    tpu.vector_store %arg10[%c16_257, %c0_258], %552 {strides = array<i32>} : memref<288x128xf32, #tpu.memory_space<vmem>>, vector<8x128xf32>,
    %c1_i32_259 = arith.constant 1 : i32
    %554 = tpu.dynamic_rotate %461 by %c1_i32_259 dim 1 : vector<8x128xf32>, i32 -> vector<8x128xf32>
    %c0_i32_260 = arith.constant 0 : i32
    %555 = vector.broadcast %c0_i32_260 : i32 to vector<1x128xi32>
    %556 = arith.addi %0, %555 : vector<1x128xi32>
    %c0_i32_261 = arith.constant 0 : i32
    %557 = vector.broadcast %c0_i32_261 : i32 to vector<1x128xi32>
    %558 = arith.cmpi sge, %556, %557 : vector<1x128xi32>
    %559 = arith.andi %5, %558 : vector<1x128xi1>
    %c0_i32_262 = arith.constant 0 : i32
    %560 = vector.broadcast %c0_i32_262 : i32 to vector<1x128xi32>
    %561 = arith.addi %0, %560 : vector<1x128xi32>
    %c8_i32_263 = arith.constant 8 : i32
    %562 = vector.broadcast %c8_i32_263 : i32 to vector<1x128xi32>
    %563 = arith.cmpi slt, %561, %562 : vector<1x128xi32>
    %564 = arith.andi %559, %563 : vector<1x128xi1>
    %c-1_i32_264 = arith.constant -1 : i32
    %565 = vector.broadcast %c-1_i32_264 : i32 to vector<1x128xi32>
    %566 = arith.addi %1, %565 : vector<1x128xi32>
    %c0_i32_265 = arith.constant 0 : i32
    %567 = vector.broadcast %c0_i32_265 : i32 to vector<1x128xi32>
    %568 = arith.cmpi sge, %566, %567 : vector<1x128xi32>
    %569 = arith.andi %564, %568 : vector<1x128xi1>
    %c-1_i32_266 = arith.constant -1 : i32
    %570 = vector.broadcast %c-1_i32_266 : i32 to vector<1x128xi32>
    %571 = arith.addi %1, %570 : vector<1x128xi32>
    %c8_i32_267 = arith.constant 8 : i32
    %572 = vector.broadcast %c8_i32_267 : i32 to vector<1x128xi32>
    %573 = arith.cmpi slt, %571, %572 : vector<1x128xi32>
    %574 = arith.andi %569, %573 : vector<1x128xi1>
    %cst_268 = arith.constant 0.000000e+00 : f32
    %575 = vector.shape_cast %574 : vector<1x128xi1> to vector<1x128xi1>
    %576 = vector.broadcast %575 : vector<1x128xi1> to vector<8x128xi1>
    %577 = vector.broadcast %cst_268 : f32 to vector<8x128xf32>
    %578 = arith.select %576, %554, %577 : vector<8x128xi1>, vector<8x128xf32>
    %c24_269 = arith.constant 24 : index
    %c0_270 = arith.constant 0 : index
    %579 = vector.load %arg10[%c24_269, %c0_270] : memref<288x128xf32, #tpu.memory_space<vmem>>, vector<8x128xf32>
    tpu.vector_store %arg10[%c24_269, %c0_270], %578 {strides = array<i32>} : memref<288x128xf32, #tpu.memory_space<vmem>>, vector<8x128xf32>,
    %c0_i32_271 = arith.constant 0 : i32
    %580 = vector.broadcast %c0_i32_271 : i32 to vector<1x128xi32>
    %581 = arith.addi %0, %580 : vector<1x128xi32>
    %c0_i32_272 = arith.constant 0 : i32
    %582 = vector.broadcast %c0_i32_272 : i32 to vector<1x128xi32>
    %583 = arith.cmpi sge, %581, %582 : vector<1x128xi32>
    %584 = arith.andi %5, %583 : vector<1x128xi1>
    %c0_i32_273 = arith.constant 0 : i32
    %585 = vector.broadcast %c0_i32_273 : i32 to vector<1x128xi32>
    %586 = arith.addi %0, %585 : vector<1x128xi32>
    %c8_i32_274 = arith.constant 8 : i32
    %587 = vector.broadcast %c8_i32_274 : i32 to vector<1x128xi32>
    %588 = arith.cmpi slt, %586, %587 : vector<1x128xi32>
    %589 = arith.andi %584, %588 : vector<1x128xi1>
    %c0_i32_275 = arith.constant 0 : i32
    %590 = vector.broadcast %c0_i32_275 : i32 to vector<1x128xi32>
    %591 = arith.addi %1, %590 : vector<1x128xi32>
    %c0_i32_276 = arith.constant 0 : i32
    %592 = vector.broadcast %c0_i32_276 : i32 to vector<1x128xi32>
    %593 = arith.cmpi sge, %591, %592 : vector<1x128xi32>
    %594 = arith.andi %589, %593 : vector<1x128xi1>
    %c0_i32_277 = arith.constant 0 : i32
    %595 = vector.broadcast %c0_i32_277 : i32 to vector<1x128xi32>
    %596 = arith.addi %1, %595 : vector<1x128xi32>
    %c8_i32_278 = arith.constant 8 : i32
    %597 = vector.broadcast %c8_i32_278 : i32 to vector<1x128xi32>
    %598 = arith.cmpi slt, %596, %597 : vector<1x128xi32>
    %599 = arith.andi %594, %598 : vector<1x128xi1>
    %cst_279 = arith.constant 0.000000e+00 : f32
    %600 = vector.shape_cast %599 : vector<1x128xi1> to vector<1x128xi1>
    %601 = vector.broadcast %600 : vector<1x128xi1> to vector<8x128xi1>
    %602 = vector.broadcast %cst_279 : f32 to vector<8x128xf32>
    %603 = arith.select %601, %454, %602 : vector<8x128xi1>, vector<8x128xf32>
    %c32_280 = arith.constant 32 : index
    %c0_281 = arith.constant 0 : index
    %604 = vector.load %arg10[%c32_280, %c0_281] : memref<288x128xf32, #tpu.memory_space<vmem>>, vector<8x128xf32>
    tpu.vector_store %arg10[%c32_280, %c0_281], %603 {strides = array<i32>} : memref<288x128xf32, #tpu.memory_space<vmem>>, vector<8x128xf32>,
    %c0_i32_282 = arith.constant 0 : i32
    %605 = vector.broadcast %c0_i32_282 : i32 to vector<1x128xi32>
    %606 = arith.addi %0, %605 : vector<1x128xi32>
    %c0_i32_283 = arith.constant 0 : i32
    %607 = vector.broadcast %c0_i32_283 : i32 to vector<1x128xi32>
    %608 = arith.cmpi sge, %606, %607 : vector<1x128xi32>
    %609 = arith.andi %5, %608 : vector<1x128xi1>
    %c0_i32_284 = arith.constant 0 : i32
    %610 = vector.broadcast %c0_i32_284 : i32 to vector<1x128xi32>
    %611 = arith.addi %0, %610 : vector<1x128xi32>
    %c8_i32_285 = arith.constant 8 : i32
    %612 = vector.broadcast %c8_i32_285 : i32 to vector<1x128xi32>
    %613 = arith.cmpi slt, %611, %612 : vector<1x128xi32>
    %614 = arith.andi %609, %613 : vector<1x128xi1>
    %c0_i32_286 = arith.constant 0 : i32
    %615 = vector.broadcast %c0_i32_286 : i32 to vector<1x128xi32>
    %616 = arith.addi %1, %615 : vector<1x128xi32>
    %c0_i32_287 = arith.constant 0 : i32
    %617 = vector.broadcast %c0_i32_287 : i32 to vector<1x128xi32>
    %618 = arith.cmpi sge, %616, %617 : vector<1x128xi32>
    %619 = arith.andi %614, %618 : vector<1x128xi1>
    %c0_i32_288 = arith.constant 0 : i32
    %620 = vector.broadcast %c0_i32_288 : i32 to vector<1x128xi32>
    %621 = arith.addi %1, %620 : vector<1x128xi32>
    %c8_i32_289 = arith.constant 8 : i32
    %622 = vector.broadcast %c8_i32_289 : i32 to vector<1x128xi32>
    %623 = arith.cmpi slt, %621, %622 : vector<1x128xi32>
    %624 = arith.andi %619, %623 : vector<1x128xi1>
    %cst_290 = arith.constant 0.000000e+00 : f32
    %625 = vector.shape_cast %624 : vector<1x128xi1> to vector<1x128xi1>
    %626 = vector.broadcast %625 : vector<1x128xi1> to vector<8x128xi1>
    %627 = vector.broadcast %cst_290 : f32 to vector<8x128xf32>
    %628 = arith.select %626, %461, %627 : vector<8x128xi1>, vector<8x128xf32>
    %c40_291 = arith.constant 40 : index
    %c0_292 = arith.constant 0 : index
    %629 = vector.load %arg10[%c40_291, %c0_292] : memref<288x128xf32, #tpu.memory_space<vmem>>, vector<8x128xf32>
    tpu.vector_store %arg10[%c40_291, %c0_292], %628 {strides = array<i32>} : memref<288x128xf32, #tpu.memory_space<vmem>>, vector<8x128xf32>,
    %c1_i32_293 = arith.constant 1 : i32
    %630 = tpu.dynamic_rotate %475 by %c1_i32_293 dim 1 : vector<8x128xf32>, i32 -> vector<8x128xf32>
    %c0_i32_294 = arith.constant 0 : i32
    %631 = vector.broadcast %c0_i32_294 : i32 to vector<1x128xi32>
    %632 = arith.addi %0, %631 : vector<1x128xi32>
    %c0_i32_295 = arith.constant 0 : i32
    %633 = vector.broadcast %c0_i32_295 : i32 to vector<1x128xi32>
    %634 = arith.cmpi sge, %632, %633 : vector<1x128xi32>
    %635 = arith.andi %5, %634 : vector<1x128xi1>
    %c0_i32_296 = arith.constant 0 : i32
    %636 = vector.broadcast %c0_i32_296 : i32 to vector<1x128xi32>
    %637 = arith.addi %0, %636 : vector<1x128xi32>
    %c8_i32_297 = arith.constant 8 : i32
    %638 = vector.broadcast %c8_i32_297 : i32 to vector<1x128xi32>
    %639 = arith.cmpi slt, %637, %638 : vector<1x128xi32>
    %640 = arith.andi %635, %639 : vector<1x128xi1>
    %c-1_i32_298 = arith.constant -1 : i32
    %641 = vector.broadcast %c-1_i32_298 : i32 to vector<1x128xi32>
    %642 = arith.addi %1, %641 : vector<1x128xi32>
    %c0_i32_299 = arith.constant 0 : i32
    %643 = vector.broadcast %c0_i32_299 : i32 to vector<1x128xi32>
    %644 = arith.cmpi sge, %642, %643 : vector<1x128xi32>
    %645 = arith.andi %640, %644 : vector<1x128xi1>
    %c-1_i32_300 = arith.constant -1 : i32
    %646 = vector.broadcast %c-1_i32_300 : i32 to vector<1x128xi32>
    %647 = arith.addi %1, %646 : vector<1x128xi32>
    %c8_i32_301 = arith.constant 8 : i32
    %648 = vector.broadcast %c8_i32_301 : i32 to vector<1x128xi32>
    %649 = arith.cmpi slt, %647, %648 : vector<1x128xi32>
    %650 = arith.andi %645, %649 : vector<1x128xi1>
    %cst_302 = arith.constant 0.000000e+00 : f32
    %651 = vector.shape_cast %650 : vector<1x128xi1> to vector<1x128xi1>
    %652 = vector.broadcast %651 : vector<1x128xi1> to vector<8x128xi1>
    %653 = vector.broadcast %cst_302 : f32 to vector<8x128xf32>
    %654 = arith.select %652, %630, %653 : vector<8x128xi1>, vector<8x128xf32>
    %c48_303 = arith.constant 48 : index
    %c0_304 = arith.constant 0 : index
    %655 = vector.load %arg10[%c48_303, %c0_304] : memref<288x128xf32, #tpu.memory_space<vmem>>, vector<8x128xf32>
    tpu.vector_store %arg10[%c48_303, %c0_304], %654 {strides = array<i32>} : memref<288x128xf32, #tpu.memory_space<vmem>>, vector<8x128xf32>,
    %c0_i32_305 = arith.constant 0 : i32
    %656 = vector.broadcast %c0_i32_305 : i32 to vector<1x128xi32>
    %657 = arith.addi %0, %656 : vector<1x128xi32>
    %c0_i32_306 = arith.constant 0 : i32
    %658 = vector.broadcast %c0_i32_306 : i32 to vector<1x128xi32>
    %659 = arith.cmpi sge, %657, %658 : vector<1x128xi32>
    %660 = arith.andi %5, %659 : vector<1x128xi1>
    %c0_i32_307 = arith.constant 0 : i32
    %661 = vector.broadcast %c0_i32_307 : i32 to vector<1x128xi32>
    %662 = arith.addi %0, %661 : vector<1x128xi32>
    %c8_i32_308 = arith.constant 8 : i32
    %663 = vector.broadcast %c8_i32_308 : i32 to vector<1x128xi32>
    %664 = arith.cmpi slt, %662, %663 : vector<1x128xi32>
    %665 = arith.andi %660, %664 : vector<1x128xi1>
    %c0_i32_309 = arith.constant 0 : i32
    %666 = vector.broadcast %c0_i32_309 : i32 to vector<1x128xi32>
    %667 = arith.addi %1, %666 : vector<1x128xi32>
    %c0_i32_310 = arith.constant 0 : i32
    %668 = vector.broadcast %c0_i32_310 : i32 to vector<1x128xi32>
    %669 = arith.cmpi sge, %667, %668 : vector<1x128xi32>
    %670 = arith.andi %665, %669 : vector<1x128xi1>
    %c0_i32_311 = arith.constant 0 : i32
    %671 = vector.broadcast %c0_i32_311 : i32 to vector<1x128xi32>
    %672 = arith.addi %1, %671 : vector<1x128xi32>
    %c8_i32_312 = arith.constant 8 : i32
    %673 = vector.broadcast %c8_i32_312 : i32 to vector<1x128xi32>
    %674 = arith.cmpi slt, %672, %673 : vector<1x128xi32>
    %675 = arith.andi %670, %674 : vector<1x128xi1>
    %cst_313 = arith.constant 0.000000e+00 : f32
    %676 = vector.shape_cast %675 : vector<1x128xi1> to vector<1x128xi1>
    %677 = vector.broadcast %676 : vector<1x128xi1> to vector<8x128xi1>
    %678 = vector.broadcast %cst_313 : f32 to vector<8x128xf32>
    %679 = arith.select %677, %468, %678 : vector<8x128xi1>, vector<8x128xf32>
    %c56_314 = arith.constant 56 : index
    %c0_315 = arith.constant 0 : index
    %680 = vector.load %arg10[%c56_314, %c0_315] : memref<288x128xf32, #tpu.memory_space<vmem>>, vector<8x128xf32>
    tpu.vector_store %arg10[%c56_314, %c0_315], %679 {strides = array<i32>} : memref<288x128xf32, #tpu.memory_space<vmem>>, vector<8x128xf32>,
    %c0_i32_316 = arith.constant 0 : i32
    %681 = vector.broadcast %c0_i32_316 : i32 to vector<1x128xi32>
    %682 = arith.addi %0, %681 : vector<1x128xi32>
    %c0_i32_317 = arith.constant 0 : i32
    %683 = vector.broadcast %c0_i32_317 : i32 to vector<1x128xi32>
    %684 = arith.cmpi sge, %682, %683 : vector<1x128xi32>
    %685 = arith.andi %5, %684 : vector<1x128xi1>
    %c0_i32_318 = arith.constant 0 : i32
    %686 = vector.broadcast %c0_i32_318 : i32 to vector<1x128xi32>
    %687 = arith.addi %0, %686 : vector<1x128xi32>
    %c8_i32_319 = arith.constant 8 : i32
    %688 = vector.broadcast %c8_i32_319 : i32 to vector<1x128xi32>
    %689 = arith.cmpi slt, %687, %688 : vector<1x128xi32>
    %690 = arith.andi %685, %689 : vector<1x128xi1>
    %c0_i32_320 = arith.constant 0 : i32
    %691 = vector.broadcast %c0_i32_320 : i32 to vector<1x128xi32>
    %692 = arith.addi %1, %691 : vector<1x128xi32>
    %c0_i32_321 = arith.constant 0 : i32
    %693 = vector.broadcast %c0_i32_321 : i32 to vector<1x128xi32>
    %694 = arith.cmpi sge, %692, %693 : vector<1x128xi32>
    %695 = arith.andi %690, %694 : vector<1x128xi1>
    %c0_i32_322 = arith.constant 0 : i32
    %696 = vector.broadcast %c0_i32_322 : i32 to vector<1x128xi32>
    %697 = arith.addi %1, %696 : vector<1x128xi32>
    %c8_i32_323 = arith.constant 8 : i32
    %698 = vector.broadcast %c8_i32_323 : i32 to vector<1x128xi32>
    %699 = arith.cmpi slt, %697, %698 : vector<1x128xi32>
    %700 = arith.andi %695, %699 : vector<1x128xi1>
    %cst_324 = arith.constant 0.000000e+00 : f32
    %701 = vector.shape_cast %700 : vector<1x128xi1> to vector<1x128xi1>
    %702 = vector.broadcast %701 : vector<1x128xi1> to vector<8x128xi1>
    %703 = vector.broadcast %cst_324 : f32 to vector<8x128xf32>
    %704 = arith.select %702, %475, %703 : vector<8x128xi1>, vector<8x128xf32>
    %c64_325 = arith.constant 64 : index
    %c0_326 = arith.constant 0 : index
    %705 = vector.load %arg10[%c64_325, %c0_326] : memref<288x128xf32, #tpu.memory_space<vmem>>, vector<8x128xf32>
    tpu.vector_store %arg10[%c64_325, %c0_326], %704 {strides = array<i32>} : memref<288x128xf32, #tpu.memory_space<vmem>>, vector<8x128xf32>,
    %c72_327 = arith.constant 72 : index
    %c0_328 = arith.constant 0 : index
    %706 = vector.load %arg10[%c72_327, %c0_328] : memref<288x128xf32, #tpu.memory_space<vmem>>, vector<8x128xf32>
    tpu.vector_store %arg10[%c72_327, %c0_328], %526 {strides = array<i32>} : memref<288x128xf32, #tpu.memory_space<vmem>>, vector<8x128xf32>,
    %c80_329 = arith.constant 80 : index
    %c0_330 = arith.constant 0 : index
    %707 = vector.load %arg10[%c80_329, %c0_330] : memref<288x128xf32, #tpu.memory_space<vmem>>, vector<8x128xf32>
    tpu.vector_store %arg10[%c80_329, %c0_330], %552 {strides = array<i32>} : memref<288x128xf32, #tpu.memory_space<vmem>>, vector<8x128xf32>,
    %c7_i32_331 = arith.constant 7 : i32
    %708 = tpu.dynamic_rotate %468 by %c7_i32_331 dim 1 : vector<8x128xf32>, i32 -> vector<8x128xf32>
    %c-1_i32_332 = arith.constant -1 : i32
    %709 = vector.broadcast %c-1_i32_332 : i32 to vector<1x128xi32>
    %710 = arith.addi %0, %709 : vector<1x128xi32>
    %c0_i32_333 = arith.constant 0 : i32
    %711 = vector.broadcast %c0_i32_333 : i32 to vector<1x128xi32>
    %712 = arith.cmpi sge, %710, %711 : vector<1x128xi32>
    %713 = arith.andi %5, %712 : vector<1x128xi1>
    %c-1_i32_334 = arith.constant -1 : i32
    %714 = vector.broadcast %c-1_i32_334 : i32 to vector<1x128xi32>
    %715 = arith.addi %0, %714 : vector<1x128xi32>
    %c8_i32_335 = arith.constant 8 : i32
    %716 = vector.broadcast %c8_i32_335 : i32 to vector<1x128xi32>
    %717 = arith.cmpi slt, %715, %716 : vector<1x128xi32>
    %718 = arith.andi %713, %717 : vector<1x128xi1>
    %c1_i32_336 = arith.constant 1 : i32
    %719 = vector.broadcast %c1_i32_336 : i32 to vector<1x128xi32>
    %720 = arith.addi %1, %719 : vector<1x128xi32>
    %c0_i32_337 = arith.constant 0 : i32
    %721 = vector.broadcast %c0_i32_337 : i32 to vector<1x128xi32>
    %722 = arith.cmpi sge, %720, %721 : vector<1x128xi32>
    %723 = arith.andi %718, %722 : vector<1x128xi1>
    %c1_i32_338 = arith.constant 1 : i32
    %724 = vector.broadcast %c1_i32_338 : i32 to vector<1x128xi32>
    %725 = arith.addi %1, %724 : vector<1x128xi32>
    %c8_i32_339 = arith.constant 8 : i32
    %726 = vector.broadcast %c8_i32_339 : i32 to vector<1x128xi32>
    %727 = arith.cmpi slt, %725, %726 : vector<1x128xi32>
    %728 = arith.andi %723, %727 : vector<1x128xi1>
    %cst_340 = arith.constant 0.000000e+00 : f32
    %729 = vector.shape_cast %728 : vector<1x128xi1> to vector<1x128xi1>
    %730 = vector.broadcast %729 : vector<1x128xi1> to vector<8x128xi1>
    %731 = vector.broadcast %cst_340 : f32 to vector<8x128xf32>
    %732 = arith.select %730, %708, %731 : vector<8x128xi1>, vector<8x128xf32>
    %c88_341 = arith.constant 88 : index
    %c0_342 = arith.constant 0 : index
    %733 = vector.load %arg10[%c88_341, %c0_342] : memref<288x128xf32, #tpu.memory_space<vmem>>, vector<8x128xf32>
    tpu.vector_store %arg10[%c88_341, %c0_342], %732 {strides = array<i32>} : memref<288x128xf32, #tpu.memory_space<vmem>>, vector<8x128xf32>,
    %c96_343 = arith.constant 96 : index
    %c0_344 = arith.constant 0 : index
    %734 = vector.load %arg10[%c96_343, %c0_344] : memref<288x128xf32, #tpu.memory_space<vmem>>, vector<8x128xf32>
    tpu.vector_store %arg10[%c96_343, %c0_344], %603 {strides = array<i32>} : memref<288x128xf32, #tpu.memory_space<vmem>>, vector<8x128xf32>,
    %c104_345 = arith.constant 104 : index
    %c0_346 = arith.constant 0 : index
    %735 = vector.load %arg10[%c104_345, %c0_346] : memref<288x128xf32, #tpu.memory_space<vmem>>, vector<8x128xf32>
    tpu.vector_store %arg10[%c104_345, %c0_346], %628 {strides = array<i32>} : memref<288x128xf32, #tpu.memory_space<vmem>>, vector<8x128xf32>,
    %c127_i32_347 = arith.constant 127 : i32
    %736 = tpu.dynamic_rotate %454 by %c127_i32_347 dim 1 : vector<8x128xf32>, i32 -> vector<8x128xf32>
    %c0_i32_348 = arith.constant 0 : i32
    %737 = vector.broadcast %c0_i32_348 : i32 to vector<1x128xi32>
    %738 = arith.addi %0, %737 : vector<1x128xi32>
    %c0_i32_349 = arith.constant 0 : i32
    %739 = vector.broadcast %c0_i32_349 : i32 to vector<1x128xi32>
    %740 = arith.cmpi sge, %738, %739 : vector<1x128xi32>
    %741 = arith.andi %5, %740 : vector<1x128xi1>
    %c0_i32_350 = arith.constant 0 : i32
    %742 = vector.broadcast %c0_i32_350 : i32 to vector<1x128xi32>
    %743 = arith.addi %0, %742 : vector<1x128xi32>
    %c8_i32_351 = arith.constant 8 : i32
    %744 = vector.broadcast %c8_i32_351 : i32 to vector<1x128xi32>
    %745 = arith.cmpi slt, %743, %744 : vector<1x128xi32>
    %746 = arith.andi %741, %745 : vector<1x128xi1>
    %c1_i32_352 = arith.constant 1 : i32
    %747 = vector.broadcast %c1_i32_352 : i32 to vector<1x128xi32>
    %748 = arith.addi %1, %747 : vector<1x128xi32>
    %c0_i32_353 = arith.constant 0 : i32
    %749 = vector.broadcast %c0_i32_353 : i32 to vector<1x128xi32>
    %750 = arith.cmpi sge, %748, %749 : vector<1x128xi32>
    %751 = arith.andi %746, %750 : vector<1x128xi1>
    %c1_i32_354 = arith.constant 1 : i32
    %752 = vector.broadcast %c1_i32_354 : i32 to vector<1x128xi32>
    %753 = arith.addi %1, %752 : vector<1x128xi32>
    %c8_i32_355 = arith.constant 8 : i32
    %754 = vector.broadcast %c8_i32_355 : i32 to vector<1x128xi32>
    %755 = arith.cmpi slt, %753, %754 : vector<1x128xi32>
    %756 = arith.andi %751, %755 : vector<1x128xi1>
    %cst_356 = arith.constant 0.000000e+00 : f32
    %757 = vector.shape_cast %756 : vector<1x128xi1> to vector<1x128xi1>
    %758 = vector.broadcast %757 : vector<1x128xi1> to vector<8x128xi1>
    %759 = vector.broadcast %cst_356 : f32 to vector<8x128xf32>
    %760 = arith.select %758, %736, %759 : vector<8x128xi1>, vector<8x128xf32>
    %c112_357 = arith.constant 112 : index
    %c0_358 = arith.constant 0 : index
    %761 = vector.load %arg10[%c112_357, %c0_358] : memref<288x128xf32, #tpu.memory_space<vmem>>, vector<8x128xf32>
    tpu.vector_store %arg10[%c112_357, %c0_358], %760 {strides = array<i32>} : memref<288x128xf32, #tpu.memory_space<vmem>>, vector<8x128xf32>,
    %c120_359 = arith.constant 120 : index
    %c0_360 = arith.constant 0 : index
    %762 = vector.load %arg10[%c120_359, %c0_360] : memref<288x128xf32, #tpu.memory_space<vmem>>, vector<8x128xf32>
    tpu.vector_store %arg10[%c120_359, %c0_360], %679 {strides = array<i32>} : memref<288x128xf32, #tpu.memory_space<vmem>>, vector<8x128xf32>,
    %c128_361 = arith.constant 128 : index
    %c0_362 = arith.constant 0 : index
    %763 = vector.load %arg10[%c128_361, %c0_362] : memref<288x128xf32, #tpu.memory_space<vmem>>, vector<8x128xf32>
    tpu.vector_store %arg10[%c128_361, %c0_362], %704 {strides = array<i32>} : memref<288x128xf32, #tpu.memory_space<vmem>>, vector<8x128xf32>,
    %c127_i32_363 = arith.constant 127 : i32
    %764 = tpu.dynamic_rotate %468 by %c127_i32_363 dim 1 : vector<8x128xf32>, i32 -> vector<8x128xf32>
    %c0_i32_364 = arith.constant 0 : i32
    %765 = vector.broadcast %c0_i32_364 : i32 to vector<1x128xi32>
    %766 = arith.addi %0, %765 : vector<1x128xi32>
    %c0_i32_365 = arith.constant 0 : i32
    %767 = vector.broadcast %c0_i32_365 : i32 to vector<1x128xi32>
    %768 = arith.cmpi sge, %766, %767 : vector<1x128xi32>
    %769 = arith.andi %5, %768 : vector<1x128xi1>
    %c0_i32_366 = arith.constant 0 : i32
    %770 = vector.broadcast %c0_i32_366 : i32 to vector<1x128xi32>
    %771 = arith.addi %0, %770 : vector<1x128xi32>
    %c8_i32_367 = arith.constant 8 : i32
    %772 = vector.broadcast %c8_i32_367 : i32 to vector<1x128xi32>
    %773 = arith.cmpi slt, %771, %772 : vector<1x128xi32>
    %774 = arith.andi %769, %773 : vector<1x128xi1>
    %c1_i32_368 = arith.constant 1 : i32
    %775 = vector.broadcast %c1_i32_368 : i32 to vector<1x128xi32>
    %776 = arith.addi %1, %775 : vector<1x128xi32>
    %c0_i32_369 = arith.constant 0 : i32
    %777 = vector.broadcast %c0_i32_369 : i32 to vector<1x128xi32>
    %778 = arith.cmpi sge, %776, %777 : vector<1x128xi32>
    %779 = arith.andi %774, %778 : vector<1x128xi1>
    %c1_i32_370 = arith.constant 1 : i32
    %780 = vector.broadcast %c1_i32_370 : i32 to vector<1x128xi32>
    %781 = arith.addi %1, %780 : vector<1x128xi32>
    %c8_i32_371 = arith.constant 8 : i32
    %782 = vector.broadcast %c8_i32_371 : i32 to vector<1x128xi32>
    %783 = arith.cmpi slt, %781, %782 : vector<1x128xi32>
    %784 = arith.andi %779, %783 : vector<1x128xi1>
    %cst_372 = arith.constant 0.000000e+00 : f32
    %785 = vector.shape_cast %784 : vector<1x128xi1> to vector<1x128xi1>
    %786 = vector.broadcast %785 : vector<1x128xi1> to vector<8x128xi1>
    %787 = vector.broadcast %cst_372 : f32 to vector<8x128xf32>
    %788 = arith.select %786, %764, %787 : vector<8x128xi1>, vector<8x128xf32>
    %c136_373 = arith.constant 136 : index
    %c0_374 = arith.constant 0 : index
    %789 = vector.load %arg10[%c136_373, %c0_374] : memref<288x128xf32, #tpu.memory_space<vmem>>, vector<8x128xf32>
    tpu.vector_store %arg10[%c136_373, %c0_374], %788 {strides = array<i32>} : memref<288x128xf32, #tpu.memory_space<vmem>>, vector<8x128xf32>,
    %c144_375 = arith.constant 144 : index
    %c0_376 = arith.constant 0 : index
    %790 = vector.load %arg10[%c144_375, %c0_376] : memref<288x128xf32, #tpu.memory_space<vmem>>, vector<8x128xf32>
    tpu.vector_store %arg10[%c144_375, %c0_376], %578 {strides = array<i32>} : memref<288x128xf32, #tpu.memory_space<vmem>>, vector<8x128xf32>,
    %c152_377 = arith.constant 152 : index
    %c0_378 = arith.constant 0 : index
    %791 = vector.load %arg10[%c152_377, %c0_378] : memref<288x128xf32, #tpu.memory_space<vmem>>, vector<8x128xf32>
    tpu.vector_store %arg10[%c152_377, %c0_378], %603 {strides = array<i32>} : memref<288x128xf32, #tpu.memory_space<vmem>>, vector<8x128xf32>,
    %c160_379 = arith.constant 160 : index
    %c0_380 = arith.constant 0 : index
    %792 = vector.load %arg10[%c160_379, %c0_380] : memref<288x128xf32, #tpu.memory_space<vmem>>, vector<8x128xf32>
    tpu.vector_store %arg10[%c160_379, %c0_380], %628 {strides = array<i32>} : memref<288x128xf32, #tpu.memory_space<vmem>>, vector<8x128xf32>,
    %c168_381 = arith.constant 168 : index
    %c0_382 = arith.constant 0 : index
    %793 = vector.load %arg10[%c168_381, %c0_382] : memref<288x128xf32, #tpu.memory_space<vmem>>, vector<8x128xf32>
    tpu.vector_store %arg10[%c168_381, %c0_382], %654 {strides = array<i32>} : memref<288x128xf32, #tpu.memory_space<vmem>>, vector<8x128xf32>,
    %c176_383 = arith.constant 176 : index
    %c0_384 = arith.constant 0 : index
    %794 = vector.load %arg10[%c176_383, %c0_384] : memref<288x128xf32, #tpu.memory_space<vmem>>, vector<8x128xf32>
    tpu.vector_store %arg10[%c176_383, %c0_384], %679 {strides = array<i32>} : memref<288x128xf32, #tpu.memory_space<vmem>>, vector<8x128xf32>,
    %c184_385 = arith.constant 184 : index
    %c0_386 = arith.constant 0 : index
    %795 = vector.load %arg10[%c184_385, %c0_386] : memref<288x128xf32, #tpu.memory_space<vmem>>, vector<8x128xf32>
    tpu.vector_store %arg10[%c184_385, %c0_386], %704 {strides = array<i32>} : memref<288x128xf32, #tpu.memory_space<vmem>>, vector<8x128xf32>,
    %c121_i32_387 = arith.constant 121 : i32
    %796 = tpu.dynamic_rotate %461 by %c121_i32_387 dim 1 : vector<8x128xf32>, i32 -> vector<8x128xf32>
    %c1_i32_388 = arith.constant 1 : i32
    %797 = vector.broadcast %c1_i32_388 : i32 to vector<1x128xi32>
    %798 = arith.addi %0, %797 : vector<1x128xi32>
    %c0_i32_389 = arith.constant 0 : i32
    %799 = vector.broadcast %c0_i32_389 : i32 to vector<1x128xi32>
    %800 = arith.cmpi sge, %798, %799 : vector<1x128xi32>
    %801 = arith.andi %5, %800 : vector<1x128xi1>
    %c1_i32_390 = arith.constant 1 : i32
    %802 = vector.broadcast %c1_i32_390 : i32 to vector<1x128xi32>
    %803 = arith.addi %0, %802 : vector<1x128xi32>
    %c8_i32_391 = arith.constant 8 : i32
    %804 = vector.broadcast %c8_i32_391 : i32 to vector<1x128xi32>
    %805 = arith.cmpi slt, %803, %804 : vector<1x128xi32>
    %806 = arith.andi %801, %805 : vector<1x128xi1>
    %c-1_i32_392 = arith.constant -1 : i32
    %807 = vector.broadcast %c-1_i32_392 : i32 to vector<1x128xi32>
    %808 = arith.addi %1, %807 : vector<1x128xi32>
    %c0_i32_393 = arith.constant 0 : i32
    %809 = vector.broadcast %c0_i32_393 : i32 to vector<1x128xi32>
    %810 = arith.cmpi sge, %808, %809 : vector<1x128xi32>
    %811 = arith.andi %806, %810 : vector<1x128xi1>
    %c-1_i32_394 = arith.constant -1 : i32
    %812 = vector.broadcast %c-1_i32_394 : i32 to vector<1x128xi32>
    %813 = arith.addi %1, %812 : vector<1x128xi32>
    %c8_i32_395 = arith.constant 8 : i32
    %814 = vector.broadcast %c8_i32_395 : i32 to vector<1x128xi32>
    %815 = arith.cmpi slt, %813, %814 : vector<1x128xi32>
    %816 = arith.andi %811, %815 : vector<1x128xi1>
    %cst_396 = arith.constant 0.000000e+00 : f32
    %817 = vector.shape_cast %816 : vector<1x128xi1> to vector<1x128xi1>
    %818 = vector.broadcast %817 : vector<1x128xi1> to vector<8x128xi1>
    %819 = vector.broadcast %cst_396 : f32 to vector<8x128xf32>
    %820 = arith.select %818, %796, %819 : vector<8x128xi1>, vector<8x128xf32>
    %c192_397 = arith.constant 192 : index
    %c0_398 = arith.constant 0 : index
    %821 = vector.load %arg10[%c192_397, %c0_398] : memref<288x128xf32, #tpu.memory_space<vmem>>, vector<8x128xf32>
    tpu.vector_store %arg10[%c192_397, %c0_398], %820 {strides = array<i32>} : memref<288x128xf32, #tpu.memory_space<vmem>>, vector<8x128xf32>,
    %c120_i32_399 = arith.constant 120 : i32
    %822 = tpu.dynamic_rotate %454 by %c120_i32_399 dim 1 : vector<8x128xf32>, i32 -> vector<8x128xf32>
    %c1_i32_400 = arith.constant 1 : i32
    %823 = vector.broadcast %c1_i32_400 : i32 to vector<1x128xi32>
    %824 = arith.addi %0, %823 : vector<1x128xi32>
    %c0_i32_401 = arith.constant 0 : i32
    %825 = vector.broadcast %c0_i32_401 : i32 to vector<1x128xi32>
    %826 = arith.cmpi sge, %824, %825 : vector<1x128xi32>
    %827 = arith.andi %5, %826 : vector<1x128xi1>
    %c1_i32_402 = arith.constant 1 : i32
    %828 = vector.broadcast %c1_i32_402 : i32 to vector<1x128xi32>
    %829 = arith.addi %0, %828 : vector<1x128xi32>
    %c8_i32_403 = arith.constant 8 : i32
    %830 = vector.broadcast %c8_i32_403 : i32 to vector<1x128xi32>
    %831 = arith.cmpi slt, %829, %830 : vector<1x128xi32>
    %832 = arith.andi %827, %831 : vector<1x128xi1>
    %c0_i32_404 = arith.constant 0 : i32
    %833 = vector.broadcast %c0_i32_404 : i32 to vector<1x128xi32>
    %834 = arith.addi %1, %833 : vector<1x128xi32>
    %c0_i32_405 = arith.constant 0 : i32
    %835 = vector.broadcast %c0_i32_405 : i32 to vector<1x128xi32>
    %836 = arith.cmpi sge, %834, %835 : vector<1x128xi32>
    %837 = arith.andi %832, %836 : vector<1x128xi1>
    %c0_i32_406 = arith.constant 0 : i32
    %838 = vector.broadcast %c0_i32_406 : i32 to vector<1x128xi32>
    %839 = arith.addi %1, %838 : vector<1x128xi32>
    %c8_i32_407 = arith.constant 8 : i32
    %840 = vector.broadcast %c8_i32_407 : i32 to vector<1x128xi32>
    %841 = arith.cmpi slt, %839, %840 : vector<1x128xi32>
    %842 = arith.andi %837, %841 : vector<1x128xi1>
    %cst_408 = arith.constant 0.000000e+00 : f32
    %843 = vector.shape_cast %842 : vector<1x128xi1> to vector<1x128xi1>
    %844 = vector.broadcast %843 : vector<1x128xi1> to vector<8x128xi1>
    %845 = vector.broadcast %cst_408 : f32 to vector<8x128xf32>
    %846 = arith.select %844, %822, %845 : vector<8x128xi1>, vector<8x128xf32>
    %c200_409 = arith.constant 200 : index
    %c0_410 = arith.constant 0 : index
    %847 = vector.load %arg10[%c200_409, %c0_410] : memref<288x128xf32, #tpu.memory_space<vmem>>, vector<8x128xf32>
    tpu.vector_store %arg10[%c200_409, %c0_410], %846 {strides = array<i32>} : memref<288x128xf32, #tpu.memory_space<vmem>>, vector<8x128xf32>,
    %c120_i32_411 = arith.constant 120 : i32
    %848 = tpu.dynamic_rotate %461 by %c120_i32_411 dim 1 : vector<8x128xf32>, i32 -> vector<8x128xf32>
    %c1_i32_412 = arith.constant 1 : i32
    %849 = vector.broadcast %c1_i32_412 : i32 to vector<1x128xi32>
    %850 = arith.addi %0, %849 : vector<1x128xi32>
    %c0_i32_413 = arith.constant 0 : i32
    %851 = vector.broadcast %c0_i32_413 : i32 to vector<1x128xi32>
    %852 = arith.cmpi sge, %850, %851 : vector<1x128xi32>
    %853 = arith.andi %5, %852 : vector<1x128xi1>
    %c1_i32_414 = arith.constant 1 : i32
    %854 = vector.broadcast %c1_i32_414 : i32 to vector<1x128xi32>
    %855 = arith.addi %0, %854 : vector<1x128xi32>
    %c8_i32_415 = arith.constant 8 : i32
    %856 = vector.broadcast %c8_i32_415 : i32 to vector<1x128xi32>
    %857 = arith.cmpi slt, %855, %856 : vector<1x128xi32>
    %858 = arith.andi %853, %857 : vector<1x128xi1>
    %c0_i32_416 = arith.constant 0 : i32
    %859 = vector.broadcast %c0_i32_416 : i32 to vector<1x128xi32>
    %860 = arith.addi %1, %859 : vector<1x128xi32>
    %c0_i32_417 = arith.constant 0 : i32
    %861 = vector.broadcast %c0_i32_417 : i32 to vector<1x128xi32>
    %862 = arith.cmpi sge, %860, %861 : vector<1x128xi32>
    %863 = arith.andi %858, %862 : vector<1x128xi1>
    %c0_i32_418 = arith.constant 0 : i32
    %864 = vector.broadcast %c0_i32_418 : i32 to vector<1x128xi32>
    %865 = arith.addi %1, %864 : vector<1x128xi32>
    %c8_i32_419 = arith.constant 8 : i32
    %866 = vector.broadcast %c8_i32_419 : i32 to vector<1x128xi32>
    %867 = arith.cmpi slt, %865, %866 : vector<1x128xi32>
    %868 = arith.andi %863, %867 : vector<1x128xi1>
    %cst_420 = arith.constant 0.000000e+00 : f32
    %869 = vector.shape_cast %868 : vector<1x128xi1> to vector<1x128xi1>
    %870 = vector.broadcast %869 : vector<1x128xi1> to vector<8x128xi1>
    %871 = vector.broadcast %cst_420 : f32 to vector<8x128xf32>
    %872 = arith.select %870, %848, %871 : vector<8x128xi1>, vector<8x128xf32>
    %c208_421 = arith.constant 208 : index
    %c0_422 = arith.constant 0 : index
    %873 = vector.load %arg10[%c208_421, %c0_422] : memref<288x128xf32, #tpu.memory_space<vmem>>, vector<8x128xf32>
    tpu.vector_store %arg10[%c208_421, %c0_422], %872 {strides = array<i32>} : memref<288x128xf32, #tpu.memory_space<vmem>>, vector<8x128xf32>,
    %c216_423 = arith.constant 216 : index
    %c0_424 = arith.constant 0 : index
    %874 = vector.load %arg10[%c216_423, %c0_424] : memref<288x128xf32, #tpu.memory_space<vmem>>, vector<8x128xf32>
    tpu.vector_store %arg10[%c216_423, %c0_424], %603 {strides = array<i32>} : memref<288x128xf32, #tpu.memory_space<vmem>>, vector<8x128xf32>,
    %c224_425 = arith.constant 224 : index
    %c0_426 = arith.constant 0 : index
    %875 = vector.load %arg10[%c224_425, %c0_426] : memref<288x128xf32, #tpu.memory_space<vmem>>, vector<8x128xf32>
    tpu.vector_store %arg10[%c224_425, %c0_426], %628 {strides = array<i32>} : memref<288x128xf32, #tpu.memory_space<vmem>>, vector<8x128xf32>,
    %c232_427 = arith.constant 232 : index
    %c0_428 = arith.constant 0 : index
    %876 = vector.load %arg10[%c232_427, %c0_428] : memref<288x128xf32, #tpu.memory_space<vmem>>, vector<8x128xf32>
    tpu.vector_store %arg10[%c232_427, %c0_428], %760 {strides = array<i32>} : memref<288x128xf32, #tpu.memory_space<vmem>>, vector<8x128xf32>,
    %c240_429 = arith.constant 240 : index
    %c0_430 = arith.constant 0 : index
    %877 = vector.load %arg10[%c240_429, %c0_430] : memref<288x128xf32, #tpu.memory_space<vmem>>, vector<8x128xf32>
    tpu.vector_store %arg10[%c240_429, %c0_430], %679 {strides = array<i32>} : memref<288x128xf32, #tpu.memory_space<vmem>>, vector<8x128xf32>,
    %c248_431 = arith.constant 248 : index
    %c0_432 = arith.constant 0 : index
    %878 = vector.load %arg10[%c248_431, %c0_432] : memref<288x128xf32, #tpu.memory_space<vmem>>, vector<8x128xf32>
    tpu.vector_store %arg10[%c248_431, %c0_432], %704 {strides = array<i32>} : memref<288x128xf32, #tpu.memory_space<vmem>>, vector<8x128xf32>,
    %c256_433 = arith.constant 256 : index
    %c0_434 = arith.constant 0 : index
    %879 = vector.load %arg10[%c256_433, %c0_434] : memref<288x128xf32, #tpu.memory_space<vmem>>, vector<8x128xf32>
    tpu.vector_store %arg10[%c256_433, %c0_434], %788 {strides = array<i32>} : memref<288x128xf32, #tpu.memory_space<vmem>>, vector<8x128xf32>,
    %c264_435 = arith.constant 264 : index
    %c0_436 = arith.constant 0 : index
    %880 = vector.load %arg10[%c264_435, %c0_436] : memref<288x128xf32, #tpu.memory_space<vmem>>, vector<8x128xf32>
    tpu.vector_store %arg10[%c264_435, %c0_436], %846 {strides = array<i32>} : memref<288x128xf32, #tpu.memory_space<vmem>>, vector<8x128xf32>,
    %c272_437 = arith.constant 272 : index
    %c0_438 = arith.constant 0 : index
    %881 = vector.load %arg10[%c272_437, %c0_438] : memref<288x128xf32, #tpu.memory_space<vmem>>, vector<8x128xf32>
    tpu.vector_store %arg10[%c272_437, %c0_438], %872 {strides = array<i32>} : memref<288x128xf32, #tpu.memory_space<vmem>>, vector<8x128xf32>,
    %c119_i32_439 = arith.constant 119 : i32
    %882 = tpu.dynamic_rotate %454 by %c119_i32_439 dim 1 : vector<8x128xf32>, i32 -> vector<8x128xf32>
    %c1_i32_440 = arith.constant 1 : i32
    %883 = vector.broadcast %c1_i32_440 : i32 to vector<1x128xi32>
    %884 = arith.addi %0, %883 : vector<1x128xi32>
    %c0_i32_441 = arith.constant 0 : i32
    %885 = vector.broadcast %c0_i32_441 : i32 to vector<1x128xi32>
    %886 = arith.cmpi sge, %884, %885 : vector<1x128xi32>
    %887 = arith.andi %5, %886 : vector<1x128xi1>
    %c1_i32_442 = arith.constant 1 : i32
    %888 = vector.broadcast %c1_i32_442 : i32 to vector<1x128xi32>
    %889 = arith.addi %0, %888 : vector<1x128xi32>
    %c8_i32_443 = arith.constant 8 : i32
    %890 = vector.broadcast %c8_i32_443 : i32 to vector<1x128xi32>
    %891 = arith.cmpi slt, %889, %890 : vector<1x128xi32>
    %892 = arith.andi %887, %891 : vector<1x128xi1>
    %c1_i32_444 = arith.constant 1 : i32
    %893 = vector.broadcast %c1_i32_444 : i32 to vector<1x128xi32>
    %894 = arith.addi %1, %893 : vector<1x128xi32>
    %c0_i32_445 = arith.constant 0 : i32
    %895 = vector.broadcast %c0_i32_445 : i32 to vector<1x128xi32>
    %896 = arith.cmpi sge, %894, %895 : vector<1x128xi32>
    %897 = arith.andi %892, %896 : vector<1x128xi1>
    %c1_i32_446 = arith.constant 1 : i32
    %898 = vector.broadcast %c1_i32_446 : i32 to vector<1x128xi32>
    %899 = arith.addi %1, %898 : vector<1x128xi32>
    %c8_i32_447 = arith.constant 8 : i32
    %900 = vector.broadcast %c8_i32_447 : i32 to vector<1x128xi32>
    %901 = arith.cmpi slt, %899, %900 : vector<1x128xi32>
    %902 = arith.andi %897, %901 : vector<1x128xi1>
    %cst_448 = arith.constant 0.000000e+00 : f32
    %903 = vector.shape_cast %902 : vector<1x128xi1> to vector<1x128xi1>
    %904 = vector.broadcast %903 : vector<1x128xi1> to vector<8x128xi1>
    %905 = vector.broadcast %cst_448 : f32 to vector<8x128xf32>
    %906 = arith.select %904, %882, %905 : vector<8x128xi1>, vector<8x128xf32>
    %c280_449 = arith.constant 280 : index
    %c0_450 = arith.constant 0 : index
    %907 = vector.load %arg10[%c280_449, %c0_450] : memref<288x128xf32, #tpu.memory_space<vmem>>, vector<8x128xf32>
    tpu.vector_store %arg10[%c280_449, %c0_450], %906 {strides = array<i32>} : memref<288x128xf32, #tpu.memory_space<vmem>>, vector<8x128xf32>,
    %c0_451 = arith.constant 0 : index
    %c0_452 = arith.constant 0 : index
    %908 = vector.load %arg5[%c0_451, %c0_452] : memref<8x72xbf16, #tpu.memory_space<vmem>>, vector<8x72xbf16>
    %c0_453 = arith.constant 0 : index
    %c0_454 = arith.constant 0 : index
    %909 = vector.load %arg6[%c0_453, %c0_454] : memref<8x1xf32, #tpu.memory_space<vmem>>, vector<8x1xf32>
    %c0_455 = arith.constant 0 : index
    %c0_456 = arith.constant 0 : index
    %910 = vector.load %arg10[%c0_455, %c0_456] : memref<288x128xf32, #tpu.memory_space<vmem>>, vector<72x128xf32>
    %911 = arith.truncf %910 : vector<72x128xf32> to vector<72x128xbf16>
    %cst_457 = arith.constant dense<0.000000e+00> : vector<8x128xf32>
    %912 = tpu.matmul %908, %911, %cst_457 {dimension_numbers = #tpu.dot_dimension_numbers<[1], [0], [0], [1], [0, 0, 1, 1], [], []>} : vector<8x72xbf16>, vector<72x128xbf16>, vector<8x128xf32> -> vector<8x128xf32>
    %913 = vector.broadcast %909 : vector<8x1xf32> to vector<8x128xf32>
    %914 = arith.addf %912, %913 : vector<8x128xf32>
    %c72_458 = arith.constant 72 : index
    %c0_459 = arith.constant 0 : index
    %915 = vector.load %arg10[%c72_458, %c0_459] : memref<288x128xf32, #tpu.memory_space<vmem>>, vector<72x128xf32>
    %916 = arith.truncf %915 : vector<72x128xf32> to vector<72x128xbf16>
    %cst_460 = arith.constant dense<0.000000e+00> : vector<8x128xf32>
    %917 = tpu.matmul %908, %916, %cst_460 {dimension_numbers = #tpu.dot_dimension_numbers<[1], [0], [0], [1], [0, 0, 1, 1], [], []>} : vector<8x72xbf16>, vector<72x128xbf16>, vector<8x128xf32> -> vector<8x128xf32>
    %918 = vector.broadcast %909 : vector<8x1xf32> to vector<8x128xf32>
    %919 = arith.addf %917, %918 : vector<8x128xf32>
    %c144_461 = arith.constant 144 : index
    %c0_462 = arith.constant 0 : index
    %920 = vector.load %arg10[%c144_461, %c0_462] : memref<288x128xf32, #tpu.memory_space<vmem>>, vector<72x128xf32>
    %921 = arith.truncf %920 : vector<72x128xf32> to vector<72x128xbf16>
    %cst_463 = arith.constant dense<0.000000e+00> : vector<8x128xf32>
    %922 = tpu.matmul %908, %921, %cst_463 {dimension_numbers = #tpu.dot_dimension_numbers<[1], [0], [0], [1], [0, 0, 1, 1], [], []>} : vector<8x72xbf16>, vector<72x128xbf16>, vector<8x128xf32> -> vector<8x128xf32>
    %923 = vector.broadcast %909 : vector<8x1xf32> to vector<8x128xf32>
    %924 = arith.addf %922, %923 : vector<8x128xf32>
    %c216_464 = arith.constant 216 : index
    %c0_465 = arith.constant 0 : index
    %925 = vector.load %arg10[%c216_464, %c0_465] : memref<288x128xf32, #tpu.memory_space<vmem>>, vector<72x128xf32>
    %926 = arith.truncf %925 : vector<72x128xf32> to vector<72x128xbf16>
    %cst_466 = arith.constant dense<0.000000e+00> : vector<8x128xf32>
    %927 = tpu.matmul %908, %926, %cst_466 {dimension_numbers = #tpu.dot_dimension_numbers<[1], [0], [0], [1], [0, 0, 1, 1], [], []>} : vector<8x72xbf16>, vector<72x128xbf16>, vector<8x128xf32> -> vector<8x128xf32>
    %928 = vector.broadcast %909 : vector<8x1xf32> to vector<8x128xf32>
    %929 = arith.addf %927, %928 : vector<8x128xf32>
    %930 = arith.maximumf %914, %919 : vector<8x128xf32>
    %931 = arith.cmpf oge, %914, %919 : vector<8x128xf32>
    %c0_i32_467 = arith.constant 0 : i32
    %c1_i32_468 = arith.constant 1 : i32
    %932 = vector.broadcast %c0_i32_467 : i32 to vector<8x128xi32>
    %933 = vector.broadcast %c1_i32_468 : i32 to vector<8x128xi32>
    %934 = arith.select %931, %932, %933 : vector<8x128xi1>, vector<8x128xi32>
    %935 = arith.maximumf %924, %929 : vector<8x128xf32>
    %936 = arith.cmpf oge, %924, %929 : vector<8x128xf32>
    %c0_i32_469 = arith.constant 0 : i32
    %c1_i32_470 = arith.constant 1 : i32
    %937 = vector.broadcast %c0_i32_469 : i32 to vector<8x128xi32>
    %938 = vector.broadcast %c1_i32_470 : i32 to vector<8x128xi32>
    %939 = arith.select %936, %937, %938 : vector<8x128xi1>, vector<8x128xi32>
    %940 = arith.cmpf oge, %930, %935 : vector<8x128xf32>
    %941 = arith.maximumf %930, %935 : vector<8x128xf32>
    %c0_i32_471 = arith.constant 0 : i32
    %c1_i32_472 = arith.constant 1 : i32
    %942 = vector.broadcast %c0_i32_471 : i32 to vector<8x128xi32>
    %943 = vector.broadcast %c1_i32_472 : i32 to vector<8x128xi32>
    %944 = arith.select %940, %942, %943 : vector<8x128xi1>, vector<8x128xi32>
    %945 = arith.select %940, %934, %939 : vector<8x128xi1>, vector<8x128xi32>
    %c0_473 = arith.constant 0 : index
    %c0_474 = arith.constant 0 : index
    %c0_475 = arith.constant 0 : index
    %946 = vector.load %arg7[%c0_473, %c0_474, %c0_475] : memref<1x8x128xf32, #tpu.memory_space<vmem>>, vector<1x8x128xf32>
    %947 = vector.shape_cast %946 : vector<1x8x128xf32> to vector<8x128xf32>
    %948 = vector.shape_cast %941 : vector<8x128xf32> to vector<1x8x128xf32>
    tpu.vector_store %arg7[%c0_473, %c0_474, %c0_475], %948 {strides = array<i32>} : memref<1x8x128xf32, #tpu.memory_space<vmem>>, vector<1x8x128xf32>,
    %c16_i32 = arith.constant 16 : i32
    %949 = vector.broadcast %c16_i32 : i32 to vector<8x128xi32>
    %950 = arith.muli %944, %949 : vector<8x128xi32>
    %951 = vector.broadcast %2 : vector<1x128xi32> to vector<8x128xi32>
    %952 = arith.addi %951, %950 : vector<8x128xi32>
    %953 = arith.addi %952, %945 : vector<8x128xi32>
    %c0_476 = arith.constant 0 : index
    %c0_477 = arith.constant 0 : index
    %c0_478 = arith.constant 0 : index
    %954 = vector.load %arg8[%c0_476, %c0_477, %c0_478] : memref<1x8x128xi32, #tpu.memory_space<vmem>>, vector<1x8x128xi32>
    %955 = vector.shape_cast %954 : vector<1x8x128xi32> to vector<8x128xi32>
    %956 = vector.shape_cast %953 : vector<8x128xi32> to vector<1x8x128xi32>
    tpu.vector_store %arg8[%c0_476, %c0_477, %c0_478], %956 {strides = array<i32>} : memref<1x8x128xi32, #tpu.memory_space<vmem>>, vector<1x8x128xi32>,
    return
  }
  func.func @transform_0(%arg0: i32) -> (i32, i32) {
    %c0_i32 = arith.constant 0 : i32
    %c0_i32_0 = arith.constant 0 : i32
    %c0_i32_1 = arith.constant 0 : i32
    return %c0_i32, %c0_i32_0 : i32, i32
  }
  func.func @transform_1(%arg0: i32) -> (i32, i32, i32, i32) {
    %c0_i32 = arith.constant 0 : i32
    %c0_i32_0 = arith.constant 0 : i32
    %c0_i32_1 = arith.constant 0 : i32
    %c0_i32_2 = arith.constant 0 : i32
    return %arg0, %c0_i32, %c0_i32_0, %c0_i32_1 : i32, i32, i32, i32
  }
  func.func @transform_2(%arg0: i32) -> (i32, i32) {
    %c0_i32 = arith.constant 0 : i32
    %c0_i32_0 = arith.constant 0 : i32
    %c0_i32_1 = arith.constant 0 : i32
    return %c0_i32, %c0_i32_0 : i32, i32
  }
  func.func @transform_3(%arg0: i32) -> (i32, i32) {
    %c0_i32 = arith.constant 0 : i32
    %c0_i32_0 = arith.constant 0 : i32
    %c0_i32_1 = arith.constant 0 : i32
    return %c0_i32, %c0_i32_0 : i32, i32
  }
  func.func @transform_4(%arg0: i32) -> (i32, i32) {
    %c0_i32 = arith.constant 0 : i32
    %c0_i32_0 = arith.constant 0 : i32
    %c0_i32_1 = arith.constant 0 : i32
    return %c0_i32, %c0_i32_0 : i32, i32
  }
  func.func @transform_5(%arg0: i32) -> (i32, i32) {
    %c0_i32 = arith.constant 0 : i32
    %c0_i32_0 = arith.constant 0 : i32
    %c0_i32_1 = arith.constant 0 : i32
    return %c0_i32, %c0_i32_0 : i32, i32
  }
  func.func @transform_6(%arg0: i32) -> (i32, i32, i32) {
    %c0_i32 = arith.constant 0 : i32
    %c0_i32_0 = arith.constant 0 : i32
    %c0_i32_1 = arith.constant 0 : i32
    return %arg0, %c0_i32, %c0_i32_0 : i32, i32, i32
  }
  func.func @transform_7(%arg0: i32) -> (i32, i32, i32) {
    %c0_i32 = arith.constant 0 : i32
    %c0_i32_0 = arith.constant 0 : i32
    %c0_i32_1 = arith.constant 0 : i32
    return %arg0, %c0_i32, %c0_i32_0 : i32, i32, i32
  }
}

module attributes {stable_mosaic.version = 11 : i64} {
  func.func @_stage_kernel(%arg0: i32, %arg1: memref<8x128xi32, #tpu.memory_space<vmem>>, %arg2: memref<1x4x8x128xf32, #tpu.memory_space<vmem>>, %arg3: memref<16x72xbf16, #tpu.memory_space<vmem>>, %arg4: memref<16x1xf32, #tpu.memory_space<vmem>>, %arg5: memref<16x144xbf16, #tpu.memory_space<vmem>>, %arg6: memref<16x1xf32, #tpu.memory_space<vmem>>, %arg7: memref<1x16x128xf32, #tpu.memory_space<vmem>>, %arg8: memref<1x16x128xi32, #tpu.memory_space<vmem>>, %arg9: memref<288x128xf32, #tpu.memory_space<vmem>>, %arg10: memref<576x128xf32, #tpu.memory_space<vmem>>) attributes {dimension_semantics = [#tpu.dimension_semantics<parallel>], iteration_bounds = array<i64: 1>, scalar_prefetch = 0 : i64, scratch_operands = 2 : i64, tpu.core_type = #tpu.core_type<tc>, window_params = [{pipeline_mode = #tpu.pipeline_mode<synchronous>, transform_indices = @transform_0, window_bounds = array<i64: 8, 128>}, {transform_indices = @transform_1, window_bounds = array<i64: 1, 4, 8, 128>}, {pipeline_mode = #tpu.pipeline_mode<synchronous>, transform_indices = @transform_2, window_bounds = array<i64: 16, 72>}, {pipeline_mode = #tpu.pipeline_mode<synchronous>, transform_indices = @transform_3, window_bounds = array<i64: 16, 1>}, {pipeline_mode = #tpu.pipeline_mode<synchronous>, transform_indices = @transform_4, window_bounds = array<i64: 16, 144>}, {pipeline_mode = #tpu.pipeline_mode<synchronous>, transform_indices = @transform_5, window_bounds = array<i64: 16, 1>}, {transform_indices = @transform_6, window_bounds = array<i64: 1, 16, 128>}, {transform_indices = @transform_7, window_bounds = array<i64: 1, 16, 128>}]} {
    %c0 = arith.constant 0 : index
    %c0_0 = arith.constant 0 : index
    %0 = vector.load %arg1[%c0, %c0_0] : memref<8x128xi32, #tpu.memory_space<vmem>>, vector<1x128xi32>
    %c1 = arith.constant 1 : index
    %c0_1 = arith.constant 0 : index
    %1 = vector.load %arg1[%c1, %c0_1] : memref<8x128xi32, #tpu.memory_space<vmem>>, vector<1x128xi32>
    %c2 = arith.constant 2 : index
    %c0_2 = arith.constant 0 : index
    %2 = vector.load %arg1[%c2, %c0_2] : memref<8x128xi32, #tpu.memory_space<vmem>>, vector<1x128xi32>
    %c3 = arith.constant 3 : index
    %c0_3 = arith.constant 0 : index
    %3 = vector.load %arg1[%c3, %c0_3] : memref<8x128xi32, #tpu.memory_space<vmem>>, vector<1x128xi32>
    %c0_i32 = arith.constant 0 : i32
    %4 = vector.broadcast %c0_i32 : i32 to vector<1x128xi32>
    %5 = arith.cmpi sgt, %3, %4 : vector<1x128xi32>
    %c0_4 = arith.constant 0 : index
    %c0_5 = arith.constant 0 : index
    %c0_6 = arith.constant 0 : index
    %c0_7 = arith.constant 0 : index
    %6 = vector.load %arg2[%c0_4, %c0_5, %c0_6, %c0_7] : memref<1x4x8x128xf32, #tpu.memory_space<vmem>>, vector<1x1x8x128xf32>
    %7 = vector.shape_cast %6 : vector<1x1x8x128xf32> to vector<8x128xf32>
    %c0_8 = arith.constant 0 : index
    %c1_9 = arith.constant 1 : index
    %c0_10 = arith.constant 0 : index
    %c0_11 = arith.constant 0 : index
    %8 = vector.load %arg2[%c0_8, %c1_9, %c0_10, %c0_11] : memref<1x4x8x128xf32, #tpu.memory_space<vmem>>, vector<1x1x8x128xf32>
    %9 = vector.shape_cast %8 : vector<1x1x8x128xf32> to vector<8x128xf32>
    %c0_12 = arith.constant 0 : index
    %c2_13 = arith.constant 2 : index
    %c0_14 = arith.constant 0 : index
    %c0_15 = arith.constant 0 : index
    %10 = vector.load %arg2[%c0_12, %c2_13, %c0_14, %c0_15] : memref<1x4x8x128xf32, #tpu.memory_space<vmem>>, vector<1x1x8x128xf32>
    %11 = vector.shape_cast %10 : vector<1x1x8x128xf32> to vector<8x128xf32>
    %c0_16 = arith.constant 0 : index
    %c3_17 = arith.constant 3 : index
    %c0_18 = arith.constant 0 : index
    %c0_19 = arith.constant 0 : index
    %12 = vector.load %arg2[%c0_16, %c3_17, %c0_18, %c0_19] : memref<1x4x8x128xf32, #tpu.memory_space<vmem>>, vector<1x1x8x128xf32>
    %13 = vector.shape_cast %12 : vector<1x1x8x128xf32> to vector<8x128xf32>
    %c5_i32 = arith.constant 5 : i32
    %14 = tpu.dynamic_rotate %13 by %c5_i32 dim 1 : vector<8x128xf32>, i32 -> vector<8x128xf32>
    %c-1_i32 = arith.constant -1 : i32
    %15 = vector.broadcast %c-1_i32 : i32 to vector<1x128xi32>
    %16 = arith.addi %0, %15 : vector<1x128xi32>
    %c0_i32_20 = arith.constant 0 : i32
    %17 = vector.broadcast %c0_i32_20 : i32 to vector<1x128xi32>
    %18 = arith.cmpi sge, %16, %17 : vector<1x128xi32>
    %19 = arith.andi %5, %18 : vector<1x128xi1>
    %c-1_i32_21 = arith.constant -1 : i32
    %20 = vector.broadcast %c-1_i32_21 : i32 to vector<1x128xi32>
    %21 = arith.addi %0, %20 : vector<1x128xi32>
    %c4_i32 = arith.constant 4 : i32
    %22 = vector.broadcast %c4_i32 : i32 to vector<1x128xi32>
    %23 = arith.cmpi slt, %21, %22 : vector<1x128xi32>
    %24 = arith.andi %19, %23 : vector<1x128xi1>
    %c-1_i32_22 = arith.constant -1 : i32
    %25 = vector.broadcast %c-1_i32_22 : i32 to vector<1x128xi32>
    %26 = arith.addi %1, %25 : vector<1x128xi32>
    %c0_i32_23 = arith.constant 0 : i32
    %27 = vector.broadcast %c0_i32_23 : i32 to vector<1x128xi32>
    %28 = arith.cmpi sge, %26, %27 : vector<1x128xi32>
    %29 = arith.andi %24, %28 : vector<1x128xi1>
    %c-1_i32_24 = arith.constant -1 : i32
    %30 = vector.broadcast %c-1_i32_24 : i32 to vector<1x128xi32>
    %31 = arith.addi %1, %30 : vector<1x128xi32>
    %c4_i32_25 = arith.constant 4 : i32
    %32 = vector.broadcast %c4_i32_25 : i32 to vector<1x128xi32>
    %33 = arith.cmpi slt, %31, %32 : vector<1x128xi32>
    %34 = arith.andi %29, %33 : vector<1x128xi1>
    %cst = arith.constant 0.000000e+00 : f32
    %35 = vector.shape_cast %34 : vector<1x128xi1> to vector<1x128xi1>
    %36 = vector.broadcast %35 : vector<1x128xi1> to vector<8x128xi1>
    %37 = vector.broadcast %cst : f32 to vector<8x128xf32>
    %38 = arith.select %36, %14, %37 : vector<8x128xi1>, vector<8x128xf32>
    %c0_26 = arith.constant 0 : index
    %c0_27 = arith.constant 0 : index
    %39 = vector.load %arg9[%c0_26, %c0_27] : memref<288x128xf32, #tpu.memory_space<vmem>>, vector<8x128xf32>
    tpu.vector_store %arg9[%c0_26, %c0_27], %38 {strides = array<i32>} : memref<288x128xf32, #tpu.memory_space<vmem>>, vector<8x128xf32>,
    %c4_i32_28 = arith.constant 4 : i32
    %40 = tpu.dynamic_rotate %11 by %c4_i32_28 dim 1 : vector<8x128xf32>, i32 -> vector<8x128xf32>
    %c-1_i32_29 = arith.constant -1 : i32
    %41 = vector.broadcast %c-1_i32_29 : i32 to vector<1x128xi32>
    %42 = arith.addi %0, %41 : vector<1x128xi32>
    %c0_i32_30 = arith.constant 0 : i32
    %43 = vector.broadcast %c0_i32_30 : i32 to vector<1x128xi32>
    %44 = arith.cmpi sge, %42, %43 : vector<1x128xi32>
    %45 = arith.andi %5, %44 : vector<1x128xi1>
    %c-1_i32_31 = arith.constant -1 : i32
    %46 = vector.broadcast %c-1_i32_31 : i32 to vector<1x128xi32>
    %47 = arith.addi %0, %46 : vector<1x128xi32>
    %c4_i32_32 = arith.constant 4 : i32
    %48 = vector.broadcast %c4_i32_32 : i32 to vector<1x128xi32>
    %49 = arith.cmpi slt, %47, %48 : vector<1x128xi32>
    %50 = arith.andi %45, %49 : vector<1x128xi1>
    %c0_i32_33 = arith.constant 0 : i32
    %51 = vector.broadcast %c0_i32_33 : i32 to vector<1x128xi32>
    %52 = arith.addi %1, %51 : vector<1x128xi32>
    %c0_i32_34 = arith.constant 0 : i32
    %53 = vector.broadcast %c0_i32_34 : i32 to vector<1x128xi32>
    %54 = arith.cmpi sge, %52, %53 : vector<1x128xi32>
    %55 = arith.andi %50, %54 : vector<1x128xi1>
    %c0_i32_35 = arith.constant 0 : i32
    %56 = vector.broadcast %c0_i32_35 : i32 to vector<1x128xi32>
    %57 = arith.addi %1, %56 : vector<1x128xi32>
    %c4_i32_36 = arith.constant 4 : i32
    %58 = vector.broadcast %c4_i32_36 : i32 to vector<1x128xi32>
    %59 = arith.cmpi slt, %57, %58 : vector<1x128xi32>
    %60 = arith.andi %55, %59 : vector<1x128xi1>
    %cst_37 = arith.constant 0.000000e+00 : f32
    %61 = vector.shape_cast %60 : vector<1x128xi1> to vector<1x128xi1>
    %62 = vector.broadcast %61 : vector<1x128xi1> to vector<8x128xi1>
    %63 = vector.broadcast %cst_37 : f32 to vector<8x128xf32>
    %64 = arith.select %62, %40, %63 : vector<8x128xi1>, vector<8x128xf32>
    %c8 = arith.constant 8 : index
    %c0_38 = arith.constant 0 : index
    %65 = vector.load %arg9[%c8, %c0_38] : memref<288x128xf32, #tpu.memory_space<vmem>>, vector<8x128xf32>
    tpu.vector_store %arg9[%c8, %c0_38], %64 {strides = array<i32>} : memref<288x128xf32, #tpu.memory_space<vmem>>, vector<8x128xf32>,
    %c4_i32_39 = arith.constant 4 : i32
    %66 = tpu.dynamic_rotate %13 by %c4_i32_39 dim 1 : vector<8x128xf32>, i32 -> vector<8x128xf32>
    %c-1_i32_40 = arith.constant -1 : i32
    %67 = vector.broadcast %c-1_i32_40 : i32 to vector<1x128xi32>
    %68 = arith.addi %0, %67 : vector<1x128xi32>
    %c0_i32_41 = arith.constant 0 : i32
    %69 = vector.broadcast %c0_i32_41 : i32 to vector<1x128xi32>
    %70 = arith.cmpi sge, %68, %69 : vector<1x128xi32>
    %71 = arith.andi %5, %70 : vector<1x128xi1>
    %c-1_i32_42 = arith.constant -1 : i32
    %72 = vector.broadcast %c-1_i32_42 : i32 to vector<1x128xi32>
    %73 = arith.addi %0, %72 : vector<1x128xi32>
    %c4_i32_43 = arith.constant 4 : i32
    %74 = vector.broadcast %c4_i32_43 : i32 to vector<1x128xi32>
    %75 = arith.cmpi slt, %73, %74 : vector<1x128xi32>
    %76 = arith.andi %71, %75 : vector<1x128xi1>
    %c0_i32_44 = arith.constant 0 : i32
    %77 = vector.broadcast %c0_i32_44 : i32 to vector<1x128xi32>
    %78 = arith.addi %1, %77 : vector<1x128xi32>
    %c0_i32_45 = arith.constant 0 : i32
    %79 = vector.broadcast %c0_i32_45 : i32 to vector<1x128xi32>
    %80 = arith.cmpi sge, %78, %79 : vector<1x128xi32>
    %81 = arith.andi %76, %80 : vector<1x128xi1>
    %c0_i32_46 = arith.constant 0 : i32
    %82 = vector.broadcast %c0_i32_46 : i32 to vector<1x128xi32>
    %83 = arith.addi %1, %82 : vector<1x128xi32>
    %c4_i32_47 = arith.constant 4 : i32
    %84 = vector.broadcast %c4_i32_47 : i32 to vector<1x128xi32>
    %85 = arith.cmpi slt, %83, %84 : vector<1x128xi32>
    %86 = arith.andi %81, %85 : vector<1x128xi1>
    %cst_48 = arith.constant 0.000000e+00 : f32
    %87 = vector.shape_cast %86 : vector<1x128xi1> to vector<1x128xi1>
    %88 = vector.broadcast %87 : vector<1x128xi1> to vector<8x128xi1>
    %89 = vector.broadcast %cst_48 : f32 to vector<8x128xf32>
    %90 = arith.select %88, %66, %89 : vector<8x128xi1>, vector<8x128xf32>
    %c16 = arith.constant 16 : index
    %c0_49 = arith.constant 0 : index
    %91 = vector.load %arg9[%c16, %c0_49] : memref<288x128xf32, #tpu.memory_space<vmem>>, vector<8x128xf32>
    tpu.vector_store %arg9[%c16, %c0_49], %90 {strides = array<i32>} : memref<288x128xf32, #tpu.memory_space<vmem>>, vector<8x128xf32>,
    %c1_i32 = arith.constant 1 : i32
    %92 = tpu.dynamic_rotate %9 by %c1_i32 dim 1 : vector<8x128xf32>, i32 -> vector<8x128xf32>
    %c0_i32_50 = arith.constant 0 : i32
    %93 = vector.broadcast %c0_i32_50 : i32 to vector<1x128xi32>
    %94 = arith.addi %0, %93 : vector<1x128xi32>
    %c0_i32_51 = arith.constant 0 : i32
    %95 = vector.broadcast %c0_i32_51 : i32 to vector<1x128xi32>
    %96 = arith.cmpi sge, %94, %95 : vector<1x128xi32>
    %97 = arith.andi %5, %96 : vector<1x128xi1>
    %c0_i32_52 = arith.constant 0 : i32
    %98 = vector.broadcast %c0_i32_52 : i32 to vector<1x128xi32>
    %99 = arith.addi %0, %98 : vector<1x128xi32>
    %c4_i32_53 = arith.constant 4 : i32
    %100 = vector.broadcast %c4_i32_53 : i32 to vector<1x128xi32>
    %101 = arith.cmpi slt, %99, %100 : vector<1x128xi32>
    %102 = arith.andi %97, %101 : vector<1x128xi1>
    %c-1_i32_54 = arith.constant -1 : i32
    %103 = vector.broadcast %c-1_i32_54 : i32 to vector<1x128xi32>
    %104 = arith.addi %1, %103 : vector<1x128xi32>
    %c0_i32_55 = arith.constant 0 : i32
    %105 = vector.broadcast %c0_i32_55 : i32 to vector<1x128xi32>
    %106 = arith.cmpi sge, %104, %105 : vector<1x128xi32>
    %107 = arith.andi %102, %106 : vector<1x128xi1>
    %c-1_i32_56 = arith.constant -1 : i32
    %108 = vector.broadcast %c-1_i32_56 : i32 to vector<1x128xi32>
    %109 = arith.addi %1, %108 : vector<1x128xi32>
    %c4_i32_57 = arith.constant 4 : i32
    %110 = vector.broadcast %c4_i32_57 : i32 to vector<1x128xi32>
    %111 = arith.cmpi slt, %109, %110 : vector<1x128xi32>
    %112 = arith.andi %107, %111 : vector<1x128xi1>
    %cst_58 = arith.constant 0.000000e+00 : f32
    %113 = vector.shape_cast %112 : vector<1x128xi1> to vector<1x128xi1>
    %114 = vector.broadcast %113 : vector<1x128xi1> to vector<8x128xi1>
    %115 = vector.broadcast %cst_58 : f32 to vector<8x128xf32>
    %116 = arith.select %114, %92, %115 : vector<8x128xi1>, vector<8x128xf32>
    %c24 = arith.constant 24 : index
    %c0_59 = arith.constant 0 : index
    %117 = vector.load %arg9[%c24, %c0_59] : memref<288x128xf32, #tpu.memory_space<vmem>>, vector<8x128xf32>
    tpu.vector_store %arg9[%c24, %c0_59], %116 {strides = array<i32>} : memref<288x128xf32, #tpu.memory_space<vmem>>, vector<8x128xf32>,
    %c0_i32_60 = arith.constant 0 : i32
    %118 = vector.broadcast %c0_i32_60 : i32 to vector<1x128xi32>
    %119 = arith.addi %0, %118 : vector<1x128xi32>
    %c0_i32_61 = arith.constant 0 : i32
    %120 = vector.broadcast %c0_i32_61 : i32 to vector<1x128xi32>
    %121 = arith.cmpi sge, %119, %120 : vector<1x128xi32>
    %122 = arith.andi %5, %121 : vector<1x128xi1>
    %c0_i32_62 = arith.constant 0 : i32
    %123 = vector.broadcast %c0_i32_62 : i32 to vector<1x128xi32>
    %124 = arith.addi %0, %123 : vector<1x128xi32>
    %c4_i32_63 = arith.constant 4 : i32
    %125 = vector.broadcast %c4_i32_63 : i32 to vector<1x128xi32>
    %126 = arith.cmpi slt, %124, %125 : vector<1x128xi32>
    %127 = arith.andi %122, %126 : vector<1x128xi1>
    %c0_i32_64 = arith.constant 0 : i32
    %128 = vector.broadcast %c0_i32_64 : i32 to vector<1x128xi32>
    %129 = arith.addi %1, %128 : vector<1x128xi32>
    %c0_i32_65 = arith.constant 0 : i32
    %130 = vector.broadcast %c0_i32_65 : i32 to vector<1x128xi32>
    %131 = arith.cmpi sge, %129, %130 : vector<1x128xi32>
    %132 = arith.andi %127, %131 : vector<1x128xi1>
    %c0_i32_66 = arith.constant 0 : i32
    %133 = vector.broadcast %c0_i32_66 : i32 to vector<1x128xi32>
    %134 = arith.addi %1, %133 : vector<1x128xi32>
    %c4_i32_67 = arith.constant 4 : i32
    %135 = vector.broadcast %c4_i32_67 : i32 to vector<1x128xi32>
    %136 = arith.cmpi slt, %134, %135 : vector<1x128xi32>
    %137 = arith.andi %132, %136 : vector<1x128xi1>
    %cst_68 = arith.constant 0.000000e+00 : f32
    %138 = vector.shape_cast %137 : vector<1x128xi1> to vector<1x128xi1>
    %139 = vector.broadcast %138 : vector<1x128xi1> to vector<8x128xi1>
    %140 = vector.broadcast %cst_68 : f32 to vector<8x128xf32>
    %141 = arith.select %139, %7, %140 : vector<8x128xi1>, vector<8x128xf32>
    %c32 = arith.constant 32 : index
    %c0_69 = arith.constant 0 : index
    %142 = vector.load %arg9[%c32, %c0_69] : memref<288x128xf32, #tpu.memory_space<vmem>>, vector<8x128xf32>
    tpu.vector_store %arg9[%c32, %c0_69], %141 {strides = array<i32>} : memref<288x128xf32, #tpu.memory_space<vmem>>, vector<8x128xf32>,
    %c0_i32_70 = arith.constant 0 : i32
    %143 = vector.broadcast %c0_i32_70 : i32 to vector<1x128xi32>
    %144 = arith.addi %0, %143 : vector<1x128xi32>
    %c0_i32_71 = arith.constant 0 : i32
    %145 = vector.broadcast %c0_i32_71 : i32 to vector<1x128xi32>
    %146 = arith.cmpi sge, %144, %145 : vector<1x128xi32>
    %147 = arith.andi %5, %146 : vector<1x128xi1>
    %c0_i32_72 = arith.constant 0 : i32
    %148 = vector.broadcast %c0_i32_72 : i32 to vector<1x128xi32>
    %149 = arith.addi %0, %148 : vector<1x128xi32>
    %c4_i32_73 = arith.constant 4 : i32
    %150 = vector.broadcast %c4_i32_73 : i32 to vector<1x128xi32>
    %151 = arith.cmpi slt, %149, %150 : vector<1x128xi32>
    %152 = arith.andi %147, %151 : vector<1x128xi1>
    %c0_i32_74 = arith.constant 0 : i32
    %153 = vector.broadcast %c0_i32_74 : i32 to vector<1x128xi32>
    %154 = arith.addi %1, %153 : vector<1x128xi32>
    %c0_i32_75 = arith.constant 0 : i32
    %155 = vector.broadcast %c0_i32_75 : i32 to vector<1x128xi32>
    %156 = arith.cmpi sge, %154, %155 : vector<1x128xi32>
    %157 = arith.andi %152, %156 : vector<1x128xi1>
    %c0_i32_76 = arith.constant 0 : i32
    %158 = vector.broadcast %c0_i32_76 : i32 to vector<1x128xi32>
    %159 = arith.addi %1, %158 : vector<1x128xi32>
    %c4_i32_77 = arith.constant 4 : i32
    %160 = vector.broadcast %c4_i32_77 : i32 to vector<1x128xi32>
    %161 = arith.cmpi slt, %159, %160 : vector<1x128xi32>
    %162 = arith.andi %157, %161 : vector<1x128xi1>
    %cst_78 = arith.constant 0.000000e+00 : f32
    %163 = vector.shape_cast %162 : vector<1x128xi1> to vector<1x128xi1>
    %164 = vector.broadcast %163 : vector<1x128xi1> to vector<8x128xi1>
    %165 = vector.broadcast %cst_78 : f32 to vector<8x128xf32>
    %166 = arith.select %164, %9, %165 : vector<8x128xi1>, vector<8x128xf32>
    %c40 = arith.constant 40 : index
    %c0_79 = arith.constant 0 : index
    %167 = vector.load %arg9[%c40, %c0_79] : memref<288x128xf32, #tpu.memory_space<vmem>>, vector<8x128xf32>
    tpu.vector_store %arg9[%c40, %c0_79], %166 {strides = array<i32>} : memref<288x128xf32, #tpu.memory_space<vmem>>, vector<8x128xf32>,
    %c1_i32_80 = arith.constant 1 : i32
    %168 = tpu.dynamic_rotate %13 by %c1_i32_80 dim 1 : vector<8x128xf32>, i32 -> vector<8x128xf32>
    %c0_i32_81 = arith.constant 0 : i32
    %169 = vector.broadcast %c0_i32_81 : i32 to vector<1x128xi32>
    %170 = arith.addi %0, %169 : vector<1x128xi32>
    %c0_i32_82 = arith.constant 0 : i32
    %171 = vector.broadcast %c0_i32_82 : i32 to vector<1x128xi32>
    %172 = arith.cmpi sge, %170, %171 : vector<1x128xi32>
    %173 = arith.andi %5, %172 : vector<1x128xi1>
    %c0_i32_83 = arith.constant 0 : i32
    %174 = vector.broadcast %c0_i32_83 : i32 to vector<1x128xi32>
    %175 = arith.addi %0, %174 : vector<1x128xi32>
    %c4_i32_84 = arith.constant 4 : i32
    %176 = vector.broadcast %c4_i32_84 : i32 to vector<1x128xi32>
    %177 = arith.cmpi slt, %175, %176 : vector<1x128xi32>
    %178 = arith.andi %173, %177 : vector<1x128xi1>
    %c-1_i32_85 = arith.constant -1 : i32
    %179 = vector.broadcast %c-1_i32_85 : i32 to vector<1x128xi32>
    %180 = arith.addi %1, %179 : vector<1x128xi32>
    %c0_i32_86 = arith.constant 0 : i32
    %181 = vector.broadcast %c0_i32_86 : i32 to vector<1x128xi32>
    %182 = arith.cmpi sge, %180, %181 : vector<1x128xi32>
    %183 = arith.andi %178, %182 : vector<1x128xi1>
    %c-1_i32_87 = arith.constant -1 : i32
    %184 = vector.broadcast %c-1_i32_87 : i32 to vector<1x128xi32>
    %185 = arith.addi %1, %184 : vector<1x128xi32>
    %c4_i32_88 = arith.constant 4 : i32
    %186 = vector.broadcast %c4_i32_88 : i32 to vector<1x128xi32>
    %187 = arith.cmpi slt, %185, %186 : vector<1x128xi32>
    %188 = arith.andi %183, %187 : vector<1x128xi1>
    %cst_89 = arith.constant 0.000000e+00 : f32
    %189 = vector.shape_cast %188 : vector<1x128xi1> to vector<1x128xi1>
    %190 = vector.broadcast %189 : vector<1x128xi1> to vector<8x128xi1>
    %191 = vector.broadcast %cst_89 : f32 to vector<8x128xf32>
    %192 = arith.select %190, %168, %191 : vector<8x128xi1>, vector<8x128xf32>
    %c48 = arith.constant 48 : index
    %c0_90 = arith.constant 0 : index
    %193 = vector.load %arg9[%c48, %c0_90] : memref<288x128xf32, #tpu.memory_space<vmem>>, vector<8x128xf32>
    tpu.vector_store %arg9[%c48, %c0_90], %192 {strides = array<i32>} : memref<288x128xf32, #tpu.memory_space<vmem>>, vector<8x128xf32>,
    %c0_i32_91 = arith.constant 0 : i32
    %194 = vector.broadcast %c0_i32_91 : i32 to vector<1x128xi32>
    %195 = arith.addi %0, %194 : vector<1x128xi32>
    %c0_i32_92 = arith.constant 0 : i32
    %196 = vector.broadcast %c0_i32_92 : i32 to vector<1x128xi32>
    %197 = arith.cmpi sge, %195, %196 : vector<1x128xi32>
    %198 = arith.andi %5, %197 : vector<1x128xi1>
    %c0_i32_93 = arith.constant 0 : i32
    %199 = vector.broadcast %c0_i32_93 : i32 to vector<1x128xi32>
    %200 = arith.addi %0, %199 : vector<1x128xi32>
    %c4_i32_94 = arith.constant 4 : i32
    %201 = vector.broadcast %c4_i32_94 : i32 to vector<1x128xi32>
    %202 = arith.cmpi slt, %200, %201 : vector<1x128xi32>
    %203 = arith.andi %198, %202 : vector<1x128xi1>
    %c0_i32_95 = arith.constant 0 : i32
    %204 = vector.broadcast %c0_i32_95 : i32 to vector<1x128xi32>
    %205 = arith.addi %1, %204 : vector<1x128xi32>
    %c0_i32_96 = arith.constant 0 : i32
    %206 = vector.broadcast %c0_i32_96 : i32 to vector<1x128xi32>
    %207 = arith.cmpi sge, %205, %206 : vector<1x128xi32>
    %208 = arith.andi %203, %207 : vector<1x128xi1>
    %c0_i32_97 = arith.constant 0 : i32
    %209 = vector.broadcast %c0_i32_97 : i32 to vector<1x128xi32>
    %210 = arith.addi %1, %209 : vector<1x128xi32>
    %c4_i32_98 = arith.constant 4 : i32
    %211 = vector.broadcast %c4_i32_98 : i32 to vector<1x128xi32>
    %212 = arith.cmpi slt, %210, %211 : vector<1x128xi32>
    %213 = arith.andi %208, %212 : vector<1x128xi1>
    %cst_99 = arith.constant 0.000000e+00 : f32
    %214 = vector.shape_cast %213 : vector<1x128xi1> to vector<1x128xi1>
    %215 = vector.broadcast %214 : vector<1x128xi1> to vector<8x128xi1>
    %216 = vector.broadcast %cst_99 : f32 to vector<8x128xf32>
    %217 = arith.select %215, %11, %216 : vector<8x128xi1>, vector<8x128xf32>
    %c56 = arith.constant 56 : index
    %c0_100 = arith.constant 0 : index
    %218 = vector.load %arg9[%c56, %c0_100] : memref<288x128xf32, #tpu.memory_space<vmem>>, vector<8x128xf32>
    tpu.vector_store %arg9[%c56, %c0_100], %217 {strides = array<i32>} : memref<288x128xf32, #tpu.memory_space<vmem>>, vector<8x128xf32>,
    %c0_i32_101 = arith.constant 0 : i32
    %219 = vector.broadcast %c0_i32_101 : i32 to vector<1x128xi32>
    %220 = arith.addi %0, %219 : vector<1x128xi32>
    %c0_i32_102 = arith.constant 0 : i32
    %221 = vector.broadcast %c0_i32_102 : i32 to vector<1x128xi32>
    %222 = arith.cmpi sge, %220, %221 : vector<1x128xi32>
    %223 = arith.andi %5, %222 : vector<1x128xi1>
    %c0_i32_103 = arith.constant 0 : i32
    %224 = vector.broadcast %c0_i32_103 : i32 to vector<1x128xi32>
    %225 = arith.addi %0, %224 : vector<1x128xi32>
    %c4_i32_104 = arith.constant 4 : i32
    %226 = vector.broadcast %c4_i32_104 : i32 to vector<1x128xi32>
    %227 = arith.cmpi slt, %225, %226 : vector<1x128xi32>
    %228 = arith.andi %223, %227 : vector<1x128xi1>
    %c0_i32_105 = arith.constant 0 : i32
    %229 = vector.broadcast %c0_i32_105 : i32 to vector<1x128xi32>
    %230 = arith.addi %1, %229 : vector<1x128xi32>
    %c0_i32_106 = arith.constant 0 : i32
    %231 = vector.broadcast %c0_i32_106 : i32 to vector<1x128xi32>
    %232 = arith.cmpi sge, %230, %231 : vector<1x128xi32>
    %233 = arith.andi %228, %232 : vector<1x128xi1>
    %c0_i32_107 = arith.constant 0 : i32
    %234 = vector.broadcast %c0_i32_107 : i32 to vector<1x128xi32>
    %235 = arith.addi %1, %234 : vector<1x128xi32>
    %c4_i32_108 = arith.constant 4 : i32
    %236 = vector.broadcast %c4_i32_108 : i32 to vector<1x128xi32>
    %237 = arith.cmpi slt, %235, %236 : vector<1x128xi32>
    %238 = arith.andi %233, %237 : vector<1x128xi1>
    %cst_109 = arith.constant 0.000000e+00 : f32
    %239 = vector.shape_cast %238 : vector<1x128xi1> to vector<1x128xi1>
    %240 = vector.broadcast %239 : vector<1x128xi1> to vector<8x128xi1>
    %241 = vector.broadcast %cst_109 : f32 to vector<8x128xf32>
    %242 = arith.select %240, %13, %241 : vector<8x128xi1>, vector<8x128xf32>
    %c64 = arith.constant 64 : index
    %c0_110 = arith.constant 0 : index
    %243 = vector.load %arg9[%c64, %c0_110] : memref<288x128xf32, #tpu.memory_space<vmem>>, vector<8x128xf32>
    tpu.vector_store %arg9[%c64, %c0_110], %242 {strides = array<i32>} : memref<288x128xf32, #tpu.memory_space<vmem>>, vector<8x128xf32>,
    %c72 = arith.constant 72 : index
    %c0_111 = arith.constant 0 : index
    %244 = vector.load %arg9[%c72, %c0_111] : memref<288x128xf32, #tpu.memory_space<vmem>>, vector<8x128xf32>
    tpu.vector_store %arg9[%c72, %c0_111], %64 {strides = array<i32>} : memref<288x128xf32, #tpu.memory_space<vmem>>, vector<8x128xf32>,
    %c80 = arith.constant 80 : index
    %c0_112 = arith.constant 0 : index
    %245 = vector.load %arg9[%c80, %c0_112] : memref<288x128xf32, #tpu.memory_space<vmem>>, vector<8x128xf32>
    tpu.vector_store %arg9[%c80, %c0_112], %90 {strides = array<i32>} : memref<288x128xf32, #tpu.memory_space<vmem>>, vector<8x128xf32>,
    %c3_i32 = arith.constant 3 : i32
    %246 = tpu.dynamic_rotate %11 by %c3_i32 dim 1 : vector<8x128xf32>, i32 -> vector<8x128xf32>
    %c-1_i32_113 = arith.constant -1 : i32
    %247 = vector.broadcast %c-1_i32_113 : i32 to vector<1x128xi32>
    %248 = arith.addi %0, %247 : vector<1x128xi32>
    %c0_i32_114 = arith.constant 0 : i32
    %249 = vector.broadcast %c0_i32_114 : i32 to vector<1x128xi32>
    %250 = arith.cmpi sge, %248, %249 : vector<1x128xi32>
    %251 = arith.andi %5, %250 : vector<1x128xi1>
    %c-1_i32_115 = arith.constant -1 : i32
    %252 = vector.broadcast %c-1_i32_115 : i32 to vector<1x128xi32>
    %253 = arith.addi %0, %252 : vector<1x128xi32>
    %c4_i32_116 = arith.constant 4 : i32
    %254 = vector.broadcast %c4_i32_116 : i32 to vector<1x128xi32>
    %255 = arith.cmpi slt, %253, %254 : vector<1x128xi32>
    %256 = arith.andi %251, %255 : vector<1x128xi1>
    %c1_i32_117 = arith.constant 1 : i32
    %257 = vector.broadcast %c1_i32_117 : i32 to vector<1x128xi32>
    %258 = arith.addi %1, %257 : vector<1x128xi32>
    %c0_i32_118 = arith.constant 0 : i32
    %259 = vector.broadcast %c0_i32_118 : i32 to vector<1x128xi32>
    %260 = arith.cmpi sge, %258, %259 : vector<1x128xi32>
    %261 = arith.andi %256, %260 : vector<1x128xi1>
    %c1_i32_119 = arith.constant 1 : i32
    %262 = vector.broadcast %c1_i32_119 : i32 to vector<1x128xi32>
    %263 = arith.addi %1, %262 : vector<1x128xi32>
    %c4_i32_120 = arith.constant 4 : i32
    %264 = vector.broadcast %c4_i32_120 : i32 to vector<1x128xi32>
    %265 = arith.cmpi slt, %263, %264 : vector<1x128xi32>
    %266 = arith.andi %261, %265 : vector<1x128xi1>
    %cst_121 = arith.constant 0.000000e+00 : f32
    %267 = vector.shape_cast %266 : vector<1x128xi1> to vector<1x128xi1>
    %268 = vector.broadcast %267 : vector<1x128xi1> to vector<8x128xi1>
    %269 = vector.broadcast %cst_121 : f32 to vector<8x128xf32>
    %270 = arith.select %268, %246, %269 : vector<8x128xi1>, vector<8x128xf32>
    %c88 = arith.constant 88 : index
    %c0_122 = arith.constant 0 : index
    %271 = vector.load %arg9[%c88, %c0_122] : memref<288x128xf32, #tpu.memory_space<vmem>>, vector<8x128xf32>
    tpu.vector_store %arg9[%c88, %c0_122], %270 {strides = array<i32>} : memref<288x128xf32, #tpu.memory_space<vmem>>, vector<8x128xf32>,
    %c96 = arith.constant 96 : index
    %c0_123 = arith.constant 0 : index
    %272 = vector.load %arg9[%c96, %c0_123] : memref<288x128xf32, #tpu.memory_space<vmem>>, vector<8x128xf32>
    tpu.vector_store %arg9[%c96, %c0_123], %141 {strides = array<i32>} : memref<288x128xf32, #tpu.memory_space<vmem>>, vector<8x128xf32>,
    %c104 = arith.constant 104 : index
    %c0_124 = arith.constant 0 : index
    %273 = vector.load %arg9[%c104, %c0_124] : memref<288x128xf32, #tpu.memory_space<vmem>>, vector<8x128xf32>
    tpu.vector_store %arg9[%c104, %c0_124], %166 {strides = array<i32>} : memref<288x128xf32, #tpu.memory_space<vmem>>, vector<8x128xf32>,
    %c127_i32 = arith.constant 127 : i32
    %274 = tpu.dynamic_rotate %7 by %c127_i32 dim 1 : vector<8x128xf32>, i32 -> vector<8x128xf32>
    %c0_i32_125 = arith.constant 0 : i32
    %275 = vector.broadcast %c0_i32_125 : i32 to vector<1x128xi32>
    %276 = arith.addi %0, %275 : vector<1x128xi32>
    %c0_i32_126 = arith.constant 0 : i32
    %277 = vector.broadcast %c0_i32_126 : i32 to vector<1x128xi32>
    %278 = arith.cmpi sge, %276, %277 : vector<1x128xi32>
    %279 = arith.andi %5, %278 : vector<1x128xi1>
    %c0_i32_127 = arith.constant 0 : i32
    %280 = vector.broadcast %c0_i32_127 : i32 to vector<1x128xi32>
    %281 = arith.addi %0, %280 : vector<1x128xi32>
    %c4_i32_128 = arith.constant 4 : i32
    %282 = vector.broadcast %c4_i32_128 : i32 to vector<1x128xi32>
    %283 = arith.cmpi slt, %281, %282 : vector<1x128xi32>
    %284 = arith.andi %279, %283 : vector<1x128xi1>
    %c1_i32_129 = arith.constant 1 : i32
    %285 = vector.broadcast %c1_i32_129 : i32 to vector<1x128xi32>
    %286 = arith.addi %1, %285 : vector<1x128xi32>
    %c0_i32_130 = arith.constant 0 : i32
    %287 = vector.broadcast %c0_i32_130 : i32 to vector<1x128xi32>
    %288 = arith.cmpi sge, %286, %287 : vector<1x128xi32>
    %289 = arith.andi %284, %288 : vector<1x128xi1>
    %c1_i32_131 = arith.constant 1 : i32
    %290 = vector.broadcast %c1_i32_131 : i32 to vector<1x128xi32>
    %291 = arith.addi %1, %290 : vector<1x128xi32>
    %c4_i32_132 = arith.constant 4 : i32
    %292 = vector.broadcast %c4_i32_132 : i32 to vector<1x128xi32>
    %293 = arith.cmpi slt, %291, %292 : vector<1x128xi32>
    %294 = arith.andi %289, %293 : vector<1x128xi1>
    %cst_133 = arith.constant 0.000000e+00 : f32
    %295 = vector.shape_cast %294 : vector<1x128xi1> to vector<1x128xi1>
    %296 = vector.broadcast %295 : vector<1x128xi1> to vector<8x128xi1>
    %297 = vector.broadcast %cst_133 : f32 to vector<8x128xf32>
    %298 = arith.select %296, %274, %297 : vector<8x128xi1>, vector<8x128xf32>
    %c112 = arith.constant 112 : index
    %c0_134 = arith.constant 0 : index
    %299 = vector.load %arg9[%c112, %c0_134] : memref<288x128xf32, #tpu.memory_space<vmem>>, vector<8x128xf32>
    tpu.vector_store %arg9[%c112, %c0_134], %298 {strides = array<i32>} : memref<288x128xf32, #tpu.memory_space<vmem>>, vector<8x128xf32>,
    %c120 = arith.constant 120 : index
    %c0_135 = arith.constant 0 : index
    %300 = vector.load %arg9[%c120, %c0_135] : memref<288x128xf32, #tpu.memory_space<vmem>>, vector<8x128xf32>
    tpu.vector_store %arg9[%c120, %c0_135], %217 {strides = array<i32>} : memref<288x128xf32, #tpu.memory_space<vmem>>, vector<8x128xf32>,
    %c128 = arith.constant 128 : index
    %c0_136 = arith.constant 0 : index
    %301 = vector.load %arg9[%c128, %c0_136] : memref<288x128xf32, #tpu.memory_space<vmem>>, vector<8x128xf32>
    tpu.vector_store %arg9[%c128, %c0_136], %242 {strides = array<i32>} : memref<288x128xf32, #tpu.memory_space<vmem>>, vector<8x128xf32>,
    %c127_i32_137 = arith.constant 127 : i32
    %302 = tpu.dynamic_rotate %11 by %c127_i32_137 dim 1 : vector<8x128xf32>, i32 -> vector<8x128xf32>
    %c0_i32_138 = arith.constant 0 : i32
    %303 = vector.broadcast %c0_i32_138 : i32 to vector<1x128xi32>
    %304 = arith.addi %0, %303 : vector<1x128xi32>
    %c0_i32_139 = arith.constant 0 : i32
    %305 = vector.broadcast %c0_i32_139 : i32 to vector<1x128xi32>
    %306 = arith.cmpi sge, %304, %305 : vector<1x128xi32>
    %307 = arith.andi %5, %306 : vector<1x128xi1>
    %c0_i32_140 = arith.constant 0 : i32
    %308 = vector.broadcast %c0_i32_140 : i32 to vector<1x128xi32>
    %309 = arith.addi %0, %308 : vector<1x128xi32>
    %c4_i32_141 = arith.constant 4 : i32
    %310 = vector.broadcast %c4_i32_141 : i32 to vector<1x128xi32>
    %311 = arith.cmpi slt, %309, %310 : vector<1x128xi32>
    %312 = arith.andi %307, %311 : vector<1x128xi1>
    %c1_i32_142 = arith.constant 1 : i32
    %313 = vector.broadcast %c1_i32_142 : i32 to vector<1x128xi32>
    %314 = arith.addi %1, %313 : vector<1x128xi32>
    %c0_i32_143 = arith.constant 0 : i32
    %315 = vector.broadcast %c0_i32_143 : i32 to vector<1x128xi32>
    %316 = arith.cmpi sge, %314, %315 : vector<1x128xi32>
    %317 = arith.andi %312, %316 : vector<1x128xi1>
    %c1_i32_144 = arith.constant 1 : i32
    %318 = vector.broadcast %c1_i32_144 : i32 to vector<1x128xi32>
    %319 = arith.addi %1, %318 : vector<1x128xi32>
    %c4_i32_145 = arith.constant 4 : i32
    %320 = vector.broadcast %c4_i32_145 : i32 to vector<1x128xi32>
    %321 = arith.cmpi slt, %319, %320 : vector<1x128xi32>
    %322 = arith.andi %317, %321 : vector<1x128xi1>
    %cst_146 = arith.constant 0.000000e+00 : f32
    %323 = vector.shape_cast %322 : vector<1x128xi1> to vector<1x128xi1>
    %324 = vector.broadcast %323 : vector<1x128xi1> to vector<8x128xi1>
    %325 = vector.broadcast %cst_146 : f32 to vector<8x128xf32>
    %326 = arith.select %324, %302, %325 : vector<8x128xi1>, vector<8x128xf32>
    %c136 = arith.constant 136 : index
    %c0_147 = arith.constant 0 : index
    %327 = vector.load %arg9[%c136, %c0_147] : memref<288x128xf32, #tpu.memory_space<vmem>>, vector<8x128xf32>
    tpu.vector_store %arg9[%c136, %c0_147], %326 {strides = array<i32>} : memref<288x128xf32, #tpu.memory_space<vmem>>, vector<8x128xf32>,
    %c144 = arith.constant 144 : index
    %c0_148 = arith.constant 0 : index
    %328 = vector.load %arg9[%c144, %c0_148] : memref<288x128xf32, #tpu.memory_space<vmem>>, vector<8x128xf32>
    tpu.vector_store %arg9[%c144, %c0_148], %116 {strides = array<i32>} : memref<288x128xf32, #tpu.memory_space<vmem>>, vector<8x128xf32>,
    %c152 = arith.constant 152 : index
    %c0_149 = arith.constant 0 : index
    %329 = vector.load %arg9[%c152, %c0_149] : memref<288x128xf32, #tpu.memory_space<vmem>>, vector<8x128xf32>
    tpu.vector_store %arg9[%c152, %c0_149], %141 {strides = array<i32>} : memref<288x128xf32, #tpu.memory_space<vmem>>, vector<8x128xf32>,
    %c160 = arith.constant 160 : index
    %c0_150 = arith.constant 0 : index
    %330 = vector.load %arg9[%c160, %c0_150] : memref<288x128xf32, #tpu.memory_space<vmem>>, vector<8x128xf32>
    tpu.vector_store %arg9[%c160, %c0_150], %166 {strides = array<i32>} : memref<288x128xf32, #tpu.memory_space<vmem>>, vector<8x128xf32>,
    %c168 = arith.constant 168 : index
    %c0_151 = arith.constant 0 : index
    %331 = vector.load %arg9[%c168, %c0_151] : memref<288x128xf32, #tpu.memory_space<vmem>>, vector<8x128xf32>
    tpu.vector_store %arg9[%c168, %c0_151], %192 {strides = array<i32>} : memref<288x128xf32, #tpu.memory_space<vmem>>, vector<8x128xf32>,
    %c176 = arith.constant 176 : index
    %c0_152 = arith.constant 0 : index
    %332 = vector.load %arg9[%c176, %c0_152] : memref<288x128xf32, #tpu.memory_space<vmem>>, vector<8x128xf32>
    tpu.vector_store %arg9[%c176, %c0_152], %217 {strides = array<i32>} : memref<288x128xf32, #tpu.memory_space<vmem>>, vector<8x128xf32>,
    %c184 = arith.constant 184 : index
    %c0_153 = arith.constant 0 : index
    %333 = vector.load %arg9[%c184, %c0_153] : memref<288x128xf32, #tpu.memory_space<vmem>>, vector<8x128xf32>
    tpu.vector_store %arg9[%c184, %c0_153], %242 {strides = array<i32>} : memref<288x128xf32, #tpu.memory_space<vmem>>, vector<8x128xf32>,
    %c125_i32 = arith.constant 125 : i32
    %334 = tpu.dynamic_rotate %9 by %c125_i32 dim 1 : vector<8x128xf32>, i32 -> vector<8x128xf32>
    %c1_i32_154 = arith.constant 1 : i32
    %335 = vector.broadcast %c1_i32_154 : i32 to vector<1x128xi32>
    %336 = arith.addi %0, %335 : vector<1x128xi32>
    %c0_i32_155 = arith.constant 0 : i32
    %337 = vector.broadcast %c0_i32_155 : i32 to vector<1x128xi32>
    %338 = arith.cmpi sge, %336, %337 : vector<1x128xi32>
    %339 = arith.andi %5, %338 : vector<1x128xi1>
    %c1_i32_156 = arith.constant 1 : i32
    %340 = vector.broadcast %c1_i32_156 : i32 to vector<1x128xi32>
    %341 = arith.addi %0, %340 : vector<1x128xi32>
    %c4_i32_157 = arith.constant 4 : i32
    %342 = vector.broadcast %c4_i32_157 : i32 to vector<1x128xi32>
    %343 = arith.cmpi slt, %341, %342 : vector<1x128xi32>
    %344 = arith.andi %339, %343 : vector<1x128xi1>
    %c-1_i32_158 = arith.constant -1 : i32
    %345 = vector.broadcast %c-1_i32_158 : i32 to vector<1x128xi32>
    %346 = arith.addi %1, %345 : vector<1x128xi32>
    %c0_i32_159 = arith.constant 0 : i32
    %347 = vector.broadcast %c0_i32_159 : i32 to vector<1x128xi32>
    %348 = arith.cmpi sge, %346, %347 : vector<1x128xi32>
    %349 = arith.andi %344, %348 : vector<1x128xi1>
    %c-1_i32_160 = arith.constant -1 : i32
    %350 = vector.broadcast %c-1_i32_160 : i32 to vector<1x128xi32>
    %351 = arith.addi %1, %350 : vector<1x128xi32>
    %c4_i32_161 = arith.constant 4 : i32
    %352 = vector.broadcast %c4_i32_161 : i32 to vector<1x128xi32>
    %353 = arith.cmpi slt, %351, %352 : vector<1x128xi32>
    %354 = arith.andi %349, %353 : vector<1x128xi1>
    %cst_162 = arith.constant 0.000000e+00 : f32
    %355 = vector.shape_cast %354 : vector<1x128xi1> to vector<1x128xi1>
    %356 = vector.broadcast %355 : vector<1x128xi1> to vector<8x128xi1>
    %357 = vector.broadcast %cst_162 : f32 to vector<8x128xf32>
    %358 = arith.select %356, %334, %357 : vector<8x128xi1>, vector<8x128xf32>
    %c192 = arith.constant 192 : index
    %c0_163 = arith.constant 0 : index
    %359 = vector.load %arg9[%c192, %c0_163] : memref<288x128xf32, #tpu.memory_space<vmem>>, vector<8x128xf32>
    tpu.vector_store %arg9[%c192, %c0_163], %358 {strides = array<i32>} : memref<288x128xf32, #tpu.memory_space<vmem>>, vector<8x128xf32>,
    %c124_i32 = arith.constant 124 : i32
    %360 = tpu.dynamic_rotate %7 by %c124_i32 dim 1 : vector<8x128xf32>, i32 -> vector<8x128xf32>
    %c1_i32_164 = arith.constant 1 : i32
    %361 = vector.broadcast %c1_i32_164 : i32 to vector<1x128xi32>
    %362 = arith.addi %0, %361 : vector<1x128xi32>
    %c0_i32_165 = arith.constant 0 : i32
    %363 = vector.broadcast %c0_i32_165 : i32 to vector<1x128xi32>
    %364 = arith.cmpi sge, %362, %363 : vector<1x128xi32>
    %365 = arith.andi %5, %364 : vector<1x128xi1>
    %c1_i32_166 = arith.constant 1 : i32
    %366 = vector.broadcast %c1_i32_166 : i32 to vector<1x128xi32>
    %367 = arith.addi %0, %366 : vector<1x128xi32>
    %c4_i32_167 = arith.constant 4 : i32
    %368 = vector.broadcast %c4_i32_167 : i32 to vector<1x128xi32>
    %369 = arith.cmpi slt, %367, %368 : vector<1x128xi32>
    %370 = arith.andi %365, %369 : vector<1x128xi1>
    %c0_i32_168 = arith.constant 0 : i32
    %371 = vector.broadcast %c0_i32_168 : i32 to vector<1x128xi32>
    %372 = arith.addi %1, %371 : vector<1x128xi32>
    %c0_i32_169 = arith.constant 0 : i32
    %373 = vector.broadcast %c0_i32_169 : i32 to vector<1x128xi32>
    %374 = arith.cmpi sge, %372, %373 : vector<1x128xi32>
    %375 = arith.andi %370, %374 : vector<1x128xi1>
    %c0_i32_170 = arith.constant 0 : i32
    %376 = vector.broadcast %c0_i32_170 : i32 to vector<1x128xi32>
    %377 = arith.addi %1, %376 : vector<1x128xi32>
    %c4_i32_171 = arith.constant 4 : i32
    %378 = vector.broadcast %c4_i32_171 : i32 to vector<1x128xi32>
    %379 = arith.cmpi slt, %377, %378 : vector<1x128xi32>
    %380 = arith.andi %375, %379 : vector<1x128xi1>
    %cst_172 = arith.constant 0.000000e+00 : f32
    %381 = vector.shape_cast %380 : vector<1x128xi1> to vector<1x128xi1>
    %382 = vector.broadcast %381 : vector<1x128xi1> to vector<8x128xi1>
    %383 = vector.broadcast %cst_172 : f32 to vector<8x128xf32>
    %384 = arith.select %382, %360, %383 : vector<8x128xi1>, vector<8x128xf32>
    %c200 = arith.constant 200 : index
    %c0_173 = arith.constant 0 : index
    %385 = vector.load %arg9[%c200, %c0_173] : memref<288x128xf32, #tpu.memory_space<vmem>>, vector<8x128xf32>
    tpu.vector_store %arg9[%c200, %c0_173], %384 {strides = array<i32>} : memref<288x128xf32, #tpu.memory_space<vmem>>, vector<8x128xf32>,
    %c124_i32_174 = arith.constant 124 : i32
    %386 = tpu.dynamic_rotate %9 by %c124_i32_174 dim 1 : vector<8x128xf32>, i32 -> vector<8x128xf32>
    %c1_i32_175 = arith.constant 1 : i32
    %387 = vector.broadcast %c1_i32_175 : i32 to vector<1x128xi32>
    %388 = arith.addi %0, %387 : vector<1x128xi32>
    %c0_i32_176 = arith.constant 0 : i32
    %389 = vector.broadcast %c0_i32_176 : i32 to vector<1x128xi32>
    %390 = arith.cmpi sge, %388, %389 : vector<1x128xi32>
    %391 = arith.andi %5, %390 : vector<1x128xi1>
    %c1_i32_177 = arith.constant 1 : i32
    %392 = vector.broadcast %c1_i32_177 : i32 to vector<1x128xi32>
    %393 = arith.addi %0, %392 : vector<1x128xi32>
    %c4_i32_178 = arith.constant 4 : i32
    %394 = vector.broadcast %c4_i32_178 : i32 to vector<1x128xi32>
    %395 = arith.cmpi slt, %393, %394 : vector<1x128xi32>
    %396 = arith.andi %391, %395 : vector<1x128xi1>
    %c0_i32_179 = arith.constant 0 : i32
    %397 = vector.broadcast %c0_i32_179 : i32 to vector<1x128xi32>
    %398 = arith.addi %1, %397 : vector<1x128xi32>
    %c0_i32_180 = arith.constant 0 : i32
    %399 = vector.broadcast %c0_i32_180 : i32 to vector<1x128xi32>
    %400 = arith.cmpi sge, %398, %399 : vector<1x128xi32>
    %401 = arith.andi %396, %400 : vector<1x128xi1>
    %c0_i32_181 = arith.constant 0 : i32
    %402 = vector.broadcast %c0_i32_181 : i32 to vector<1x128xi32>
    %403 = arith.addi %1, %402 : vector<1x128xi32>
    %c4_i32_182 = arith.constant 4 : i32
    %404 = vector.broadcast %c4_i32_182 : i32 to vector<1x128xi32>
    %405 = arith.cmpi slt, %403, %404 : vector<1x128xi32>
    %406 = arith.andi %401, %405 : vector<1x128xi1>
    %cst_183 = arith.constant 0.000000e+00 : f32
    %407 = vector.shape_cast %406 : vector<1x128xi1> to vector<1x128xi1>
    %408 = vector.broadcast %407 : vector<1x128xi1> to vector<8x128xi1>
    %409 = vector.broadcast %cst_183 : f32 to vector<8x128xf32>
    %410 = arith.select %408, %386, %409 : vector<8x128xi1>, vector<8x128xf32>
    %c208 = arith.constant 208 : index
    %c0_184 = arith.constant 0 : index
    %411 = vector.load %arg9[%c208, %c0_184] : memref<288x128xf32, #tpu.memory_space<vmem>>, vector<8x128xf32>
    tpu.vector_store %arg9[%c208, %c0_184], %410 {strides = array<i32>} : memref<288x128xf32, #tpu.memory_space<vmem>>, vector<8x128xf32>,
    %c216 = arith.constant 216 : index
    %c0_185 = arith.constant 0 : index
    %412 = vector.load %arg9[%c216, %c0_185] : memref<288x128xf32, #tpu.memory_space<vmem>>, vector<8x128xf32>
    tpu.vector_store %arg9[%c216, %c0_185], %141 {strides = array<i32>} : memref<288x128xf32, #tpu.memory_space<vmem>>, vector<8x128xf32>,
    %c224 = arith.constant 224 : index
    %c0_186 = arith.constant 0 : index
    %413 = vector.load %arg9[%c224, %c0_186] : memref<288x128xf32, #tpu.memory_space<vmem>>, vector<8x128xf32>
    tpu.vector_store %arg9[%c224, %c0_186], %166 {strides = array<i32>} : memref<288x128xf32, #tpu.memory_space<vmem>>, vector<8x128xf32>,
    %c232 = arith.constant 232 : index
    %c0_187 = arith.constant 0 : index
    %414 = vector.load %arg9[%c232, %c0_187] : memref<288x128xf32, #tpu.memory_space<vmem>>, vector<8x128xf32>
    tpu.vector_store %arg9[%c232, %c0_187], %298 {strides = array<i32>} : memref<288x128xf32, #tpu.memory_space<vmem>>, vector<8x128xf32>,
    %c240 = arith.constant 240 : index
    %c0_188 = arith.constant 0 : index
    %415 = vector.load %arg9[%c240, %c0_188] : memref<288x128xf32, #tpu.memory_space<vmem>>, vector<8x128xf32>
    tpu.vector_store %arg9[%c240, %c0_188], %217 {strides = array<i32>} : memref<288x128xf32, #tpu.memory_space<vmem>>, vector<8x128xf32>,
    %c248 = arith.constant 248 : index
    %c0_189 = arith.constant 0 : index
    %416 = vector.load %arg9[%c248, %c0_189] : memref<288x128xf32, #tpu.memory_space<vmem>>, vector<8x128xf32>
    tpu.vector_store %arg9[%c248, %c0_189], %242 {strides = array<i32>} : memref<288x128xf32, #tpu.memory_space<vmem>>, vector<8x128xf32>,
    %c256 = arith.constant 256 : index
    %c0_190 = arith.constant 0 : index
    %417 = vector.load %arg9[%c256, %c0_190] : memref<288x128xf32, #tpu.memory_space<vmem>>, vector<8x128xf32>
    tpu.vector_store %arg9[%c256, %c0_190], %326 {strides = array<i32>} : memref<288x128xf32, #tpu.memory_space<vmem>>, vector<8x128xf32>,
    %c264 = arith.constant 264 : index
    %c0_191 = arith.constant 0 : index
    %418 = vector.load %arg9[%c264, %c0_191] : memref<288x128xf32, #tpu.memory_space<vmem>>, vector<8x128xf32>
    tpu.vector_store %arg9[%c264, %c0_191], %384 {strides = array<i32>} : memref<288x128xf32, #tpu.memory_space<vmem>>, vector<8x128xf32>,
    %c272 = arith.constant 272 : index
    %c0_192 = arith.constant 0 : index
    %419 = vector.load %arg9[%c272, %c0_192] : memref<288x128xf32, #tpu.memory_space<vmem>>, vector<8x128xf32>
    tpu.vector_store %arg9[%c272, %c0_192], %410 {strides = array<i32>} : memref<288x128xf32, #tpu.memory_space<vmem>>, vector<8x128xf32>,
    %c123_i32 = arith.constant 123 : i32
    %420 = tpu.dynamic_rotate %7 by %c123_i32 dim 1 : vector<8x128xf32>, i32 -> vector<8x128xf32>
    %c1_i32_193 = arith.constant 1 : i32
    %421 = vector.broadcast %c1_i32_193 : i32 to vector<1x128xi32>
    %422 = arith.addi %0, %421 : vector<1x128xi32>
    %c0_i32_194 = arith.constant 0 : i32
    %423 = vector.broadcast %c0_i32_194 : i32 to vector<1x128xi32>
    %424 = arith.cmpi sge, %422, %423 : vector<1x128xi32>
    %425 = arith.andi %5, %424 : vector<1x128xi1>
    %c1_i32_195 = arith.constant 1 : i32
    %426 = vector.broadcast %c1_i32_195 : i32 to vector<1x128xi32>
    %427 = arith.addi %0, %426 : vector<1x128xi32>
    %c4_i32_196 = arith.constant 4 : i32
    %428 = vector.broadcast %c4_i32_196 : i32 to vector<1x128xi32>
    %429 = arith.cmpi slt, %427, %428 : vector<1x128xi32>
    %430 = arith.andi %425, %429 : vector<1x128xi1>
    %c1_i32_197 = arith.constant 1 : i32
    %431 = vector.broadcast %c1_i32_197 : i32 to vector<1x128xi32>
    %432 = arith.addi %1, %431 : vector<1x128xi32>
    %c0_i32_198 = arith.constant 0 : i32
    %433 = vector.broadcast %c0_i32_198 : i32 to vector<1x128xi32>
    %434 = arith.cmpi sge, %432, %433 : vector<1x128xi32>
    %435 = arith.andi %430, %434 : vector<1x128xi1>
    %c1_i32_199 = arith.constant 1 : i32
    %436 = vector.broadcast %c1_i32_199 : i32 to vector<1x128xi32>
    %437 = arith.addi %1, %436 : vector<1x128xi32>
    %c4_i32_200 = arith.constant 4 : i32
    %438 = vector.broadcast %c4_i32_200 : i32 to vector<1x128xi32>
    %439 = arith.cmpi slt, %437, %438 : vector<1x128xi32>
    %440 = arith.andi %435, %439 : vector<1x128xi1>
    %cst_201 = arith.constant 0.000000e+00 : f32
    %441 = vector.shape_cast %440 : vector<1x128xi1> to vector<1x128xi1>
    %442 = vector.broadcast %441 : vector<1x128xi1> to vector<8x128xi1>
    %443 = vector.broadcast %cst_201 : f32 to vector<8x128xf32>
    %444 = arith.select %442, %420, %443 : vector<8x128xi1>, vector<8x128xf32>
    %c280 = arith.constant 280 : index
    %c0_202 = arith.constant 0 : index
    %445 = vector.load %arg9[%c280, %c0_202] : memref<288x128xf32, #tpu.memory_space<vmem>>, vector<8x128xf32>
    tpu.vector_store %arg9[%c280, %c0_202], %444 {strides = array<i32>} : memref<288x128xf32, #tpu.memory_space<vmem>>, vector<8x128xf32>,
    %c0_203 = arith.constant 0 : index
    %c0_204 = arith.constant 0 : index
    %446 = vector.load %arg3[%c0_203, %c0_204] : memref<16x72xbf16, #tpu.memory_space<vmem>>, vector<16x72xbf16>
    %c0_205 = arith.constant 0 : index
    %c0_206 = arith.constant 0 : index
    %447 = vector.load %arg4[%c0_205, %c0_206] : memref<16x1xf32, #tpu.memory_space<vmem>>, vector<16x1xf32>
    %c0_207 = arith.constant 0 : index
    %c0_208 = arith.constant 0 : index
    %448 = vector.load %arg9[%c0_207, %c0_208] : memref<288x128xf32, #tpu.memory_space<vmem>>, vector<72x128xf32>
    %449 = arith.truncf %448 : vector<72x128xf32> to vector<72x128xbf16>
    %cst_209 = arith.constant dense<0.000000e+00> : vector<16x128xf32>
    %450 = tpu.matmul %446, %449, %cst_209 {dimension_numbers = #tpu.dot_dimension_numbers<[1], [0], [0], [1], [0, 0, 1, 1], [], []>} : vector<16x72xbf16>, vector<72x128xbf16>, vector<16x128xf32> -> vector<16x128xf32>
    %451 = vector.broadcast %447 : vector<16x1xf32> to vector<16x128xf32>
    %452 = arith.addf %450, %451 : vector<16x128xf32>
    %cst_210 = arith.constant 0.000000e+00 : f32
    %453 = vector.broadcast %cst_210 : f32 to vector<16x128xf32>
    %454 = arith.maximumf %452, %453 : vector<16x128xf32>
    %c72_211 = arith.constant 72 : index
    %c0_212 = arith.constant 0 : index
    %455 = vector.load %arg9[%c72_211, %c0_212] : memref<288x128xf32, #tpu.memory_space<vmem>>, vector<72x128xf32>
    %456 = arith.truncf %455 : vector<72x128xf32> to vector<72x128xbf16>
    %cst_213 = arith.constant dense<0.000000e+00> : vector<16x128xf32>
    %457 = tpu.matmul %446, %456, %cst_213 {dimension_numbers = #tpu.dot_dimension_numbers<[1], [0], [0], [1], [0, 0, 1, 1], [], []>} : vector<16x72xbf16>, vector<72x128xbf16>, vector<16x128xf32> -> vector<16x128xf32>
    %458 = vector.broadcast %447 : vector<16x1xf32> to vector<16x128xf32>
    %459 = arith.addf %457, %458 : vector<16x128xf32>
    %cst_214 = arith.constant 0.000000e+00 : f32
    %460 = vector.broadcast %cst_214 : f32 to vector<16x128xf32>
    %461 = arith.maximumf %459, %460 : vector<16x128xf32>
    %c144_215 = arith.constant 144 : index
    %c0_216 = arith.constant 0 : index
    %462 = vector.load %arg9[%c144_215, %c0_216] : memref<288x128xf32, #tpu.memory_space<vmem>>, vector<72x128xf32>
    %463 = arith.truncf %462 : vector<72x128xf32> to vector<72x128xbf16>
    %cst_217 = arith.constant dense<0.000000e+00> : vector<16x128xf32>
    %464 = tpu.matmul %446, %463, %cst_217 {dimension_numbers = #tpu.dot_dimension_numbers<[1], [0], [0], [1], [0, 0, 1, 1], [], []>} : vector<16x72xbf16>, vector<72x128xbf16>, vector<16x128xf32> -> vector<16x128xf32>
    %465 = vector.broadcast %447 : vector<16x1xf32> to vector<16x128xf32>
    %466 = arith.addf %464, %465 : vector<16x128xf32>
    %cst_218 = arith.constant 0.000000e+00 : f32
    %467 = vector.broadcast %cst_218 : f32 to vector<16x128xf32>
    %468 = arith.maximumf %466, %467 : vector<16x128xf32>
    %c216_219 = arith.constant 216 : index
    %c0_220 = arith.constant 0 : index
    %469 = vector.load %arg9[%c216_219, %c0_220] : memref<288x128xf32, #tpu.memory_space<vmem>>, vector<72x128xf32>
    %470 = arith.truncf %469 : vector<72x128xf32> to vector<72x128xbf16>
    %cst_221 = arith.constant dense<0.000000e+00> : vector<16x128xf32>
    %471 = tpu.matmul %446, %470, %cst_221 {dimension_numbers = #tpu.dot_dimension_numbers<[1], [0], [0], [1], [0, 0, 1, 1], [], []>} : vector<16x72xbf16>, vector<72x128xbf16>, vector<16x128xf32> -> vector<16x128xf32>
    %472 = vector.broadcast %447 : vector<16x1xf32> to vector<16x128xf32>
    %473 = arith.addf %471, %472 : vector<16x128xf32>
    %cst_222 = arith.constant 0.000000e+00 : f32
    %474 = vector.broadcast %cst_222 : f32 to vector<16x128xf32>
    %475 = arith.maximumf %473, %474 : vector<16x128xf32>
    %c5_i32_223 = arith.constant 5 : i32
    %476 = tpu.dynamic_rotate %475 by %c5_i32_223 dim 1 : vector<16x128xf32>, i32 -> vector<16x128xf32>
    %c-1_i32_224 = arith.constant -1 : i32
    %477 = vector.broadcast %c-1_i32_224 : i32 to vector<1x128xi32>
    %478 = arith.addi %0, %477 : vector<1x128xi32>
    %c0_i32_225 = arith.constant 0 : i32
    %479 = vector.broadcast %c0_i32_225 : i32 to vector<1x128xi32>
    %480 = arith.cmpi sge, %478, %479 : vector<1x128xi32>
    %481 = arith.andi %5, %480 : vector<1x128xi1>
    %c-1_i32_226 = arith.constant -1 : i32
    %482 = vector.broadcast %c-1_i32_226 : i32 to vector<1x128xi32>
    %483 = arith.addi %0, %482 : vector<1x128xi32>
    %c4_i32_227 = arith.constant 4 : i32
    %484 = vector.broadcast %c4_i32_227 : i32 to vector<1x128xi32>
    %485 = arith.cmpi slt, %483, %484 : vector<1x128xi32>
    %486 = arith.andi %481, %485 : vector<1x128xi1>
    %c-1_i32_228 = arith.constant -1 : i32
    %487 = vector.broadcast %c-1_i32_228 : i32 to vector<1x128xi32>
    %488 = arith.addi %1, %487 : vector<1x128xi32>
    %c0_i32_229 = arith.constant 0 : i32
    %489 = vector.broadcast %c0_i32_229 : i32 to vector<1x128xi32>
    %490 = arith.cmpi sge, %488, %489 : vector<1x128xi32>
    %491 = arith.andi %486, %490 : vector<1x128xi1>
    %c-1_i32_230 = arith.constant -1 : i32
    %492 = vector.broadcast %c-1_i32_230 : i32 to vector<1x128xi32>
    %493 = arith.addi %1, %492 : vector<1x128xi32>
    %c4_i32_231 = arith.constant 4 : i32
    %494 = vector.broadcast %c4_i32_231 : i32 to vector<1x128xi32>
    %495 = arith.cmpi slt, %493, %494 : vector<1x128xi32>
    %496 = arith.andi %491, %495 : vector<1x128xi1>
    %cst_232 = arith.constant 0.000000e+00 : f32
    %497 = vector.shape_cast %496 : vector<1x128xi1> to vector<1x128xi1>
    %498 = vector.broadcast %497 : vector<1x128xi1> to vector<16x128xi1>
    %499 = vector.broadcast %cst_232 : f32 to vector<16x128xf32>
    %500 = arith.select %498, %476, %499 : vector<16x128xi1>, vector<16x128xf32>
    %c0_233 = arith.constant 0 : index
    %c0_234 = arith.constant 0 : index
    %501 = vector.load %arg10[%c0_233, %c0_234] : memref<576x128xf32, #tpu.memory_space<vmem>>, vector<16x128xf32>
    tpu.vector_store %arg10[%c0_233, %c0_234], %500 {strides = array<i32>} : memref<576x128xf32, #tpu.memory_space<vmem>>, vector<16x128xf32>,
    %c4_i32_235 = arith.constant 4 : i32
    %502 = tpu.dynamic_rotate %468 by %c4_i32_235 dim 1 : vector<16x128xf32>, i32 -> vector<16x128xf32>
    %c-1_i32_236 = arith.constant -1 : i32
    %503 = vector.broadcast %c-1_i32_236 : i32 to vector<1x128xi32>
    %504 = arith.addi %0, %503 : vector<1x128xi32>
    %c0_i32_237 = arith.constant 0 : i32
    %505 = vector.broadcast %c0_i32_237 : i32 to vector<1x128xi32>
    %506 = arith.cmpi sge, %504, %505 : vector<1x128xi32>
    %507 = arith.andi %5, %506 : vector<1x128xi1>
    %c-1_i32_238 = arith.constant -1 : i32
    %508 = vector.broadcast %c-1_i32_238 : i32 to vector<1x128xi32>
    %509 = arith.addi %0, %508 : vector<1x128xi32>
    %c4_i32_239 = arith.constant 4 : i32
    %510 = vector.broadcast %c4_i32_239 : i32 to vector<1x128xi32>
    %511 = arith.cmpi slt, %509, %510 : vector<1x128xi32>
    %512 = arith.andi %507, %511 : vector<1x128xi1>
    %c0_i32_240 = arith.constant 0 : i32
    %513 = vector.broadcast %c0_i32_240 : i32 to vector<1x128xi32>
    %514 = arith.addi %1, %513 : vector<1x128xi32>
    %c0_i32_241 = arith.constant 0 : i32
    %515 = vector.broadcast %c0_i32_241 : i32 to vector<1x128xi32>
    %516 = arith.cmpi sge, %514, %515 : vector<1x128xi32>
    %517 = arith.andi %512, %516 : vector<1x128xi1>
    %c0_i32_242 = arith.constant 0 : i32
    %518 = vector.broadcast %c0_i32_242 : i32 to vector<1x128xi32>
    %519 = arith.addi %1, %518 : vector<1x128xi32>
    %c4_i32_243 = arith.constant 4 : i32
    %520 = vector.broadcast %c4_i32_243 : i32 to vector<1x128xi32>
    %521 = arith.cmpi slt, %519, %520 : vector<1x128xi32>
    %522 = arith.andi %517, %521 : vector<1x128xi1>
    %cst_244 = arith.constant 0.000000e+00 : f32
    %523 = vector.shape_cast %522 : vector<1x128xi1> to vector<1x128xi1>
    %524 = vector.broadcast %523 : vector<1x128xi1> to vector<16x128xi1>
    %525 = vector.broadcast %cst_244 : f32 to vector<16x128xf32>
    %526 = arith.select %524, %502, %525 : vector<16x128xi1>, vector<16x128xf32>
    %c16_245 = arith.constant 16 : index
    %c0_246 = arith.constant 0 : index
    %527 = vector.load %arg10[%c16_245, %c0_246] : memref<576x128xf32, #tpu.memory_space<vmem>>, vector<16x128xf32>
    tpu.vector_store %arg10[%c16_245, %c0_246], %526 {strides = array<i32>} : memref<576x128xf32, #tpu.memory_space<vmem>>, vector<16x128xf32>,
    %c4_i32_247 = arith.constant 4 : i32
    %528 = tpu.dynamic_rotate %475 by %c4_i32_247 dim 1 : vector<16x128xf32>, i32 -> vector<16x128xf32>
    %c-1_i32_248 = arith.constant -1 : i32
    %529 = vector.broadcast %c-1_i32_248 : i32 to vector<1x128xi32>
    %530 = arith.addi %0, %529 : vector<1x128xi32>
    %c0_i32_249 = arith.constant 0 : i32
    %531 = vector.broadcast %c0_i32_249 : i32 to vector<1x128xi32>
    %532 = arith.cmpi sge, %530, %531 : vector<1x128xi32>
    %533 = arith.andi %5, %532 : vector<1x128xi1>
    %c-1_i32_250 = arith.constant -1 : i32
    %534 = vector.broadcast %c-1_i32_250 : i32 to vector<1x128xi32>
    %535 = arith.addi %0, %534 : vector<1x128xi32>
    %c4_i32_251 = arith.constant 4 : i32
    %536 = vector.broadcast %c4_i32_251 : i32 to vector<1x128xi32>
    %537 = arith.cmpi slt, %535, %536 : vector<1x128xi32>
    %538 = arith.andi %533, %537 : vector<1x128xi1>
    %c0_i32_252 = arith.constant 0 : i32
    %539 = vector.broadcast %c0_i32_252 : i32 to vector<1x128xi32>
    %540 = arith.addi %1, %539 : vector<1x128xi32>
    %c0_i32_253 = arith.constant 0 : i32
    %541 = vector.broadcast %c0_i32_253 : i32 to vector<1x128xi32>
    %542 = arith.cmpi sge, %540, %541 : vector<1x128xi32>
    %543 = arith.andi %538, %542 : vector<1x128xi1>
    %c0_i32_254 = arith.constant 0 : i32
    %544 = vector.broadcast %c0_i32_254 : i32 to vector<1x128xi32>
    %545 = arith.addi %1, %544 : vector<1x128xi32>
    %c4_i32_255 = arith.constant 4 : i32
    %546 = vector.broadcast %c4_i32_255 : i32 to vector<1x128xi32>
    %547 = arith.cmpi slt, %545, %546 : vector<1x128xi32>
    %548 = arith.andi %543, %547 : vector<1x128xi1>
    %cst_256 = arith.constant 0.000000e+00 : f32
    %549 = vector.shape_cast %548 : vector<1x128xi1> to vector<1x128xi1>
    %550 = vector.broadcast %549 : vector<1x128xi1> to vector<16x128xi1>
    %551 = vector.broadcast %cst_256 : f32 to vector<16x128xf32>
    %552 = arith.select %550, %528, %551 : vector<16x128xi1>, vector<16x128xf32>
    %c32_257 = arith.constant 32 : index
    %c0_258 = arith.constant 0 : index
    %553 = vector.load %arg10[%c32_257, %c0_258] : memref<576x128xf32, #tpu.memory_space<vmem>>, vector<16x128xf32>
    tpu.vector_store %arg10[%c32_257, %c0_258], %552 {strides = array<i32>} : memref<576x128xf32, #tpu.memory_space<vmem>>, vector<16x128xf32>,
    %c1_i32_259 = arith.constant 1 : i32
    %554 = tpu.dynamic_rotate %461 by %c1_i32_259 dim 1 : vector<16x128xf32>, i32 -> vector<16x128xf32>
    %c0_i32_260 = arith.constant 0 : i32
    %555 = vector.broadcast %c0_i32_260 : i32 to vector<1x128xi32>
    %556 = arith.addi %0, %555 : vector<1x128xi32>
    %c0_i32_261 = arith.constant 0 : i32
    %557 = vector.broadcast %c0_i32_261 : i32 to vector<1x128xi32>
    %558 = arith.cmpi sge, %556, %557 : vector<1x128xi32>
    %559 = arith.andi %5, %558 : vector<1x128xi1>
    %c0_i32_262 = arith.constant 0 : i32
    %560 = vector.broadcast %c0_i32_262 : i32 to vector<1x128xi32>
    %561 = arith.addi %0, %560 : vector<1x128xi32>
    %c4_i32_263 = arith.constant 4 : i32
    %562 = vector.broadcast %c4_i32_263 : i32 to vector<1x128xi32>
    %563 = arith.cmpi slt, %561, %562 : vector<1x128xi32>
    %564 = arith.andi %559, %563 : vector<1x128xi1>
    %c-1_i32_264 = arith.constant -1 : i32
    %565 = vector.broadcast %c-1_i32_264 : i32 to vector<1x128xi32>
    %566 = arith.addi %1, %565 : vector<1x128xi32>
    %c0_i32_265 = arith.constant 0 : i32
    %567 = vector.broadcast %c0_i32_265 : i32 to vector<1x128xi32>
    %568 = arith.cmpi sge, %566, %567 : vector<1x128xi32>
    %569 = arith.andi %564, %568 : vector<1x128xi1>
    %c-1_i32_266 = arith.constant -1 : i32
    %570 = vector.broadcast %c-1_i32_266 : i32 to vector<1x128xi32>
    %571 = arith.addi %1, %570 : vector<1x128xi32>
    %c4_i32_267 = arith.constant 4 : i32
    %572 = vector.broadcast %c4_i32_267 : i32 to vector<1x128xi32>
    %573 = arith.cmpi slt, %571, %572 : vector<1x128xi32>
    %574 = arith.andi %569, %573 : vector<1x128xi1>
    %cst_268 = arith.constant 0.000000e+00 : f32
    %575 = vector.shape_cast %574 : vector<1x128xi1> to vector<1x128xi1>
    %576 = vector.broadcast %575 : vector<1x128xi1> to vector<16x128xi1>
    %577 = vector.broadcast %cst_268 : f32 to vector<16x128xf32>
    %578 = arith.select %576, %554, %577 : vector<16x128xi1>, vector<16x128xf32>
    %c48_269 = arith.constant 48 : index
    %c0_270 = arith.constant 0 : index
    %579 = vector.load %arg10[%c48_269, %c0_270] : memref<576x128xf32, #tpu.memory_space<vmem>>, vector<16x128xf32>
    tpu.vector_store %arg10[%c48_269, %c0_270], %578 {strides = array<i32>} : memref<576x128xf32, #tpu.memory_space<vmem>>, vector<16x128xf32>,
    %c0_i32_271 = arith.constant 0 : i32
    %580 = vector.broadcast %c0_i32_271 : i32 to vector<1x128xi32>
    %581 = arith.addi %0, %580 : vector<1x128xi32>
    %c0_i32_272 = arith.constant 0 : i32
    %582 = vector.broadcast %c0_i32_272 : i32 to vector<1x128xi32>
    %583 = arith.cmpi sge, %581, %582 : vector<1x128xi32>
    %584 = arith.andi %5, %583 : vector<1x128xi1>
    %c0_i32_273 = arith.constant 0 : i32
    %585 = vector.broadcast %c0_i32_273 : i32 to vector<1x128xi32>
    %586 = arith.addi %0, %585 : vector<1x128xi32>
    %c4_i32_274 = arith.constant 4 : i32
    %587 = vector.broadcast %c4_i32_274 : i32 to vector<1x128xi32>
    %588 = arith.cmpi slt, %586, %587 : vector<1x128xi32>
    %589 = arith.andi %584, %588 : vector<1x128xi1>
    %c0_i32_275 = arith.constant 0 : i32
    %590 = vector.broadcast %c0_i32_275 : i32 to vector<1x128xi32>
    %591 = arith.addi %1, %590 : vector<1x128xi32>
    %c0_i32_276 = arith.constant 0 : i32
    %592 = vector.broadcast %c0_i32_276 : i32 to vector<1x128xi32>
    %593 = arith.cmpi sge, %591, %592 : vector<1x128xi32>
    %594 = arith.andi %589, %593 : vector<1x128xi1>
    %c0_i32_277 = arith.constant 0 : i32
    %595 = vector.broadcast %c0_i32_277 : i32 to vector<1x128xi32>
    %596 = arith.addi %1, %595 : vector<1x128xi32>
    %c4_i32_278 = arith.constant 4 : i32
    %597 = vector.broadcast %c4_i32_278 : i32 to vector<1x128xi32>
    %598 = arith.cmpi slt, %596, %597 : vector<1x128xi32>
    %599 = arith.andi %594, %598 : vector<1x128xi1>
    %cst_279 = arith.constant 0.000000e+00 : f32
    %600 = vector.shape_cast %599 : vector<1x128xi1> to vector<1x128xi1>
    %601 = vector.broadcast %600 : vector<1x128xi1> to vector<16x128xi1>
    %602 = vector.broadcast %cst_279 : f32 to vector<16x128xf32>
    %603 = arith.select %601, %454, %602 : vector<16x128xi1>, vector<16x128xf32>
    %c64_280 = arith.constant 64 : index
    %c0_281 = arith.constant 0 : index
    %604 = vector.load %arg10[%c64_280, %c0_281] : memref<576x128xf32, #tpu.memory_space<vmem>>, vector<16x128xf32>
    tpu.vector_store %arg10[%c64_280, %c0_281], %603 {strides = array<i32>} : memref<576x128xf32, #tpu.memory_space<vmem>>, vector<16x128xf32>,
    %c0_i32_282 = arith.constant 0 : i32
    %605 = vector.broadcast %c0_i32_282 : i32 to vector<1x128xi32>
    %606 = arith.addi %0, %605 : vector<1x128xi32>
    %c0_i32_283 = arith.constant 0 : i32
    %607 = vector.broadcast %c0_i32_283 : i32 to vector<1x128xi32>
    %608 = arith.cmpi sge, %606, %607 : vector<1x128xi32>
    %609 = arith.andi %5, %608 : vector<1x128xi1>
    %c0_i32_284 = arith.constant 0 : i32
    %610 = vector.broadcast %c0_i32_284 : i32 to vector<1x128xi32>
    %611 = arith.addi %0, %610 : vector<1x128xi32>
    %c4_i32_285 = arith.constant 4 : i32
    %612 = vector.broadcast %c4_i32_285 : i32 to vector<1x128xi32>
    %613 = arith.cmpi slt, %611, %612 : vector<1x128xi32>
    %614 = arith.andi %609, %613 : vector<1x128xi1>
    %c0_i32_286 = arith.constant 0 : i32
    %615 = vector.broadcast %c0_i32_286 : i32 to vector<1x128xi32>
    %616 = arith.addi %1, %615 : vector<1x128xi32>
    %c0_i32_287 = arith.constant 0 : i32
    %617 = vector.broadcast %c0_i32_287 : i32 to vector<1x128xi32>
    %618 = arith.cmpi sge, %616, %617 : vector<1x128xi32>
    %619 = arith.andi %614, %618 : vector<1x128xi1>
    %c0_i32_288 = arith.constant 0 : i32
    %620 = vector.broadcast %c0_i32_288 : i32 to vector<1x128xi32>
    %621 = arith.addi %1, %620 : vector<1x128xi32>
    %c4_i32_289 = arith.constant 4 : i32
    %622 = vector.broadcast %c4_i32_289 : i32 to vector<1x128xi32>
    %623 = arith.cmpi slt, %621, %622 : vector<1x128xi32>
    %624 = arith.andi %619, %623 : vector<1x128xi1>
    %cst_290 = arith.constant 0.000000e+00 : f32
    %625 = vector.shape_cast %624 : vector<1x128xi1> to vector<1x128xi1>
    %626 = vector.broadcast %625 : vector<1x128xi1> to vector<16x128xi1>
    %627 = vector.broadcast %cst_290 : f32 to vector<16x128xf32>
    %628 = arith.select %626, %461, %627 : vector<16x128xi1>, vector<16x128xf32>
    %c80_291 = arith.constant 80 : index
    %c0_292 = arith.constant 0 : index
    %629 = vector.load %arg10[%c80_291, %c0_292] : memref<576x128xf32, #tpu.memory_space<vmem>>, vector<16x128xf32>
    tpu.vector_store %arg10[%c80_291, %c0_292], %628 {strides = array<i32>} : memref<576x128xf32, #tpu.memory_space<vmem>>, vector<16x128xf32>,
    %c1_i32_293 = arith.constant 1 : i32
    %630 = tpu.dynamic_rotate %475 by %c1_i32_293 dim 1 : vector<16x128xf32>, i32 -> vector<16x128xf32>
    %c0_i32_294 = arith.constant 0 : i32
    %631 = vector.broadcast %c0_i32_294 : i32 to vector<1x128xi32>
    %632 = arith.addi %0, %631 : vector<1x128xi32>
    %c0_i32_295 = arith.constant 0 : i32
    %633 = vector.broadcast %c0_i32_295 : i32 to vector<1x128xi32>
    %634 = arith.cmpi sge, %632, %633 : vector<1x128xi32>
    %635 = arith.andi %5, %634 : vector<1x128xi1>
    %c0_i32_296 = arith.constant 0 : i32
    %636 = vector.broadcast %c0_i32_296 : i32 to vector<1x128xi32>
    %637 = arith.addi %0, %636 : vector<1x128xi32>
    %c4_i32_297 = arith.constant 4 : i32
    %638 = vector.broadcast %c4_i32_297 : i32 to vector<1x128xi32>
    %639 = arith.cmpi slt, %637, %638 : vector<1x128xi32>
    %640 = arith.andi %635, %639 : vector<1x128xi1>
    %c-1_i32_298 = arith.constant -1 : i32
    %641 = vector.broadcast %c-1_i32_298 : i32 to vector<1x128xi32>
    %642 = arith.addi %1, %641 : vector<1x128xi32>
    %c0_i32_299 = arith.constant 0 : i32
    %643 = vector.broadcast %c0_i32_299 : i32 to vector<1x128xi32>
    %644 = arith.cmpi sge, %642, %643 : vector<1x128xi32>
    %645 = arith.andi %640, %644 : vector<1x128xi1>
    %c-1_i32_300 = arith.constant -1 : i32
    %646 = vector.broadcast %c-1_i32_300 : i32 to vector<1x128xi32>
    %647 = arith.addi %1, %646 : vector<1x128xi32>
    %c4_i32_301 = arith.constant 4 : i32
    %648 = vector.broadcast %c4_i32_301 : i32 to vector<1x128xi32>
    %649 = arith.cmpi slt, %647, %648 : vector<1x128xi32>
    %650 = arith.andi %645, %649 : vector<1x128xi1>
    %cst_302 = arith.constant 0.000000e+00 : f32
    %651 = vector.shape_cast %650 : vector<1x128xi1> to vector<1x128xi1>
    %652 = vector.broadcast %651 : vector<1x128xi1> to vector<16x128xi1>
    %653 = vector.broadcast %cst_302 : f32 to vector<16x128xf32>
    %654 = arith.select %652, %630, %653 : vector<16x128xi1>, vector<16x128xf32>
    %c96_303 = arith.constant 96 : index
    %c0_304 = arith.constant 0 : index
    %655 = vector.load %arg10[%c96_303, %c0_304] : memref<576x128xf32, #tpu.memory_space<vmem>>, vector<16x128xf32>
    tpu.vector_store %arg10[%c96_303, %c0_304], %654 {strides = array<i32>} : memref<576x128xf32, #tpu.memory_space<vmem>>, vector<16x128xf32>,
    %c0_i32_305 = arith.constant 0 : i32
    %656 = vector.broadcast %c0_i32_305 : i32 to vector<1x128xi32>
    %657 = arith.addi %0, %656 : vector<1x128xi32>
    %c0_i32_306 = arith.constant 0 : i32
    %658 = vector.broadcast %c0_i32_306 : i32 to vector<1x128xi32>
    %659 = arith.cmpi sge, %657, %658 : vector<1x128xi32>
    %660 = arith.andi %5, %659 : vector<1x128xi1>
    %c0_i32_307 = arith.constant 0 : i32
    %661 = vector.broadcast %c0_i32_307 : i32 to vector<1x128xi32>
    %662 = arith.addi %0, %661 : vector<1x128xi32>
    %c4_i32_308 = arith.constant 4 : i32
    %663 = vector.broadcast %c4_i32_308 : i32 to vector<1x128xi32>
    %664 = arith.cmpi slt, %662, %663 : vector<1x128xi32>
    %665 = arith.andi %660, %664 : vector<1x128xi1>
    %c0_i32_309 = arith.constant 0 : i32
    %666 = vector.broadcast %c0_i32_309 : i32 to vector<1x128xi32>
    %667 = arith.addi %1, %666 : vector<1x128xi32>
    %c0_i32_310 = arith.constant 0 : i32
    %668 = vector.broadcast %c0_i32_310 : i32 to vector<1x128xi32>
    %669 = arith.cmpi sge, %667, %668 : vector<1x128xi32>
    %670 = arith.andi %665, %669 : vector<1x128xi1>
    %c0_i32_311 = arith.constant 0 : i32
    %671 = vector.broadcast %c0_i32_311 : i32 to vector<1x128xi32>
    %672 = arith.addi %1, %671 : vector<1x128xi32>
    %c4_i32_312 = arith.constant 4 : i32
    %673 = vector.broadcast %c4_i32_312 : i32 to vector<1x128xi32>
    %674 = arith.cmpi slt, %672, %673 : vector<1x128xi32>
    %675 = arith.andi %670, %674 : vector<1x128xi1>
    %cst_313 = arith.constant 0.000000e+00 : f32
    %676 = vector.shape_cast %675 : vector<1x128xi1> to vector<1x128xi1>
    %677 = vector.broadcast %676 : vector<1x128xi1> to vector<16x128xi1>
    %678 = vector.broadcast %cst_313 : f32 to vector<16x128xf32>
    %679 = arith.select %677, %468, %678 : vector<16x128xi1>, vector<16x128xf32>
    %c112_314 = arith.constant 112 : index
    %c0_315 = arith.constant 0 : index
    %680 = vector.load %arg10[%c112_314, %c0_315] : memref<576x128xf32, #tpu.memory_space<vmem>>, vector<16x128xf32>
    tpu.vector_store %arg10[%c112_314, %c0_315], %679 {strides = array<i32>} : memref<576x128xf32, #tpu.memory_space<vmem>>, vector<16x128xf32>,
    %c0_i32_316 = arith.constant 0 : i32
    %681 = vector.broadcast %c0_i32_316 : i32 to vector<1x128xi32>
    %682 = arith.addi %0, %681 : vector<1x128xi32>
    %c0_i32_317 = arith.constant 0 : i32
    %683 = vector.broadcast %c0_i32_317 : i32 to vector<1x128xi32>
    %684 = arith.cmpi sge, %682, %683 : vector<1x128xi32>
    %685 = arith.andi %5, %684 : vector<1x128xi1>
    %c0_i32_318 = arith.constant 0 : i32
    %686 = vector.broadcast %c0_i32_318 : i32 to vector<1x128xi32>
    %687 = arith.addi %0, %686 : vector<1x128xi32>
    %c4_i32_319 = arith.constant 4 : i32
    %688 = vector.broadcast %c4_i32_319 : i32 to vector<1x128xi32>
    %689 = arith.cmpi slt, %687, %688 : vector<1x128xi32>
    %690 = arith.andi %685, %689 : vector<1x128xi1>
    %c0_i32_320 = arith.constant 0 : i32
    %691 = vector.broadcast %c0_i32_320 : i32 to vector<1x128xi32>
    %692 = arith.addi %1, %691 : vector<1x128xi32>
    %c0_i32_321 = arith.constant 0 : i32
    %693 = vector.broadcast %c0_i32_321 : i32 to vector<1x128xi32>
    %694 = arith.cmpi sge, %692, %693 : vector<1x128xi32>
    %695 = arith.andi %690, %694 : vector<1x128xi1>
    %c0_i32_322 = arith.constant 0 : i32
    %696 = vector.broadcast %c0_i32_322 : i32 to vector<1x128xi32>
    %697 = arith.addi %1, %696 : vector<1x128xi32>
    %c4_i32_323 = arith.constant 4 : i32
    %698 = vector.broadcast %c4_i32_323 : i32 to vector<1x128xi32>
    %699 = arith.cmpi slt, %697, %698 : vector<1x128xi32>
    %700 = arith.andi %695, %699 : vector<1x128xi1>
    %cst_324 = arith.constant 0.000000e+00 : f32
    %701 = vector.shape_cast %700 : vector<1x128xi1> to vector<1x128xi1>
    %702 = vector.broadcast %701 : vector<1x128xi1> to vector<16x128xi1>
    %703 = vector.broadcast %cst_324 : f32 to vector<16x128xf32>
    %704 = arith.select %702, %475, %703 : vector<16x128xi1>, vector<16x128xf32>
    %c128_325 = arith.constant 128 : index
    %c0_326 = arith.constant 0 : index
    %705 = vector.load %arg10[%c128_325, %c0_326] : memref<576x128xf32, #tpu.memory_space<vmem>>, vector<16x128xf32>
    tpu.vector_store %arg10[%c128_325, %c0_326], %704 {strides = array<i32>} : memref<576x128xf32, #tpu.memory_space<vmem>>, vector<16x128xf32>,
    %c144_327 = arith.constant 144 : index
    %c0_328 = arith.constant 0 : index
    %706 = vector.load %arg10[%c144_327, %c0_328] : memref<576x128xf32, #tpu.memory_space<vmem>>, vector<16x128xf32>
    tpu.vector_store %arg10[%c144_327, %c0_328], %526 {strides = array<i32>} : memref<576x128xf32, #tpu.memory_space<vmem>>, vector<16x128xf32>,
    %c160_329 = arith.constant 160 : index
    %c0_330 = arith.constant 0 : index
    %707 = vector.load %arg10[%c160_329, %c0_330] : memref<576x128xf32, #tpu.memory_space<vmem>>, vector<16x128xf32>
    tpu.vector_store %arg10[%c160_329, %c0_330], %552 {strides = array<i32>} : memref<576x128xf32, #tpu.memory_space<vmem>>, vector<16x128xf32>,
    %c3_i32_331 = arith.constant 3 : i32
    %708 = tpu.dynamic_rotate %468 by %c3_i32_331 dim 1 : vector<16x128xf32>, i32 -> vector<16x128xf32>
    %c-1_i32_332 = arith.constant -1 : i32
    %709 = vector.broadcast %c-1_i32_332 : i32 to vector<1x128xi32>
    %710 = arith.addi %0, %709 : vector<1x128xi32>
    %c0_i32_333 = arith.constant 0 : i32
    %711 = vector.broadcast %c0_i32_333 : i32 to vector<1x128xi32>
    %712 = arith.cmpi sge, %710, %711 : vector<1x128xi32>
    %713 = arith.andi %5, %712 : vector<1x128xi1>
    %c-1_i32_334 = arith.constant -1 : i32
    %714 = vector.broadcast %c-1_i32_334 : i32 to vector<1x128xi32>
    %715 = arith.addi %0, %714 : vector<1x128xi32>
    %c4_i32_335 = arith.constant 4 : i32
    %716 = vector.broadcast %c4_i32_335 : i32 to vector<1x128xi32>
    %717 = arith.cmpi slt, %715, %716 : vector<1x128xi32>
    %718 = arith.andi %713, %717 : vector<1x128xi1>
    %c1_i32_336 = arith.constant 1 : i32
    %719 = vector.broadcast %c1_i32_336 : i32 to vector<1x128xi32>
    %720 = arith.addi %1, %719 : vector<1x128xi32>
    %c0_i32_337 = arith.constant 0 : i32
    %721 = vector.broadcast %c0_i32_337 : i32 to vector<1x128xi32>
    %722 = arith.cmpi sge, %720, %721 : vector<1x128xi32>
    %723 = arith.andi %718, %722 : vector<1x128xi1>
    %c1_i32_338 = arith.constant 1 : i32
    %724 = vector.broadcast %c1_i32_338 : i32 to vector<1x128xi32>
    %725 = arith.addi %1, %724 : vector<1x128xi32>
    %c4_i32_339 = arith.constant 4 : i32
    %726 = vector.broadcast %c4_i32_339 : i32 to vector<1x128xi32>
    %727 = arith.cmpi slt, %725, %726 : vector<1x128xi32>
    %728 = arith.andi %723, %727 : vector<1x128xi1>
    %cst_340 = arith.constant 0.000000e+00 : f32
    %729 = vector.shape_cast %728 : vector<1x128xi1> to vector<1x128xi1>
    %730 = vector.broadcast %729 : vector<1x128xi1> to vector<16x128xi1>
    %731 = vector.broadcast %cst_340 : f32 to vector<16x128xf32>
    %732 = arith.select %730, %708, %731 : vector<16x128xi1>, vector<16x128xf32>
    %c176_341 = arith.constant 176 : index
    %c0_342 = arith.constant 0 : index
    %733 = vector.load %arg10[%c176_341, %c0_342] : memref<576x128xf32, #tpu.memory_space<vmem>>, vector<16x128xf32>
    tpu.vector_store %arg10[%c176_341, %c0_342], %732 {strides = array<i32>} : memref<576x128xf32, #tpu.memory_space<vmem>>, vector<16x128xf32>,
    %c192_343 = arith.constant 192 : index
    %c0_344 = arith.constant 0 : index
    %734 = vector.load %arg10[%c192_343, %c0_344] : memref<576x128xf32, #tpu.memory_space<vmem>>, vector<16x128xf32>
    tpu.vector_store %arg10[%c192_343, %c0_344], %603 {strides = array<i32>} : memref<576x128xf32, #tpu.memory_space<vmem>>, vector<16x128xf32>,
    %c208_345 = arith.constant 208 : index
    %c0_346 = arith.constant 0 : index
    %735 = vector.load %arg10[%c208_345, %c0_346] : memref<576x128xf32, #tpu.memory_space<vmem>>, vector<16x128xf32>
    tpu.vector_store %arg10[%c208_345, %c0_346], %628 {strides = array<i32>} : memref<576x128xf32, #tpu.memory_space<vmem>>, vector<16x128xf32>,
    %c127_i32_347 = arith.constant 127 : i32
    %736 = tpu.dynamic_rotate %454 by %c127_i32_347 dim 1 : vector<16x128xf32>, i32 -> vector<16x128xf32>
    %c0_i32_348 = arith.constant 0 : i32
    %737 = vector.broadcast %c0_i32_348 : i32 to vector<1x128xi32>
    %738 = arith.addi %0, %737 : vector<1x128xi32>
    %c0_i32_349 = arith.constant 0 : i32
    %739 = vector.broadcast %c0_i32_349 : i32 to vector<1x128xi32>
    %740 = arith.cmpi sge, %738, %739 : vector<1x128xi32>
    %741 = arith.andi %5, %740 : vector<1x128xi1>
    %c0_i32_350 = arith.constant 0 : i32
    %742 = vector.broadcast %c0_i32_350 : i32 to vector<1x128xi32>
    %743 = arith.addi %0, %742 : vector<1x128xi32>
    %c4_i32_351 = arith.constant 4 : i32
    %744 = vector.broadcast %c4_i32_351 : i32 to vector<1x128xi32>
    %745 = arith.cmpi slt, %743, %744 : vector<1x128xi32>
    %746 = arith.andi %741, %745 : vector<1x128xi1>
    %c1_i32_352 = arith.constant 1 : i32
    %747 = vector.broadcast %c1_i32_352 : i32 to vector<1x128xi32>
    %748 = arith.addi %1, %747 : vector<1x128xi32>
    %c0_i32_353 = arith.constant 0 : i32
    %749 = vector.broadcast %c0_i32_353 : i32 to vector<1x128xi32>
    %750 = arith.cmpi sge, %748, %749 : vector<1x128xi32>
    %751 = arith.andi %746, %750 : vector<1x128xi1>
    %c1_i32_354 = arith.constant 1 : i32
    %752 = vector.broadcast %c1_i32_354 : i32 to vector<1x128xi32>
    %753 = arith.addi %1, %752 : vector<1x128xi32>
    %c4_i32_355 = arith.constant 4 : i32
    %754 = vector.broadcast %c4_i32_355 : i32 to vector<1x128xi32>
    %755 = arith.cmpi slt, %753, %754 : vector<1x128xi32>
    %756 = arith.andi %751, %755 : vector<1x128xi1>
    %cst_356 = arith.constant 0.000000e+00 : f32
    %757 = vector.shape_cast %756 : vector<1x128xi1> to vector<1x128xi1>
    %758 = vector.broadcast %757 : vector<1x128xi1> to vector<16x128xi1>
    %759 = vector.broadcast %cst_356 : f32 to vector<16x128xf32>
    %760 = arith.select %758, %736, %759 : vector<16x128xi1>, vector<16x128xf32>
    %c224_357 = arith.constant 224 : index
    %c0_358 = arith.constant 0 : index
    %761 = vector.load %arg10[%c224_357, %c0_358] : memref<576x128xf32, #tpu.memory_space<vmem>>, vector<16x128xf32>
    tpu.vector_store %arg10[%c224_357, %c0_358], %760 {strides = array<i32>} : memref<576x128xf32, #tpu.memory_space<vmem>>, vector<16x128xf32>,
    %c240_359 = arith.constant 240 : index
    %c0_360 = arith.constant 0 : index
    %762 = vector.load %arg10[%c240_359, %c0_360] : memref<576x128xf32, #tpu.memory_space<vmem>>, vector<16x128xf32>
    tpu.vector_store %arg10[%c240_359, %c0_360], %679 {strides = array<i32>} : memref<576x128xf32, #tpu.memory_space<vmem>>, vector<16x128xf32>,
    %c256_361 = arith.constant 256 : index
    %c0_362 = arith.constant 0 : index
    %763 = vector.load %arg10[%c256_361, %c0_362] : memref<576x128xf32, #tpu.memory_space<vmem>>, vector<16x128xf32>
    tpu.vector_store %arg10[%c256_361, %c0_362], %704 {strides = array<i32>} : memref<576x128xf32, #tpu.memory_space<vmem>>, vector<16x128xf32>,
    %c127_i32_363 = arith.constant 127 : i32
    %764 = tpu.dynamic_rotate %468 by %c127_i32_363 dim 1 : vector<16x128xf32>, i32 -> vector<16x128xf32>
    %c0_i32_364 = arith.constant 0 : i32
    %765 = vector.broadcast %c0_i32_364 : i32 to vector<1x128xi32>
    %766 = arith.addi %0, %765 : vector<1x128xi32>
    %c0_i32_365 = arith.constant 0 : i32
    %767 = vector.broadcast %c0_i32_365 : i32 to vector<1x128xi32>
    %768 = arith.cmpi sge, %766, %767 : vector<1x128xi32>
    %769 = arith.andi %5, %768 : vector<1x128xi1>
    %c0_i32_366 = arith.constant 0 : i32
    %770 = vector.broadcast %c0_i32_366 : i32 to vector<1x128xi32>
    %771 = arith.addi %0, %770 : vector<1x128xi32>
    %c4_i32_367 = arith.constant 4 : i32
    %772 = vector.broadcast %c4_i32_367 : i32 to vector<1x128xi32>
    %773 = arith.cmpi slt, %771, %772 : vector<1x128xi32>
    %774 = arith.andi %769, %773 : vector<1x128xi1>
    %c1_i32_368 = arith.constant 1 : i32
    %775 = vector.broadcast %c1_i32_368 : i32 to vector<1x128xi32>
    %776 = arith.addi %1, %775 : vector<1x128xi32>
    %c0_i32_369 = arith.constant 0 : i32
    %777 = vector.broadcast %c0_i32_369 : i32 to vector<1x128xi32>
    %778 = arith.cmpi sge, %776, %777 : vector<1x128xi32>
    %779 = arith.andi %774, %778 : vector<1x128xi1>
    %c1_i32_370 = arith.constant 1 : i32
    %780 = vector.broadcast %c1_i32_370 : i32 to vector<1x128xi32>
    %781 = arith.addi %1, %780 : vector<1x128xi32>
    %c4_i32_371 = arith.constant 4 : i32
    %782 = vector.broadcast %c4_i32_371 : i32 to vector<1x128xi32>
    %783 = arith.cmpi slt, %781, %782 : vector<1x128xi32>
    %784 = arith.andi %779, %783 : vector<1x128xi1>
    %cst_372 = arith.constant 0.000000e+00 : f32
    %785 = vector.shape_cast %784 : vector<1x128xi1> to vector<1x128xi1>
    %786 = vector.broadcast %785 : vector<1x128xi1> to vector<16x128xi1>
    %787 = vector.broadcast %cst_372 : f32 to vector<16x128xf32>
    %788 = arith.select %786, %764, %787 : vector<16x128xi1>, vector<16x128xf32>
    %c272_373 = arith.constant 272 : index
    %c0_374 = arith.constant 0 : index
    %789 = vector.load %arg10[%c272_373, %c0_374] : memref<576x128xf32, #tpu.memory_space<vmem>>, vector<16x128xf32>
    tpu.vector_store %arg10[%c272_373, %c0_374], %788 {strides = array<i32>} : memref<576x128xf32, #tpu.memory_space<vmem>>, vector<16x128xf32>,
    %c288 = arith.constant 288 : index
    %c0_375 = arith.constant 0 : index
    %790 = vector.load %arg10[%c288, %c0_375] : memref<576x128xf32, #tpu.memory_space<vmem>>, vector<16x128xf32>
    tpu.vector_store %arg10[%c288, %c0_375], %578 {strides = array<i32>} : memref<576x128xf32, #tpu.memory_space<vmem>>, vector<16x128xf32>,
    %c304 = arith.constant 304 : index
    %c0_376 = arith.constant 0 : index
    %791 = vector.load %arg10[%c304, %c0_376] : memref<576x128xf32, #tpu.memory_space<vmem>>, vector<16x128xf32>
    tpu.vector_store %arg10[%c304, %c0_376], %603 {strides = array<i32>} : memref<576x128xf32, #tpu.memory_space<vmem>>, vector<16x128xf32>,
    %c320 = arith.constant 320 : index
    %c0_377 = arith.constant 0 : index
    %792 = vector.load %arg10[%c320, %c0_377] : memref<576x128xf32, #tpu.memory_space<vmem>>, vector<16x128xf32>
    tpu.vector_store %arg10[%c320, %c0_377], %628 {strides = array<i32>} : memref<576x128xf32, #tpu.memory_space<vmem>>, vector<16x128xf32>,
    %c336 = arith.constant 336 : index
    %c0_378 = arith.constant 0 : index
    %793 = vector.load %arg10[%c336, %c0_378] : memref<576x128xf32, #tpu.memory_space<vmem>>, vector<16x128xf32>
    tpu.vector_store %arg10[%c336, %c0_378], %654 {strides = array<i32>} : memref<576x128xf32, #tpu.memory_space<vmem>>, vector<16x128xf32>,
    %c352 = arith.constant 352 : index
    %c0_379 = arith.constant 0 : index
    %794 = vector.load %arg10[%c352, %c0_379] : memref<576x128xf32, #tpu.memory_space<vmem>>, vector<16x128xf32>
    tpu.vector_store %arg10[%c352, %c0_379], %679 {strides = array<i32>} : memref<576x128xf32, #tpu.memory_space<vmem>>, vector<16x128xf32>,
    %c368 = arith.constant 368 : index
    %c0_380 = arith.constant 0 : index
    %795 = vector.load %arg10[%c368, %c0_380] : memref<576x128xf32, #tpu.memory_space<vmem>>, vector<16x128xf32>
    tpu.vector_store %arg10[%c368, %c0_380], %704 {strides = array<i32>} : memref<576x128xf32, #tpu.memory_space<vmem>>, vector<16x128xf32>,
    %c125_i32_381 = arith.constant 125 : i32
    %796 = tpu.dynamic_rotate %461 by %c125_i32_381 dim 1 : vector<16x128xf32>, i32 -> vector<16x128xf32>
    %c1_i32_382 = arith.constant 1 : i32
    %797 = vector.broadcast %c1_i32_382 : i32 to vector<1x128xi32>
    %798 = arith.addi %0, %797 : vector<1x128xi32>
    %c0_i32_383 = arith.constant 0 : i32
    %799 = vector.broadcast %c0_i32_383 : i32 to vector<1x128xi32>
    %800 = arith.cmpi sge, %798, %799 : vector<1x128xi32>
    %801 = arith.andi %5, %800 : vector<1x128xi1>
    %c1_i32_384 = arith.constant 1 : i32
    %802 = vector.broadcast %c1_i32_384 : i32 to vector<1x128xi32>
    %803 = arith.addi %0, %802 : vector<1x128xi32>
    %c4_i32_385 = arith.constant 4 : i32
    %804 = vector.broadcast %c4_i32_385 : i32 to vector<1x128xi32>
    %805 = arith.cmpi slt, %803, %804 : vector<1x128xi32>
    %806 = arith.andi %801, %805 : vector<1x128xi1>
    %c-1_i32_386 = arith.constant -1 : i32
    %807 = vector.broadcast %c-1_i32_386 : i32 to vector<1x128xi32>
    %808 = arith.addi %1, %807 : vector<1x128xi32>
    %c0_i32_387 = arith.constant 0 : i32
    %809 = vector.broadcast %c0_i32_387 : i32 to vector<1x128xi32>
    %810 = arith.cmpi sge, %808, %809 : vector<1x128xi32>
    %811 = arith.andi %806, %810 : vector<1x128xi1>
    %c-1_i32_388 = arith.constant -1 : i32
    %812 = vector.broadcast %c-1_i32_388 : i32 to vector<1x128xi32>
    %813 = arith.addi %1, %812 : vector<1x128xi32>
    %c4_i32_389 = arith.constant 4 : i32
    %814 = vector.broadcast %c4_i32_389 : i32 to vector<1x128xi32>
    %815 = arith.cmpi slt, %813, %814 : vector<1x128xi32>
    %816 = arith.andi %811, %815 : vector<1x128xi1>
    %cst_390 = arith.constant 0.000000e+00 : f32
    %817 = vector.shape_cast %816 : vector<1x128xi1> to vector<1x128xi1>
    %818 = vector.broadcast %817 : vector<1x128xi1> to vector<16x128xi1>
    %819 = vector.broadcast %cst_390 : f32 to vector<16x128xf32>
    %820 = arith.select %818, %796, %819 : vector<16x128xi1>, vector<16x128xf32>
    %c384 = arith.constant 384 : index
    %c0_391 = arith.constant 0 : index
    %821 = vector.load %arg10[%c384, %c0_391] : memref<576x128xf32, #tpu.memory_space<vmem>>, vector<16x128xf32>
    tpu.vector_store %arg10[%c384, %c0_391], %820 {strides = array<i32>} : memref<576x128xf32, #tpu.memory_space<vmem>>, vector<16x128xf32>,
    %c124_i32_392 = arith.constant 124 : i32
    %822 = tpu.dynamic_rotate %454 by %c124_i32_392 dim 1 : vector<16x128xf32>, i32 -> vector<16x128xf32>
    %c1_i32_393 = arith.constant 1 : i32
    %823 = vector.broadcast %c1_i32_393 : i32 to vector<1x128xi32>
    %824 = arith.addi %0, %823 : vector<1x128xi32>
    %c0_i32_394 = arith.constant 0 : i32
    %825 = vector.broadcast %c0_i32_394 : i32 to vector<1x128xi32>
    %826 = arith.cmpi sge, %824, %825 : vector<1x128xi32>
    %827 = arith.andi %5, %826 : vector<1x128xi1>
    %c1_i32_395 = arith.constant 1 : i32
    %828 = vector.broadcast %c1_i32_395 : i32 to vector<1x128xi32>
    %829 = arith.addi %0, %828 : vector<1x128xi32>
    %c4_i32_396 = arith.constant 4 : i32
    %830 = vector.broadcast %c4_i32_396 : i32 to vector<1x128xi32>
    %831 = arith.cmpi slt, %829, %830 : vector<1x128xi32>
    %832 = arith.andi %827, %831 : vector<1x128xi1>
    %c0_i32_397 = arith.constant 0 : i32
    %833 = vector.broadcast %c0_i32_397 : i32 to vector<1x128xi32>
    %834 = arith.addi %1, %833 : vector<1x128xi32>
    %c0_i32_398 = arith.constant 0 : i32
    %835 = vector.broadcast %c0_i32_398 : i32 to vector<1x128xi32>
    %836 = arith.cmpi sge, %834, %835 : vector<1x128xi32>
    %837 = arith.andi %832, %836 : vector<1x128xi1>
    %c0_i32_399 = arith.constant 0 : i32
    %838 = vector.broadcast %c0_i32_399 : i32 to vector<1x128xi32>
    %839 = arith.addi %1, %838 : vector<1x128xi32>
    %c4_i32_400 = arith.constant 4 : i32
    %840 = vector.broadcast %c4_i32_400 : i32 to vector<1x128xi32>
    %841 = arith.cmpi slt, %839, %840 : vector<1x128xi32>
    %842 = arith.andi %837, %841 : vector<1x128xi1>
    %cst_401 = arith.constant 0.000000e+00 : f32
    %843 = vector.shape_cast %842 : vector<1x128xi1> to vector<1x128xi1>
    %844 = vector.broadcast %843 : vector<1x128xi1> to vector<16x128xi1>
    %845 = vector.broadcast %cst_401 : f32 to vector<16x128xf32>
    %846 = arith.select %844, %822, %845 : vector<16x128xi1>, vector<16x128xf32>
    %c400 = arith.constant 400 : index
    %c0_402 = arith.constant 0 : index
    %847 = vector.load %arg10[%c400, %c0_402] : memref<576x128xf32, #tpu.memory_space<vmem>>, vector<16x128xf32>
    tpu.vector_store %arg10[%c400, %c0_402], %846 {strides = array<i32>} : memref<576x128xf32, #tpu.memory_space<vmem>>, vector<16x128xf32>,
    %c124_i32_403 = arith.constant 124 : i32
    %848 = tpu.dynamic_rotate %461 by %c124_i32_403 dim 1 : vector<16x128xf32>, i32 -> vector<16x128xf32>
    %c1_i32_404 = arith.constant 1 : i32
    %849 = vector.broadcast %c1_i32_404 : i32 to vector<1x128xi32>
    %850 = arith.addi %0, %849 : vector<1x128xi32>
    %c0_i32_405 = arith.constant 0 : i32
    %851 = vector.broadcast %c0_i32_405 : i32 to vector<1x128xi32>
    %852 = arith.cmpi sge, %850, %851 : vector<1x128xi32>
    %853 = arith.andi %5, %852 : vector<1x128xi1>
    %c1_i32_406 = arith.constant 1 : i32
    %854 = vector.broadcast %c1_i32_406 : i32 to vector<1x128xi32>
    %855 = arith.addi %0, %854 : vector<1x128xi32>
    %c4_i32_407 = arith.constant 4 : i32
    %856 = vector.broadcast %c4_i32_407 : i32 to vector<1x128xi32>
    %857 = arith.cmpi slt, %855, %856 : vector<1x128xi32>
    %858 = arith.andi %853, %857 : vector<1x128xi1>
    %c0_i32_408 = arith.constant 0 : i32
    %859 = vector.broadcast %c0_i32_408 : i32 to vector<1x128xi32>
    %860 = arith.addi %1, %859 : vector<1x128xi32>
    %c0_i32_409 = arith.constant 0 : i32
    %861 = vector.broadcast %c0_i32_409 : i32 to vector<1x128xi32>
    %862 = arith.cmpi sge, %860, %861 : vector<1x128xi32>
    %863 = arith.andi %858, %862 : vector<1x128xi1>
    %c0_i32_410 = arith.constant 0 : i32
    %864 = vector.broadcast %c0_i32_410 : i32 to vector<1x128xi32>
    %865 = arith.addi %1, %864 : vector<1x128xi32>
    %c4_i32_411 = arith.constant 4 : i32
    %866 = vector.broadcast %c4_i32_411 : i32 to vector<1x128xi32>
    %867 = arith.cmpi slt, %865, %866 : vector<1x128xi32>
    %868 = arith.andi %863, %867 : vector<1x128xi1>
    %cst_412 = arith.constant 0.000000e+00 : f32
    %869 = vector.shape_cast %868 : vector<1x128xi1> to vector<1x128xi1>
    %870 = vector.broadcast %869 : vector<1x128xi1> to vector<16x128xi1>
    %871 = vector.broadcast %cst_412 : f32 to vector<16x128xf32>
    %872 = arith.select %870, %848, %871 : vector<16x128xi1>, vector<16x128xf32>
    %c416 = arith.constant 416 : index
    %c0_413 = arith.constant 0 : index
    %873 = vector.load %arg10[%c416, %c0_413] : memref<576x128xf32, #tpu.memory_space<vmem>>, vector<16x128xf32>
    tpu.vector_store %arg10[%c416, %c0_413], %872 {strides = array<i32>} : memref<576x128xf32, #tpu.memory_space<vmem>>, vector<16x128xf32>,
    %c432 = arith.constant 432 : index
    %c0_414 = arith.constant 0 : index
    %874 = vector.load %arg10[%c432, %c0_414] : memref<576x128xf32, #tpu.memory_space<vmem>>, vector<16x128xf32>
    tpu.vector_store %arg10[%c432, %c0_414], %603 {strides = array<i32>} : memref<576x128xf32, #tpu.memory_space<vmem>>, vector<16x128xf32>,
    %c448 = arith.constant 448 : index
    %c0_415 = arith.constant 0 : index
    %875 = vector.load %arg10[%c448, %c0_415] : memref<576x128xf32, #tpu.memory_space<vmem>>, vector<16x128xf32>
    tpu.vector_store %arg10[%c448, %c0_415], %628 {strides = array<i32>} : memref<576x128xf32, #tpu.memory_space<vmem>>, vector<16x128xf32>,
    %c464 = arith.constant 464 : index
    %c0_416 = arith.constant 0 : index
    %876 = vector.load %arg10[%c464, %c0_416] : memref<576x128xf32, #tpu.memory_space<vmem>>, vector<16x128xf32>
    tpu.vector_store %arg10[%c464, %c0_416], %760 {strides = array<i32>} : memref<576x128xf32, #tpu.memory_space<vmem>>, vector<16x128xf32>,
    %c480 = arith.constant 480 : index
    %c0_417 = arith.constant 0 : index
    %877 = vector.load %arg10[%c480, %c0_417] : memref<576x128xf32, #tpu.memory_space<vmem>>, vector<16x128xf32>
    tpu.vector_store %arg10[%c480, %c0_417], %679 {strides = array<i32>} : memref<576x128xf32, #tpu.memory_space<vmem>>, vector<16x128xf32>,
    %c496 = arith.constant 496 : index
    %c0_418 = arith.constant 0 : index
    %878 = vector.load %arg10[%c496, %c0_418] : memref<576x128xf32, #tpu.memory_space<vmem>>, vector<16x128xf32>
    tpu.vector_store %arg10[%c496, %c0_418], %704 {strides = array<i32>} : memref<576x128xf32, #tpu.memory_space<vmem>>, vector<16x128xf32>,
    %c512 = arith.constant 512 : index
    %c0_419 = arith.constant 0 : index
    %879 = vector.load %arg10[%c512, %c0_419] : memref<576x128xf32, #tpu.memory_space<vmem>>, vector<16x128xf32>
    tpu.vector_store %arg10[%c512, %c0_419], %788 {strides = array<i32>} : memref<576x128xf32, #tpu.memory_space<vmem>>, vector<16x128xf32>,
    %c528 = arith.constant 528 : index
    %c0_420 = arith.constant 0 : index
    %880 = vector.load %arg10[%c528, %c0_420] : memref<576x128xf32, #tpu.memory_space<vmem>>, vector<16x128xf32>
    tpu.vector_store %arg10[%c528, %c0_420], %846 {strides = array<i32>} : memref<576x128xf32, #tpu.memory_space<vmem>>, vector<16x128xf32>,
    %c544 = arith.constant 544 : index
    %c0_421 = arith.constant 0 : index
    %881 = vector.load %arg10[%c544, %c0_421] : memref<576x128xf32, #tpu.memory_space<vmem>>, vector<16x128xf32>
    tpu.vector_store %arg10[%c544, %c0_421], %872 {strides = array<i32>} : memref<576x128xf32, #tpu.memory_space<vmem>>, vector<16x128xf32>,
    %c123_i32_422 = arith.constant 123 : i32
    %882 = tpu.dynamic_rotate %454 by %c123_i32_422 dim 1 : vector<16x128xf32>, i32 -> vector<16x128xf32>
    %c1_i32_423 = arith.constant 1 : i32
    %883 = vector.broadcast %c1_i32_423 : i32 to vector<1x128xi32>
    %884 = arith.addi %0, %883 : vector<1x128xi32>
    %c0_i32_424 = arith.constant 0 : i32
    %885 = vector.broadcast %c0_i32_424 : i32 to vector<1x128xi32>
    %886 = arith.cmpi sge, %884, %885 : vector<1x128xi32>
    %887 = arith.andi %5, %886 : vector<1x128xi1>
    %c1_i32_425 = arith.constant 1 : i32
    %888 = vector.broadcast %c1_i32_425 : i32 to vector<1x128xi32>
    %889 = arith.addi %0, %888 : vector<1x128xi32>
    %c4_i32_426 = arith.constant 4 : i32
    %890 = vector.broadcast %c4_i32_426 : i32 to vector<1x128xi32>
    %891 = arith.cmpi slt, %889, %890 : vector<1x128xi32>
    %892 = arith.andi %887, %891 : vector<1x128xi1>
    %c1_i32_427 = arith.constant 1 : i32
    %893 = vector.broadcast %c1_i32_427 : i32 to vector<1x128xi32>
    %894 = arith.addi %1, %893 : vector<1x128xi32>
    %c0_i32_428 = arith.constant 0 : i32
    %895 = vector.broadcast %c0_i32_428 : i32 to vector<1x128xi32>
    %896 = arith.cmpi sge, %894, %895 : vector<1x128xi32>
    %897 = arith.andi %892, %896 : vector<1x128xi1>
    %c1_i32_429 = arith.constant 1 : i32
    %898 = vector.broadcast %c1_i32_429 : i32 to vector<1x128xi32>
    %899 = arith.addi %1, %898 : vector<1x128xi32>
    %c4_i32_430 = arith.constant 4 : i32
    %900 = vector.broadcast %c4_i32_430 : i32 to vector<1x128xi32>
    %901 = arith.cmpi slt, %899, %900 : vector<1x128xi32>
    %902 = arith.andi %897, %901 : vector<1x128xi1>
    %cst_431 = arith.constant 0.000000e+00 : f32
    %903 = vector.shape_cast %902 : vector<1x128xi1> to vector<1x128xi1>
    %904 = vector.broadcast %903 : vector<1x128xi1> to vector<16x128xi1>
    %905 = vector.broadcast %cst_431 : f32 to vector<16x128xf32>
    %906 = arith.select %904, %882, %905 : vector<16x128xi1>, vector<16x128xf32>
    %c560 = arith.constant 560 : index
    %c0_432 = arith.constant 0 : index
    %907 = vector.load %arg10[%c560, %c0_432] : memref<576x128xf32, #tpu.memory_space<vmem>>, vector<16x128xf32>
    tpu.vector_store %arg10[%c560, %c0_432], %906 {strides = array<i32>} : memref<576x128xf32, #tpu.memory_space<vmem>>, vector<16x128xf32>,
    %c0_433 = arith.constant 0 : index
    %c0_434 = arith.constant 0 : index
    %908 = vector.load %arg5[%c0_433, %c0_434] : memref<16x144xbf16, #tpu.memory_space<vmem>>, vector<16x144xbf16>
    %c0_435 = arith.constant 0 : index
    %c0_436 = arith.constant 0 : index
    %909 = vector.load %arg6[%c0_435, %c0_436] : memref<16x1xf32, #tpu.memory_space<vmem>>, vector<16x1xf32>
    %c0_437 = arith.constant 0 : index
    %c0_438 = arith.constant 0 : index
    %910 = vector.load %arg10[%c0_437, %c0_438] : memref<576x128xf32, #tpu.memory_space<vmem>>, vector<144x128xf32>
    %911 = arith.truncf %910 : vector<144x128xf32> to vector<144x128xbf16>
    %cst_439 = arith.constant dense<0.000000e+00> : vector<16x128xf32>
    %912 = tpu.matmul %908, %911, %cst_439 {dimension_numbers = #tpu.dot_dimension_numbers<[1], [0], [0], [1], [0, 0, 1, 1], [], []>} : vector<16x144xbf16>, vector<144x128xbf16>, vector<16x128xf32> -> vector<16x128xf32>
    %913 = vector.broadcast %909 : vector<16x1xf32> to vector<16x128xf32>
    %914 = arith.addf %912, %913 : vector<16x128xf32>
    %c144_440 = arith.constant 144 : index
    %c0_441 = arith.constant 0 : index
    %915 = vector.load %arg10[%c144_440, %c0_441] : memref<576x128xf32, #tpu.memory_space<vmem>>, vector<144x128xf32>
    %916 = arith.truncf %915 : vector<144x128xf32> to vector<144x128xbf16>
    %cst_442 = arith.constant dense<0.000000e+00> : vector<16x128xf32>
    %917 = tpu.matmul %908, %916, %cst_442 {dimension_numbers = #tpu.dot_dimension_numbers<[1], [0], [0], [1], [0, 0, 1, 1], [], []>} : vector<16x144xbf16>, vector<144x128xbf16>, vector<16x128xf32> -> vector<16x128xf32>
    %918 = vector.broadcast %909 : vector<16x1xf32> to vector<16x128xf32>
    %919 = arith.addf %917, %918 : vector<16x128xf32>
    %c288_443 = arith.constant 288 : index
    %c0_444 = arith.constant 0 : index
    %920 = vector.load %arg10[%c288_443, %c0_444] : memref<576x128xf32, #tpu.memory_space<vmem>>, vector<144x128xf32>
    %921 = arith.truncf %920 : vector<144x128xf32> to vector<144x128xbf16>
    %cst_445 = arith.constant dense<0.000000e+00> : vector<16x128xf32>
    %922 = tpu.matmul %908, %921, %cst_445 {dimension_numbers = #tpu.dot_dimension_numbers<[1], [0], [0], [1], [0, 0, 1, 1], [], []>} : vector<16x144xbf16>, vector<144x128xbf16>, vector<16x128xf32> -> vector<16x128xf32>
    %923 = vector.broadcast %909 : vector<16x1xf32> to vector<16x128xf32>
    %924 = arith.addf %922, %923 : vector<16x128xf32>
    %c432_446 = arith.constant 432 : index
    %c0_447 = arith.constant 0 : index
    %925 = vector.load %arg10[%c432_446, %c0_447] : memref<576x128xf32, #tpu.memory_space<vmem>>, vector<144x128xf32>
    %926 = arith.truncf %925 : vector<144x128xf32> to vector<144x128xbf16>
    %cst_448 = arith.constant dense<0.000000e+00> : vector<16x128xf32>
    %927 = tpu.matmul %908, %926, %cst_448 {dimension_numbers = #tpu.dot_dimension_numbers<[1], [0], [0], [1], [0, 0, 1, 1], [], []>} : vector<16x144xbf16>, vector<144x128xbf16>, vector<16x128xf32> -> vector<16x128xf32>
    %928 = vector.broadcast %909 : vector<16x1xf32> to vector<16x128xf32>
    %929 = arith.addf %927, %928 : vector<16x128xf32>
    %930 = arith.maximumf %914, %919 : vector<16x128xf32>
    %931 = arith.cmpf oge, %914, %919 : vector<16x128xf32>
    %c0_i32_449 = arith.constant 0 : i32
    %c1_i32_450 = arith.constant 1 : i32
    %932 = vector.broadcast %c0_i32_449 : i32 to vector<16x128xi32>
    %933 = vector.broadcast %c1_i32_450 : i32 to vector<16x128xi32>
    %934 = arith.select %931, %932, %933 : vector<16x128xi1>, vector<16x128xi32>
    %935 = arith.maximumf %924, %929 : vector<16x128xf32>
    %936 = arith.cmpf oge, %924, %929 : vector<16x128xf32>
    %c0_i32_451 = arith.constant 0 : i32
    %c1_i32_452 = arith.constant 1 : i32
    %937 = vector.broadcast %c0_i32_451 : i32 to vector<16x128xi32>
    %938 = vector.broadcast %c1_i32_452 : i32 to vector<16x128xi32>
    %939 = arith.select %936, %937, %938 : vector<16x128xi1>, vector<16x128xi32>
    %940 = arith.cmpf oge, %930, %935 : vector<16x128xf32>
    %941 = arith.maximumf %930, %935 : vector<16x128xf32>
    %c0_i32_453 = arith.constant 0 : i32
    %c1_i32_454 = arith.constant 1 : i32
    %942 = vector.broadcast %c0_i32_453 : i32 to vector<16x128xi32>
    %943 = vector.broadcast %c1_i32_454 : i32 to vector<16x128xi32>
    %944 = arith.select %940, %942, %943 : vector<16x128xi1>, vector<16x128xi32>
    %945 = arith.select %940, %934, %939 : vector<16x128xi1>, vector<16x128xi32>
    %c0_455 = arith.constant 0 : index
    %c0_456 = arith.constant 0 : index
    %c0_457 = arith.constant 0 : index
    %946 = vector.load %arg7[%c0_455, %c0_456, %c0_457] : memref<1x16x128xf32, #tpu.memory_space<vmem>>, vector<1x16x128xf32>
    %947 = vector.shape_cast %946 : vector<1x16x128xf32> to vector<16x128xf32>
    %948 = vector.shape_cast %941 : vector<16x128xf32> to vector<1x16x128xf32>
    tpu.vector_store %arg7[%c0_455, %c0_456, %c0_457], %948 {strides = array<i32>} : memref<1x16x128xf32, #tpu.memory_space<vmem>>, vector<1x16x128xf32>,
    %c8_i32 = arith.constant 8 : i32
    %949 = vector.broadcast %c8_i32 : i32 to vector<16x128xi32>
    %950 = arith.muli %944, %949 : vector<16x128xi32>
    %951 = vector.broadcast %2 : vector<1x128xi32> to vector<16x128xi32>
    %952 = arith.addi %951, %950 : vector<16x128xi32>
    %953 = arith.addi %952, %945 : vector<16x128xi32>
    %c0_458 = arith.constant 0 : index
    %c0_459 = arith.constant 0 : index
    %c0_460 = arith.constant 0 : index
    %954 = vector.load %arg8[%c0_458, %c0_459, %c0_460] : memref<1x16x128xi32, #tpu.memory_space<vmem>>, vector<1x16x128xi32>
    %955 = vector.shape_cast %954 : vector<1x16x128xi32> to vector<16x128xi32>
    %956 = vector.shape_cast %953 : vector<16x128xi32> to vector<1x16x128xi32>
    tpu.vector_store %arg8[%c0_458, %c0_459, %c0_460], %956 {strides = array<i32>} : memref<1x16x128xi32, #tpu.memory_space<vmem>>, vector<1x16x128xi32>,
    return
  }
  func.func @transform_0(%arg0: i32) -> (i32, i32) {
    %c0_i32 = arith.constant 0 : i32
    %c0_i32_0 = arith.constant 0 : i32
    %c0_i32_1 = arith.constant 0 : i32
    return %c0_i32, %c0_i32_0 : i32, i32
  }
  func.func @transform_1(%arg0: i32) -> (i32, i32, i32, i32) {
    %c0_i32 = arith.constant 0 : i32
    %c0_i32_0 = arith.constant 0 : i32
    %c0_i32_1 = arith.constant 0 : i32
    %c0_i32_2 = arith.constant 0 : i32
    return %arg0, %c0_i32, %c0_i32_0, %c0_i32_1 : i32, i32, i32, i32
  }
  func.func @transform_2(%arg0: i32) -> (i32, i32) {
    %c0_i32 = arith.constant 0 : i32
    %c0_i32_0 = arith.constant 0 : i32
    %c0_i32_1 = arith.constant 0 : i32
    return %c0_i32, %c0_i32_0 : i32, i32
  }
  func.func @transform_3(%arg0: i32) -> (i32, i32) {
    %c0_i32 = arith.constant 0 : i32
    %c0_i32_0 = arith.constant 0 : i32
    %c0_i32_1 = arith.constant 0 : i32
    return %c0_i32, %c0_i32_0 : i32, i32
  }
  func.func @transform_4(%arg0: i32) -> (i32, i32) {
    %c0_i32 = arith.constant 0 : i32
    %c0_i32_0 = arith.constant 0 : i32
    %c0_i32_1 = arith.constant 0 : i32
    return %c0_i32, %c0_i32_0 : i32, i32
  }
  func.func @transform_5(%arg0: i32) -> (i32, i32) {
    %c0_i32 = arith.constant 0 : i32
    %c0_i32_0 = arith.constant 0 : i32
    %c0_i32_1 = arith.constant 0 : i32
    return %c0_i32, %c0_i32_0 : i32, i32
  }
  func.func @transform_6(%arg0: i32) -> (i32, i32, i32) {
    %c0_i32 = arith.constant 0 : i32
    %c0_i32_0 = arith.constant 0 : i32
    %c0_i32_1 = arith.constant 0 : i32
    return %arg0, %c0_i32, %c0_i32_0 : i32, i32, i32
  }
  func.func @transform_7(%arg0: i32) -> (i32, i32, i32) {
    %c0_i32 = arith.constant 0 : i32
    %c0_i32_0 = arith.constant 0 : i32
    %c0_i32_1 = arith.constant 0 : i32
    return %arg0, %c0_i32, %c0_i32_0 : i32, i32, i32
  }
}

</mosaic_0001>

<llo_original>
// kernel: segnet_encoder_forward.2
$region0: #{segnet_encoder_forward.2}
  #allocation0 [shape = 'u32[]', space=smem, size = 0x4, offset = 0x4, fixed_abs, tag = 'smem constant byte address 0x4 - core index']
  #allocation1 [shape = 'u32[144,128]{1,0:T(1,128)}', space=vmem, size = 0x12000, scoped, tag = 'internal scratch']
  #allocation2 [shape = 'f32[288,128]{1,0:T(8,128)}', space=vmem, size = 0x24000, scoped, tag = 'scratch operand']
  #allocation3 [shape = 'f32[288,128]{1,0:T(8,128)}', space=vmem, size = 0x24000, scoped, tag = 'scratch operand']
  %s0 = inlined_call_operand.vmem [shape: s32[8,128], index: 0, kind: input, shape index: {}]
  %s1 = inlined_call_operand.vmem [shape: f32[1,4,8,128], index: 1, kind: input, shape index: {}]
  %s2 = inlined_call_operand.vmem [shape: bf16[8,72], index: 2, kind: input, shape index: {}]
  %s3 = inlined_call_operand.vmem [shape: f32[8,1], index: 3, kind: input, shape index: {}]
  %s4 = inlined_call_operand.vmem [shape: bf16[8,72], index: 4, kind: input, shape index: {}]
  %s5 = inlined_call_operand.vmem [shape: f32[8,1], index: 5, kind: input, shape index: {}]
  %s6 = inlined_call_operand.vmem [shape: f32[1,8,128], index: 6, kind: output, shape index: {0}]
  %s7 = inlined_call_operand.vmem [shape: s32[1,8,128], index: 7, kind: output, shape index: {1}]
  %8 = xla_tuple %s6, %s7
  %s9 = sld [smem:[#allocation0]]
  $region42: #{segnet_encoder_forward.2} parent=0
    _
  %s11 = ssub.s32 1, %s9
  %s12 = scalar_select 0, %s11, %s9
  // Predicated region
  $region2: #{segnet_encoder_forward.2} parent=0 // pred_check
    _
  $region3: #{segnet_encoder_forward.2} parent=0 // pred_check_branch
    %14 = sbr.rel (0) target = $region5
  $region4: #{segnet_encoder_forward.2} parent=0 // pred_region
    _
  $region5: #{segnet_encoder_forward.2} parent=0 // pred_fallthru
    _
  // Predicated region
  $region6: #{segnet_encoder_forward.2} parent=0 // pred_check
    _
  $region7: #{segnet_encoder_forward.2} parent=0 // pred_check_branch
    %16 = sbr.rel (0) target = $region9
  $region8: #{segnet_encoder_forward.2} parent=0 // pred_region
    _
  $region9: #{segnet_encoder_forward.2} parent=0 // pred_fallthru
    _
  // Predicated region
  $region10: #{segnet_encoder_forward.2} parent=0 // pred_check
    _
  $region11: #{segnet_encoder_forward.2} parent=0 // pred_check_branch
    %18 = sbr.rel (0) target = $region13
  $region12: #{segnet_encoder_forward.2} parent=0 // pred_region
    _
  $region13: #{segnet_encoder_forward.2} parent=0 // pred_fallthru
    _
  // Predicated region
  $region14: #{segnet_encoder_forward.2} parent=0 // pred_check
    _
  $region15: #{segnet_encoder_forward.2} parent=0 // pred_check_branch
    %20 = sbr.rel (0) target = $region17
  $region16: #{segnet_encoder_forward.2} parent=0 // pred_region
    _
  $region17: #{segnet_encoder_forward.2} parent=0 // pred_fallthru
    _
  // Predicated region
  $region18: #{segnet_encoder_forward.2} parent=0 // pred_check
    _
  $region19: #{segnet_encoder_forward.2} parent=0 // pred_check_branch
    %22 = sbr.rel (0) target = $region21
  $region20: #{segnet_encoder_forward.2} parent=0 // pred_region
    _
  $region21: #{segnet_encoder_forward.2} parent=0 // pred_fallthru
    _
  // Predicated region
  $region22: #{segnet_encoder_forward.2} parent=0 // pred_check
    _
  $region23: #{segnet_encoder_forward.2} parent=0 // pred_check_branch
    %24 = sbr.rel (0) target = $region25
  $region24: #{segnet_encoder_forward.2} parent=0 // pred_region
    _
  $region25: #{segnet_encoder_forward.2} parent=0 // pred_fallthru
    _
  %v26 = vld [vmem:[%s0] sm:$0x1]
  %v27 = vld [vmem:[%s0 + $0x1] sm:$0x1]
  %v28 = vld [vmem:[%s0 + $0x2] sm:$0x1]
  %v29 = vld [vmem:[%s0 + $0x3] sm:$0x1]
  %vm30 = vcmp.gt.s32.totalorder %v29, 0
  %v31 = vld [vmem:[%s1] sm:$0xff]
  %s32 = scalar_lea.vmem %s1, 8
  %v33 = vld [vmem:[%s32] sm:$0xff]
  %s34 = scalar_lea.vmem %s1, 16
  %v35 = vld [vmem:[%s34] sm:$0xff]
  %s36 = scalar_lea.vmem %s1, 24
  %v37 = vld [vmem:[%s36] sm:$0xff]
  %38 = vrot.lane.b32.xlu0 %v37, 9
  %v39 = vpop.permute.xlu0 %38
  %v40 = vadd.s32 %v26, 4294967295
  %vm41 = vcmp.ge.s32.totalorder %v40, 0
  %vm42 = vmand %vm30, %vm41
  %vm43 = vcmp.lt.s32.totalorder %v40, 8
  %vm44 = vmand %vm42, %vm43
  %v45 = vadd.s32 %v27, 4294967295
  %vm46 = vcmp.ge.s32.totalorder %v45, 0
  %vm47 = vmand %vm44, %vm46
  %vm48 = vcmp.lt.s32.totalorder %v45, 8
  %vm49 = vmand %vm47, %vm48
  %v50 = vsel %vm49, 1, 0
  %v51 = vlaneseq
  %v52 = vshrl.u32 %v51, 7
  %v53 = vsub.s32 0, %v52
  %v54 = vrot.slane %v50, %v53
  %vm55 = vcmp.eq.s32.totalorder %v54, 1
  %v56 = vsel %vm55, %v39, 0.0
  %57 = vst [vmem:[#allocation2] sm:$0xff] %v56
  %58 = vrot.lane.b32.xlu0 %v35, 8
  %v59 = vpop.permute.xlu0 %58
  %vm60 = vcmp.ge.s32.totalorder %v27, 0
  %vm61 = vmand %vm44, %vm60
  %vm62 = vcmp.lt.s32.totalorder %v27, 8
  %vm63 = vmand %vm61, %vm62
  %v64 = vsel %vm63, 1, 0
  %v65 = vlaneseq
  %v66 = vshrl.u32 %v65, 7
  %v67 = vsub.s32 0, %v66
  %v68 = vrot.slane %v64, %v67
  %vm69 = vcmp.eq.s32.totalorder %v68, 1
  %v70 = vsel %vm69, %v59, 0.0
  %71 = vst [vmem:[#allocation2 + $0x8] sm:$0xff] %v70
  %72 = vrot.lane.b32.xlu0 %v37, 8
  %v73 = vpop.permute.xlu0 %72
  %v74 = vsel %vm69, %v73, 0.0
  %75 = vst [vmem:[#allocation2 + $0x10] sm:$0xff] %v74
  %76 = vrot.lane.b32.xlu0 %v33, 1
  %v77 = vpop.permute.xlu0 %76
  %vm78 = vcmp.ge.s32.totalorder %v26, 0
  %vm79 = vmand %vm30, %vm78
  %vm80 = vcmp.lt.s32.totalorder %v26, 8
  %vm81 = vmand %vm79, %vm80
  %vm82 = vmand %vm81, %vm46
  %vm83 = vmand %vm82, %vm48
  %v84 = vsel %vm83, 1, 0
  %v85 = vlaneseq
  %v86 = vshrl.u32 %v85, 7
  %v87 = vsub.s32 0, %v86
  %v88 = vrot.slane %v84, %v87
  %vm89 = vcmp.eq.s32.totalorder %v88, 1
  %v90 = vsel %vm89, %v77, 0.0
  %91 = vst [vmem:[#allocation2 + $0x18] sm:$0xff] %v90
  %vm92 = vmand %vm81, %vm60
  %vm93 = vmand %vm92, %vm62
  %v94 = vsel %vm93, 1, 0
  %v95 = vlaneseq
  %v96 = vshrl.u32 %v95, 7
  %v97 = vsub.s32 0, %v96
  %v98 = vrot.slane %v94, %v97
  %vm99 = vcmp.eq.s32.totalorder %v98, 1
  %v100 = vsel %vm99, %v31, 0.0
  %101 = vst [vmem:[#allocation2 + $0x20] sm:$0xff] %v100
  %v102 = vsel %vm99, %v33, 0.0
  %103 = vst [vmem:[#allocation2 + $0x28] sm:$0xff] %v102
  %104 = vrot.lane.b32.xlu0 %v37, 1
  %v105 = vpop.permute.xlu0 %104
  %v106 = vsel %vm89, %v105, 0.0
  %107 = vst [vmem:[#allocation2 + $0x30] sm:$0xff] %v106
  %v108 = vsel %vm99, %v35, 0.0
  %109 = vst [vmem:[#allocation2 + $0x38] sm:$0xff] %v108
  %v110 = vsel %vm99, %v37, 0.0
  %111 = vst [vmem:[#allocation2 + $0x40] sm:$0xff] %v110
  %112 = vst [vmem:[#allocation2 + $0x48] sm:$0xff] %v70
  %113 = vst [vmem:[#allocation2 + $0x50] sm:$0xff] %v74
  %114 = vrot.lane.b32.xlu0 %v35, 7
  %v115 = vpop.permute.xlu0 %114
  %v116 = vadd.s32 %v27, 1
  %vm117 = vcmp.ge.s32.totalorder %v116, 0
  %vm118 = vmand %vm44, %vm117
  %vm119 = vcmp.lt.s32.totalorder %v116, 8
  %vm120 = vmand %vm118, %vm119
  %v121 = vsel %vm120, 1, 0
  %v122 = vlaneseq
  %v123 = vshrl.u32 %v122, 7
  %v124 = vsub.s32 0, %v123
  %v125 = vrot.slane %v121, %v124
  %vm126 = vcmp.eq.s32.totalorder %v125, 1
  %v127 = vsel %vm126, %v115, 0.0
  %128 = vst [vmem:[#allocation2 + $0x58] sm:$0xff] %v127
  %129 = vst [vmem:[#allocation2 + $0x60] sm:$0xff] %v100
  %130 = vst [vmem:[#allocation2 + $0x68] sm:$0xff] %v102
  %131 = vrot.lane.b32.xlu0 %v31, 127
  %v132 = vpop.permute.xlu0 %131
  %vm133 = vmand %vm81, %vm117
  %vm134 = vmand %vm133, %vm119
  %v135 = vsel %vm134, 1, 0
  %v136 = vlaneseq
  %v137 = vshrl.u32 %v136, 7
  %v138 = vsub.s32 0, %v137
  %v139 = vrot.slane %v135, %v138
  %vm140 = vcmp.eq.s32.totalorder %v139, 1
  %v141 = vsel %vm140, %v132, 0.0
  %142 = vst [vmem:[#allocation2 + $0x70] sm:$0xff] %v141
  %143 = vst [vmem:[#allocation2 + $0x78] sm:$0xff] %v108
  %144 = vst [vmem:[#allocation2 + $0x80] sm:$0xff] %v110
  %145 = vrot.lane.b32.xlu0 %v35, 127
  %v146 = vpop.permute.xlu0 %145
  %v147 = vsel %vm140, %v146, 0.0
  %148 = vst [vmem:[#allocation2 + $0x88] sm:$0xff] %v147
  %149 = vst [vmem:[#allocation2 + $0x90] sm:$0xff] %v90
  %150 = vst [vmem:[#allocation2 + $0x98] sm:$0xff] %v100
  %151 = vst [vmem:[#allocation2 + $0xa0] sm:$0xff] %v102
  %152 = vst [vmem:[#allocation2 + $0xa8] sm:$0xff] %v106
  %153 = vst [vmem:[#allocation2 + $0xb0] sm:$0xff] %v108
  %154 = vst [vmem:[#allocation2 + $0xb8] sm:$0xff] %v110
  %155 = vrot.lane.b32.xlu0 %v33, 121
  %v156 = vpop.permute.xlu0 %155
  %v157 = vadd.s32 %v26, 1
  %vm158 = vcmp.ge.s32.totalorder %v157, 0
  %vm159 = vmand %vm30, %vm158
  %vm160 = vcmp.lt.s32.totalorder %v157, 8
  %vm161 = vmand %vm159, %vm160
  %vm162 = vmand %vm161, %vm46
  %vm163 = vmand %vm162, %vm48
  %v164 = vsel %vm163, 1, 0
  %v165 = vlaneseq
  %v166 = vshrl.u32 %v165, 7
  %v167 = vsub.s32 0, %v166
  %v168 = vrot.slane %v164, %v167
  %vm169 = vcmp.eq.s32.totalorder %v168, 1
  %v170 = vsel %vm169, %v156, 0.0
  %171 = vst [vmem:[#allocation2 + $0xc0] sm:$0xff] %v170
  %172 = vrot.lane.b32.xlu0 %v31, 120
  %v173 = vpop.permute.xlu0 %172
  %vm174 = vmand %vm161, %vm60
  %vm175 = vmand %vm174, %vm62
  %v176 = vsel %vm175, 1, 0
  %v177 = vlaneseq
  %v178 = vshrl.u32 %v177, 7
  %v179 = vsub.s32 0, %v178
  %v180 = vrot.slane %v176, %v179
  %vm181 = vcmp.eq.s32.totalorder %v180, 1
  %v182 = vsel %vm181, %v173, 0.0
  %183 = vst [vmem:[#allocation2 + $0xc8] sm:$0xff] %v182
  %184 = vrot.lane.b32.xlu0 %v33, 120
  %v185 = vpop.permute.xlu0 %184
  %v186 = vsel %vm181, %v185, 0.0
  %187 = vst [vmem:[#allocation2 + $0xd0] sm:$0xff] %v186
  %188 = vst [vmem:[#allocation2 + $0xd8] sm:$0xff] %v100
  %189 = vst [vmem:[#allocation2 + $0xe0] sm:$0xff] %v102
  %190 = vst [vmem:[#allocation2 + $0xe8] sm:$0xff] %v141
  %191 = vst [vmem:[#allocation2 + $0xf0] sm:$0xff] %v108
  %192 = vst [vmem:[#allocation2 + $0xf8] sm:$0xff] %v110
  %193 = vst [vmem:[#allocation2 + $0x100] sm:$0xff] %v147
  %194 = vst [vmem:[#allocation2 + $0x108] sm:$0xff] %v182
  %195 = vst [vmem:[#allocation2 + $0x110] sm:$0xff] %v186
  %196 = vrot.lane.b32.xlu0 %v31, 119
  %v197 = vpop.permute.xlu0 %196
  %vm198 = vmand %vm161, %vm117
  %vm199 = vmand %vm198, %vm119
  %v200 = vsel %vm199, 1, 0
  %v201 = vlaneseq
  %v202 = vshrl.u32 %v201, 7
  %v203 = vsub.s32 0, %v202
  %v204 = vrot.slane %v200, %v203
  %vm205 = vcmp.eq.s32.totalorder %v204, 1
  %v206 = vsel %vm205, %v197, 0.0
  %207 = vst [vmem:[#allocation2 + $0x118] sm:$0xff] %v206
  %v208 = vld [vmem:[%s2] sm:$0xf]
  %v209 = vld [vmem:[%s3] sm:$0xff]
  %v210 = vld [vmem:[#allocation2] sm:$0xff]
  %v211 = vld [vmem:[#allocation2 + $0x8] sm:$0xff]
  %v212 = vld [vmem:[#allocation2 + $0x10] sm:$0xff]
  %v213 = vld [vmem:[#allocation2 + $0x18] sm:$0xff]
  %v214 = vld [vmem:[#allocation2 + $0x20] sm:$0xff]
  %v215 = vld [vmem:[#allocation2 + $0x28] sm:$0xff]
  %v216 = vld [vmem:[#allocation2 + $0x30] sm:$0xff]
  %v217 = vld [vmem:[#allocation2 + $0x38] sm:$0xff]
  %v218 = vld [vmem:[#allocation2 + $0x40] sm:$0xff]
  %v219 = vpack.c.bf16 %v211, %v210
  %v220 = vpack.c.bf16 %v213, %v212
  %v221 = vpack.c.bf16 %v215, %v214
  %v222 = vpack.c.bf16 %v217, %v216
  %v223 = vpack.c.bf16 %v218, %v218
  %225 = vset.pattern.permute.xlu0 0
  %226 = vperm.xlu0 %225, %v209
  %v227 = vpop.permute.xlu0 %226
  %vm229 = vcmask 588800
  %v231 = vsel %vm229, %v208, 0
  %vm233 = vcmask 1043456
  %v235 = vsel %vm233, %v223, 0
  %237 = vmatprep.subr.bf16.mxu0 0
  %238 = vmatpush1.bf16.msra.mxu0 %v219
  %239 = vmatprep.subr.bf16.mxu0 0
  %240 = vmatpush1.bf16.msra.mxu0 %v220
  %241 = vmatprep.subr.bf16.mxu0 0
  %242 = vmatpush1.bf16.msra.mxu0 %v221
  %243 = vmatprep.subr.bf16.mxu0 0
  %244 = vmatpush1.bf16.msra.mxu0 %v222
  %245 = vmatprep.subr.bf16.mxu0 0
  %246 = vmatpush1.bf16.msra.mxu0 %v235
  %247 = vmatprep.subr.bf16.mxu0 0
  %248 = vmatpush1.bf16.msra.mxu0 0
  %249 = vmatprep.subr.bf16.mxu0 0
  %250 = vmatpush1.bf16.msra.mxu0 0
  %251 = vmatprep.subr.bf16.mxu0 0
  %252 = vmatpush1.bf16.msra.mxu0 0
  %253 = vmatprep.subr.bf16.mxu0 0
  %254 = vmatpush1.bf16.msra.mxu0 0
  %255 = vmatprep.subr.bf16.mxu0 0
  %256 = vmatpush1.bf16.msra.mxu0 0
  %257 = vmatprep.subr.bf16.mxu0 0
  %258 = vmatpush1.bf16.msra.mxu0 0
  %259 = vmatprep.subr.bf16.mxu0 0
  %260 = vmatpush1.bf16.msra.mxu0 0
  %261 = vmatprep.subr.bf16.mxu0 0
  %262 = vmatpush1.bf16.msra.mxu0 0
  %263 = vmatprep.subr.bf16.mxu0 0
  %264 = vmatpush1.bf16.msra.mxu0 0
  %265 = vmatprep.subr.bf16.mxu0 0
  %266 = vmatpush1.bf16.msra.mxu0 0
  %267 = vmatprep.subr.bf16.mxu0 0
  %268 = vmatpush1.bf16.msra.mxu0 0
  %269 = vmatprep.mubr.bf16.mxu0 0
  %270 = vmatmul.mubr.bf16.gmra.mrb[0].mxu0 %v231
  %v271 = vpop.f32.mrb[0].mxu0
  %v272 = vadd.f32 %v227, %v271
  %v273 = vpop.f32.mrb[0].mxu0
  %v274 = vpop.f32.mrb[0].mxu0
  %v275 = vpop.f32.mrb[0].mxu0
  %276 = vdwg.mxu0
  %v277 = vmax.f32 %v272, 0.0
  %v278 = vld [vmem:[#allocation2 + $0x48] sm:$0xff]
  %v279 = vld [vmem:[#allocation2 + $0x50] sm:$0xff]
  %v280 = vld [vmem:[#allocation2 + $0x58] sm:$0xff]
  %v281 = vld [vmem:[#allocation2 + $0x60] sm:$0xff]
  %v282 = vld [vmem:[#allocation2 + $0x68] sm:$0xff]
  %v283 = vld [vmem:[#allocation2 + $0x70] sm:$0xff]
  %v284 = vld [vmem:[#allocation2 + $0x78] sm:$0xff]
  %v285 = vld [vmem:[#allocation2 + $0x80] sm:$0xff]
  %v286 = vld [vmem:[#allocation2 + $0x88] sm:$0xff]
  %v287 = vpack.c.bf16 %v279, %v278
  %v288 = vpack.c.bf16 %v281, %v280
  %v289 = vpack.c.bf16 %v283, %v282
  %v290 = vpack.c.bf16 %v285, %v284
  %v291 = vpack.c.bf16 %v286, %v286
  %v293 = vsel %vm233, %v291, 0
  %295 = vmatprep.subr.bf16.mxu0 0
  %296 = vmatpush1.bf16.msra.mxu0 %v287
  %297 = vmatprep.subr.bf16.mxu0 0
  %298 = vmatpush1.bf16.msra.mxu0 %v288
  %299 = vmatprep.subr.bf16.mxu0 0
  %300 = vmatpush1.bf16.msra.mxu0 %v289
  %301 = vmatprep.subr.bf16.mxu0 0
  %302 = vmatpush1.bf16.msra.mxu0 %v290
  %303 = vmatprep.subr.bf16.mxu0 0
  %304 = vmatpush1.bf16.msra.mxu0 %v293
  %305 = vmatprep.subr.bf16.mxu0 0
  %306 = vmatpush1.bf16.msra.mxu0 0
  %307 = vmatprep.subr.bf16.mxu0 0
  %308 = vmatpush1.bf16.msra.mxu0 0
  %309 = vmatprep.subr.bf16.mxu0 0
  %310 = vmatpush1.bf16.msra.mxu0 0
  %311 = vmatprep.subr.bf16.mxu0 0
  %312 = vmatpush1.bf16.msra.mxu0 0
  %313 = vmatprep.subr.bf16.mxu0 0
  %314 = vmatpush1.bf16.msra.mxu0 0
  %315 = vmatprep.subr.bf16.mxu0 0
  %316 = vmatpush1.bf16.msra.mxu0 0
  %317 = vmatprep.subr.bf16.mxu0 0
  %318 = vmatpush1.bf16.msra.mxu0 0
  %319 = vmatprep.subr.bf16.mxu0 0
  %320 = vmatpush1.bf16.msra.mxu0 0
  %321 = vmatprep.subr.bf16.mxu0 0
  %322 = vmatpush1.bf16.msra.mxu0 0
  %323 = vmatprep.subr.bf16.mxu0 0
  %324 = vmatpush1.bf16.msra.mxu0 0
  %325 = vmatprep.subr.bf16.mxu0 0
  %326 = vmatpush1.bf16.msra.mxu0 0
  %327 = vmatprep.mubr.bf16.mxu0 0
  %328 = vmatmul.mubr.bf16.gmra.mrb[0].mxu0 %v231
  %v329 = vpop.f32.mrb[0].mxu0
  %v330 = vadd.f32 %v227, %v329
  %v331 = vpop.f32.mrb[0].mxu0
  %v332 = vpop.f32.mrb[0].mxu0
  %v333 = vpop.f32.mrb[0].mxu0
  %334 = vdwg.mxu0
  %v335 = vmax.f32 %v330, 0.0
  %v336 = vld [vmem:[#allocation2 + $0x90] sm:$0xff]
  %v337 = vld [vmem:[#allocation2 + $0x98] sm:$0xff]
  %v338 = vld [vmem:[#allocation2 + $0xa0] sm:$0xff]
  %v339 = vld [vmem:[#allocation2 + $0xa8] sm:$0xff]
  %v340 = vld [vmem:[#allocation2 + $0xb0] sm:$0xff]
  %v341 = vld [vmem:[#allocation2 + $0xb8] sm:$0xff]
  %v342 = vld [vmem:[#allocation2 + $0xc0] sm:$0xff]
  %v343 = vld [vmem:[#allocation2 + $0xc8] sm:$0xff]
  %v344 = vld [vmem:[#allocation2 + $0xd0] sm:$0xff]
  %v345 = vpack.c.bf16 %v337, %v336
  %v346 = vpack.c.bf16 %v339, %v338
  %v347 = vpack.c.bf16 %v341, %v340
  %v348 = vpack.c.bf16 %v343, %v342
  %v349 = vpack.c.bf16 %v344, %v344
  %v351 = vsel %vm233, %v349, 0
  %353 = vmatprep.subr.bf16.mxu0 0
  %354 = vmatpush1.bf16.msra.mxu0 %v345
  %355 = vmatprep.subr.bf16.mxu0 0
  %356 = vmatpush1.bf16.msra.mxu0 %v346
  %357 = vmatprep.subr.bf16.mxu0 0
  %358 = vmatpush1.bf16.msra.mxu0 %v347
  %359 = vmatprep.subr.bf16.mxu0 0
  %360 = vmatpush1.bf16.msra.mxu0 %v348
  %361 = vmatprep.subr.bf16.mxu0 0
  %362 = vmatpush1.bf16.msra.mxu0 %v351
  %363 = vmatprep.subr.bf16.mxu0 0
  %364 = vmatpush1.bf16.msra.mxu0 0
  %365 = vmatprep.subr.bf16.mxu0 0
  %366 = vmatpush1.bf16.msra.mxu0 0
  %367 = vmatprep.subr.bf16.mxu0 0
  %368 = vmatpush1.bf16.msra.mxu0 0
  %369 = vmatprep.subr.bf16.mxu0 0
  %370 = vmatpush1.bf16.msra.mxu0 0
  %371 = vmatprep.subr.bf16.mxu0 0
  %372 = vmatpush1.bf16.msra.mxu0 0
  %373 = vmatprep.subr.bf16.mxu0 0
  %374 = vmatpush1.bf16.msra.mxu0 0
  %375 = vmatprep.subr.bf16.mxu0 0
  %376 = vmatpush1.bf16.msra.mxu0 0
  %377 = vmatprep.subr.bf16.mxu0 0
  %378 = vmatpush1.bf16.msra.mxu0 0
  %379 = vmatprep.subr.bf16.mxu0 0
  %380 = vmatpush1.bf16.msra.mxu0 0
  %381 = vmatprep.subr.bf16.mxu0 0
  %382 = vmatpush1.bf16.msra.mxu0 0
  %383 = vmatprep.subr.bf16.mxu0 0
  %384 = vmatpush1.bf16.msra.mxu0 0
  %385 = vmatprep.mubr.bf16.mxu0 0
  %386 = vmatmul.mubr.bf16.gmra.mrb[0].mxu0 %v231
  %v387 = vpop.f32.mrb[0].mxu0
  %v388 = vadd.f32 %v227, %v387
  %v389 = vpop.f32.mrb[0].mxu0
  %v390 = vpop.f32.mrb[0].mxu0
  %v391 = vpop.f32.mrb[0].mxu0
  %392 = vdwg.mxu0
  %v393 = vmax.f32 %v388, 0.0
  %v394 = vld [vmem:[#allocation2 + $0xd8] sm:$0xff]
  %v395 = vld [vmem:[#allocation2 + $0xe0] sm:$0xff]
  %v396 = vld [vmem:[#allocation2 + $0xe8] sm:$0xff]
  %v397 = vld [vmem:[#allocation2 + $0xf0] sm:$0xff]
  %v398 = vld [vmem:[#allocation2 + $0xf8] sm:$0xff]
  %v399 = vld [vmem:[#allocation2 + $0x100] sm:$0xff]
  %v400 = vld [vmem:[#allocation2 + $0x108] sm:$0xff]
  %v401 = vld [vmem:[#allocation2 + $0x110] sm:$0xff]
  %v402 = vld [vmem:[#allocation2 + $0x118] sm:$0xff]
  %v403 = vpack.c.bf16 %v395, %v394
  %v404 = vpack.c.bf16 %v397, %v396
  %v405 = vpack.c.bf16 %v399, %v398
  %v406 = vpack.c.bf16 %v401, %v400
  %v407 = vpack.c.bf16 %v402, %v402
  %v409 = vsel %vm233, %v407, 0
  %411 = vmatprep.subr.bf16.mxu0 0
  %412 = vmatpush1.bf16.msra.mxu0 %v403
  %413 = vmatprep.subr.bf16.mxu0 0
  %414 = vmatpush1.bf16.msra.mxu0 %v404
  %415 = vmatprep.subr.bf16.mxu0 0
  %416 = vmatpush1.bf16.msra.mxu0 %v405
  %417 = vmatprep.subr.bf16.mxu0 0
  %418 = vmatpush1.bf16.msra.mxu0 %v406
  %419 = vmatprep.subr.bf16.mxu0 0
  %420 = vmatpush1.bf16.msra.mxu0 %v409
  %421 = vmatprep.subr.bf16.mxu0 0
  %422 = vmatpush1.bf16.msra.mxu0 0
  %423 = vmatprep.subr.bf16.mxu0 0
  %424 = vmatpush1.bf16.msra.mxu0 0
  %425 = vmatprep.subr.bf16.mxu0 0
  %426 = vmatpush1.bf16.msra.mxu0 0
  %427 = vmatprep.subr.bf16.mxu0 0
  %428 = vmatpush1.bf16.msra.mxu0 0
  %429 = vmatprep.subr.bf16.mxu0 0
  %430 = vmatpush1.bf16.msra.mxu0 0
  %431 = vmatprep.subr.bf16.mxu0 0
  %432 = vmatpush1.bf16.msra.mxu0 0
  %433 = vmatprep.subr.bf16.mxu0 0
  %434 = vmatpush1.bf16.msra.mxu0 0
  %435 = vmatprep.subr.bf16.mxu0 0
  %436 = vmatpush1.bf16.msra.mxu0 0
  %437 = vmatprep.subr.bf16.mxu0 0
  %438 = vmatpush1.bf16.msra.mxu0 0
  %439 = vmatprep.subr.bf16.mxu0 0
  %440 = vmatpush1.bf16.msra.mxu0 0
  %441 = vmatprep.subr.bf16.mxu0 0
  %442 = vmatpush1.bf16.msra.mxu0 0
  %443 = vmatprep.mubr.bf16.mxu0 0
  %444 = vmatmul.mubr.bf16.gmra.mrb[0].mxu0 %v231
  %v445 = vpop.f32.mrb[0].mxu0
  %v446 = vadd.f32 %v227, %v445
  %v447 = vpop.f32.mrb[0].mxu0
  %v448 = vpop.f32.mrb[0].mxu0
  %v449 = vpop.f32.mrb[0].mxu0
  %450 = vdwg.mxu0
  %v451 = vmax.f32 %v446, 0.0
  %452 = vrot.lane.b32.xlu0 %v451, 9
  %v453 = vpop.permute.xlu0 %452
  %v454 = vsel %vm55, %v453, 0.0
  %455 = vst [vmem:[#allocation3] sm:$0xff] %v454
  %456 = vrot.lane.b32.xlu0 %v393, 8
  %v457 = vpop.permute.xlu0 %456
  %v458 = vsel %vm69, %v457, 0.0
  %459 = vst [vmem:[#allocation3 + $0x8] sm:$0xff] %v458
  %460 = vrot.lane.b32.xlu0 %v451, 8
  %v461 = vpop.permute.xlu0 %460
  %v462 = vsel %vm69, %v461, 0.0
  %463 = vst [vmem:[#allocation3 + $0x10] sm:$0xff] %v462
  %464 = vrot.lane.b32.xlu0 %v335, 1
  %v465 = vpop.permute.xlu0 %464
  %v466 = vsel %vm89, %v465, 0.0
  %467 = vst [vmem:[#allocation3 + $0x18] sm:$0xff] %v466
  %v468 = vsel %vm99, %v277, 0.0
  %469 = vst [vmem:[#allocation3 + $0x20] sm:$0xff] %v468
  %v470 = vsel %vm99, %v335, 0.0
  %471 = vst [vmem:[#allocation3 + $0x28] sm:$0xff] %v470
  %472 = vrot.lane.b32.xlu0 %v451, 1
  %v473 = vpop.permute.xlu0 %472
  %v474 = vsel %vm89, %v473, 0.0
  %475 = vst [vmem:[#allocation3 + $0x30] sm:$0xff] %v474
  %v476 = vsel %vm99, %v393, 0.0
  %477 = vst [vmem:[#allocation3 + $0x38] sm:$0xff] %v476
  %v478 = vsel %vm99, %v451, 0.0
  %479 = vst [vmem:[#allocation3 + $0x40] sm:$0xff] %v478
  %480 = vst [vmem:[#allocation3 + $0x48] sm:$0xff] %v458
  %481 = vst [vmem:[#allocation3 + $0x50] sm:$0xff] %v462
  %482 = vrot.lane.b32.xlu0 %v393, 7
  %v483 = vpop.permute.xlu0 %482
  %v484 = vsel %vm126, %v483, 0.0
  %485 = vst [vmem:[#allocation3 + $0x58] sm:$0xff] %v484
  %486 = vst [vmem:[#allocation3 + $0x60] sm:$0xff] %v468
  %487 = vst [vmem:[#allocation3 + $0x68] sm:$0xff] %v470
  %488 = vrot.lane.b32.xlu0 %v277, 127
  %v489 = vpop.permute.xlu0 %488
  %v490 = vsel %vm140, %v489, 0.0
  %491 = vst [vmem:[#allocation3 + $0x70] sm:$0xff] %v490
  %492 = vst [vmem:[#allocation3 + $0x78] sm:$0xff] %v476
  %493 = vst [vmem:[#allocation3 + $0x80] sm:$0xff] %v478
  %494 = vrot.lane.b32.xlu0 %v393, 127
  %v495 = vpop.permute.xlu0 %494
  %v496 = vsel %vm140, %v495, 0.0
  %497 = vst [vmem:[#allocation3 + $0x88] sm:$0xff] %v496
  %498 = vst [vmem:[#allocation3 + $0x90] sm:$0xff] %v466
  %499 = vst [vmem:[#allocation3 + $0x98] sm:$0xff] %v468
  %500 = vst [vmem:[#allocation3 + $0xa0] sm:$0xff] %v470
  %501 = vst [vmem:[#allocation3 + $0xa8] sm:$0xff] %v474
  %502 = vst [vmem:[#allocation3 + $0xb0] sm:$0xff] %v476
  %503 = vst [vmem:[#allocation3 + $0xb8] sm:$0xff] %v478
  %504 = vrot.lane.b32.xlu0 %v335, 121
  %v505 = vpop.permute.xlu0 %504
  %v506 = vsel %vm169, %v505, 0.0
  %507 = vst [vmem:[#allocation3 + $0xc0] sm:$0xff] %v506
  %508 = vrot.lane.b32.xlu0 %v277, 120
  %v509 = vpop.permute.xlu0 %508
  %v510 = vsel %vm181, %v509, 0.0
  %511 = vst [vmem:[#allocation3 + $0xc8] sm:$0xff] %v510
  %512 = vrot.lane.b32.xlu0 %v335, 120
  %v513 = vpop.permute.xlu0 %512
  %v514 = vsel %vm181, %v513, 0.0
  %515 = vst [vmem:[#allocation3 + $0xd0] sm:$0xff] %v514
  %516 = vst [vmem:[#allocation3 + $0xd8] sm:$0xff] %v468
  %517 = vst [vmem:[#allocation3 + $0xe0] sm:$0xff] %v470
  %518 = vst [vmem:[#allocation3 + $0xe8] sm:$0xff] %v490
  %519 = vst [vmem:[#allocation3 + $0xf0] sm:$0xff] %v476
  %520 = vst [vmem:[#allocation3 + $0xf8] sm:$0xff] %v478
  %521 = vst [vmem:[#allocation3 + $0x100] sm:$0xff] %v496
  %522 = vst [vmem:[#allocation3 + $0x108] sm:$0xff] %v510
  %523 = vst [vmem:[#allocation3 + $0x110] sm:$0xff] %v514
  %524 = vrot.lane.b32.xlu0 %v277, 119
  %v525 = vpop.permute.xlu0 %524
  %v526 = vsel %vm205, %v525, 0.0
  %527 = vst [vmem:[#allocation3 + $0x118] sm:$0xff] %v526
  %v528 = vld [vmem:[%s4] sm:$0xf]
  %v529 = vld [vmem:[%s5] sm:$0xff]
  %v530 = vld [vmem:[#allocation3] sm:$0xff]
  %v531 = vld [vmem:[#allocation3 + $0x8] sm:$0xff]
  %v532 = vld [vmem:[#allocation3 + $0x10] sm:$0xff]
  %v533 = vld [vmem:[#allocation3 + $0x18] sm:$0xff]
  %v534 = vld [vmem:[#allocation3 + $0x20] sm:$0xff]
  %v535 = vld [vmem:[#allocation3 + $0x28] sm:$0xff]
  %v536 = vld [vmem:[#allocation3 + $0x30] sm:$0xff]
  %v537 = vld [vmem:[#allocation3 + $0x38] sm:$0xff]
  %v538 = vld [vmem:[#allocation3 + $0x40] sm:$0xff]
  %v539 = vpack.c.bf16 %v531, %v530
  %v540 = vpack.c.bf16 %v533, %v532
  %v541 = vpack.c.bf16 %v535, %v534
  %v542 = vpack.c.bf16 %v537, %v536
  %v543 = vpack.c.bf16 %v538, %v538
  %545 = vset.pattern.permute.xlu0 0
  %546 = vperm.xlu0 %545, %v529
  %v547 = vpop.permute.xlu0 %546
  %v550 = vsel %vm229, %v528, 0
  %v553 = vsel %vm233, %v543, 0
  %555 = vmatprep.subr.bf16.mxu0 0
  %556 = vmatpush1.bf16.msra.mxu0 %v539
  %557 = vmatprep.subr.bf16.mxu0 0
  %558 = vmatpush1.bf16.msra.mxu0 %v540
  %559 = vmatprep.subr.bf16.mxu0 0
  %560 = vmatpush1.bf16.msra.mxu0 %v541
  %561 = vmatprep.subr.bf16.mxu0 0
  %562 = vmatpush1.bf16.msra.mxu0 %v542
  %563 = vmatprep.subr.bf16.mxu0 0
  %564 = vmatpush1.bf16.msra.mxu0 %v553
  %565 = vmatprep.subr.bf16.mxu0 0
  %566 = vmatpush1.bf16.msra.mxu0 0
  %567 = vmatprep.subr.bf16.mxu0 0
  %568 = vmatpush1.bf16.msra.mxu0 0
  %569 = vmatprep.subr.bf16.mxu0 0
  %570 = vmatpush1.bf16.msra.mxu0 0
  %571 = vmatprep.subr.bf16.mxu0 0
  %572 = vmatpush1.bf16.msra.mxu0 0
  %573 = vmatprep.subr.bf16.mxu0 0
  %574 = vmatpush1.bf16.msra.mxu0 0
  %575 = vmatprep.subr.bf16.mxu0 0
  %576 = vmatpush1.bf16.msra.mxu0 0
  %577 = vmatprep.subr.bf16.mxu0 0
  %578 = vmatpush1.bf16.msra.mxu0 0
  %579 = vmatprep.subr.bf16.mxu0 0
  %580 = vmatpush1.bf16.msra.mxu0 0
  %581 = vmatprep.subr.bf16.mxu0 0
  %582 = vmatpush1.bf16.msra.mxu0 0
  %583 = vmatprep.subr.bf16.mxu0 0
  %584 = vmatpush1.bf16.msra.mxu0 0
  %585 = vmatprep.subr.bf16.mxu0 0
  %586 = vmatpush1.bf16.msra.mxu0 0
  %587 = vmatprep.mubr.bf16.mxu0 0
  %588 = vmatmul.mubr.bf16.gmra.mrb[0].mxu0 %v550
  %v589 = vpop.f32.mrb[0].mxu0
  %v590 = vadd.f32 %v547, %v589
  %v591 = vpop.f32.mrb[0].mxu0
  %v592 = vpop.f32.mrb[0].mxu0
  %v593 = vpop.f32.mrb[0].mxu0
  %594 = vdwg.mxu0
  %v595 = vld [vmem:[#allocation3 + $0x48] sm:$0xff]
  %v596 = vld [vmem:[#allocation3 + $0x50] sm:$0xff]
  %v597 = vld [vmem:[#allocation3 + $0x58] sm:$0xff]
  %v598 = vld [vmem:[#allocation3 + $0x60] sm:$0xff]
  %v599 = vld [vmem:[#allocation3 + $0x68] sm:$0xff]
  %v600 = vld [vmem:[#allocation3 + $0x70] sm:$0xff]
  %v601 = vld [vmem:[#allocation3 + $0x78] sm:$0xff]
  %v602 = vld [vmem:[#allocation3 + $0x80] sm:$0xff]
  %v603 = vld [vmem:[#allocation3 + $0x88] sm:$0xff]
  %v604 = vpack.c.bf16 %v596, %v595
  %v605 = vpack.c.bf16 %v598, %v597
  %v606 = vpack.c.bf16 %v600, %v599
  %v607 = vpack.c.bf16 %v602, %v601
  %v608 = vpack.c.bf16 %v603, %v603
  %v610 = vsel %vm233, %v608, 0
  %612 = vmatprep.subr.bf16.mxu0 0
  %613 = vmatpush1.bf16.msra.mxu0 %v604
  %614 = vmatprep.subr.bf16.mxu0 0
  %615 = vmatpush1.bf16.msra.mxu0 %v605
  %616 = vmatprep.subr.bf16.mxu0 0
  %617 = vmatpush1.bf16.msra.mxu0 %v606
  %618 = vmatprep.subr.bf16.mxu0 0
  %619 = vmatpush1.bf16.msra.mxu0 %v607
  %620 = vmatprep.subr.bf16.mxu0 0
  %621 = vmatpush1.bf16.msra.mxu0 %v610
  %622 = vmatprep.subr.bf16.mxu0 0
  %623 = vmatpush1.bf16.msra.mxu0 0
  %624 = vmatprep.subr.bf16.mxu0 0
  %625 = vmatpush1.bf16.msra.mxu0 0
  %626 = vmatprep.subr.bf16.mxu0 0
  %627 = vmatpush1.bf16.msra.mxu0 0
  %628 = vmatprep.subr.bf16.mxu0 0
  %629 = vmatpush1.bf16.msra.mxu0 0
  %630 = vmatprep.subr.bf16.mxu0 0
  %631 = vmatpush1.bf16.msra.mxu0 0
  %632 = vmatprep.subr.bf16.mxu0 0
  %633 = vmatpush1.bf16.msra.mxu0 0
  %634 = vmatprep.subr.bf16.mxu0 0
  %635 = vmatpush1.bf16.msra.mxu0 0
  %636 = vmatprep.subr.bf16.mxu0 0
  %637 = vmatpush1.bf16.msra.mxu0 0
  %638 = vmatprep.subr.bf16.mxu0 0
  %639 = vmatpush1.bf16.msra.mxu0 0
  %640 = vmatprep.subr.bf16.mxu0 0
  %641 = vmatpush1.bf16.msra.mxu0 0
  %642 = vmatprep.subr.bf16.mxu0 0
  %643 = vmatpush1.bf16.msra.mxu0 0
  %644 = vmatprep.mubr.bf16.mxu0 0
  %645 = vmatmul.mubr.bf16.gmra.mrb[0].mxu0 %v550
  %v646 = vpop.f32.mrb[0].mxu0
  %v647 = vadd.f32 %v547, %v646
  %v648 = vpop.f32.mrb[0].mxu0
  %v649 = vpop.f32.mrb[0].mxu0
  %v650 = vpop.f32.mrb[0].mxu0
  %651 = vdwg.mxu0
  %v652 = vld [vmem:[#allocation3 + $0x90] sm:$0xff]
  %v653 = vld [vmem:[#allocation3 + $0x98] sm:$0xff]
  %v654 = vld [vmem:[#allocation3 + $0xa0] sm:$0xff]
  %v655 = vld [vmem:[#allocation3 + $0xa8] sm:$0xff]
  %v656 = vld [vmem:[#allocation3 + $0xb0] sm:$0xff]
  %v657 = vld [vmem:[#allocation3 + $0xb8] sm:$0xff]
  %v658 = vld [vmem:[#allocation3 + $0xc0] sm:$0xff]
  %v659 = vld [vmem:[#allocation3 + $0xc8] sm:$0xff]
  %v660 = vld [vmem:[#allocation3 + $0xd0] sm:$0xff]
  %v661 = vpack.c.bf16 %v653, %v652
  %v662 = vpack.c.bf16 %v655, %v654
  %v663 = vpack.c.bf16 %v657, %v656
  %v664 = vpack.c.bf16 %v659, %v658
  %v665 = vpack.c.bf16 %v660, %v660
  %v667 = vsel %vm233, %v665, 0
  %669 = vmatprep.subr.bf16.mxu0 0
  %670 = vmatpush1.bf16.msra.mxu0 %v661
  %671 = vmatprep.subr.bf16.mxu0 0
  %672 = vmatpush1.bf16.msra.mxu0 %v662
  %673 = vmatprep.subr.bf16.mxu0 0
  %674 = vmatpush1.bf16.msra.mxu0 %v663
  %675 = vmatprep.subr.bf16.mxu0 0
  %676 = vmatpush1.bf16.msra.mxu0 %v664
  %677 = vmatprep.subr.bf16.mxu0 0
  %678 = vmatpush1.bf16.msra.mxu0 %v667
  %679 = vmatprep.subr.bf16.mxu0 0
  %680 = vmatpush1.bf16.msra.mxu0 0
  %681 = vmatprep.subr.bf16.mxu0 0
  %682 = vmatpush1.bf16.msra.mxu0 0
  %683 = vmatprep.subr.bf16.mxu0 0
  %684 = vmatpush1.bf16.msra.mxu0 0
  %685 = vmatprep.subr.bf16.mxu0 0
  %686 = vmatpush1.bf16.msra.mxu0 0
  %687 = vmatprep.subr.bf16.mxu0 0
  %688 = vmatpush1.bf16.msra.mxu0 0
  %689 = vmatprep.subr.bf16.mxu0 0
  %690 = vmatpush1.bf16.msra.mxu0 0
  %691 = vmatprep.subr.bf16.mxu0 0
  %692 = vmatpush1.bf16.msra.mxu0 0
  %693 = vmatprep.subr.bf16.mxu0 0
  %694 = vmatpush1.bf16.msra.mxu0 0
  %695 = vmatprep.subr.bf16.mxu0 0
  %696 = vmatpush1.bf16.msra.mxu0 0
  %697 = vmatprep.subr.bf16.mxu0 0
  %698 = vmatpush1.bf16.msra.mxu0 0
  %699 = vmatprep.subr.bf16.mxu0 0
  %700 = vmatpush1.bf16.msra.mxu0 0
  %701 = vmatprep.mubr.bf16.mxu0 0
  %702 = vmatmul.mubr.bf16.gmra.mrb[0].mxu0 %v550
  %v703 = vpop.f32.mrb[0].mxu0
  %v704 = vadd.f32 %v547, %v703
  %v705 = vpop.f32.mrb[0].mxu0
  %v706 = vpop.f32.mrb[0].mxu0
  %v707 = vpop.f32.mrb[0].mxu0
  %708 = vdwg.mxu0
  %v709 = vld [vmem:[#allocation3 + $0xd8] sm:$0xff]
  %v710 = vld [vmem:[#allocation3 + $0xe0] sm:$0xff]
  %v711 = vld [vmem:[#allocation3 + $0xe8] sm:$0xff]
  %v712 = vld [vmem:[#allocation3 + $0xf0] sm:$0xff]
  %v713 = vld [vmem:[#allocation3 + $0xf8] sm:$0xff]
  %v714 = vld [vmem:[#allocation3 + $0x100] sm:$0xff]
  %v715 = vld [vmem:[#allocation3 + $0x108] sm:$0xff]
  %v716 = vld [vmem:[#allocation3 + $0x110] sm:$0xff]
  %v717 = vld [vmem:[#allocation3 + $0x118] sm:$0xff]
  %v718 = vpack.c.bf16 %v710, %v709
  %v719 = vpack.c.bf16 %v712, %v711
  %v720 = vpack.c.bf16 %v714, %v713
  %v721 = vpack.c.bf16 %v716, %v715
  %v722 = vpack.c.bf16 %v717, %v717
  %v724 = vsel %vm233, %v722, 0
  %726 = vmatprep.subr.bf16.mxu0 0
  %727 = vmatpush1.bf16.msra.mxu0 %v718
  %728 = vmatprep.subr.bf16.mxu0 0
  %729 = vmatpush1.bf16.msra.mxu0 %v719
  %730 = vmatprep.subr.bf16.mxu0 0
  %731 = vmatpush1.bf16.msra.mxu0 %v720
  %732 = vmatprep.subr.bf16.mxu0 0
  %733 = vmatpush1.bf16.msra.mxu0 %v721
  %734 = vmatprep.subr.bf16.mxu0 0
  %735 = vmatpush1.bf16.msra.mxu0 %v724
  %736 = vmatprep.subr.bf16.mxu0 0
  %737 = vmatpush1.bf16.msra.mxu0 0
  %738 = vmatprep.subr.bf16.mxu0 0
  %739 = vmatpush1.bf16.msra.mxu0 0
  %740 = vmatprep.subr.bf16.mxu0 0
  %741 = vmatpush1.bf16.msra.mxu0 0
  %742 = vmatprep.subr.bf16.mxu0 0
  %743 = vmatpush1.bf16.msra.mxu0 0
  %744 = vmatprep.subr.bf16.mxu0 0
  %745 = vmatpush1.bf16.msra.mxu0 0
  %746 = vmatprep.subr.bf16.mxu0 0
  %747 = vmatpush1.bf16.msra.mxu0 0
  %748 = vmatprep.subr.bf16.mxu0 0
  %749 = vmatpush1.bf16.msra.mxu0 0
  %750 = vmatprep.subr.bf16.mxu0 0
  %751 = vmatpush1.bf16.msra.mxu0 0
  %752 = vmatprep.subr.bf16.mxu0 0
  %753 = vmatpush1.bf16.msra.mxu0 0
  %754 = vmatprep.subr.bf16.mxu0 0
  %755 = vmatpush1.bf16.msra.mxu0 0
  %756 = vmatprep.subr.bf16.mxu0 0
  %757 = vmatpush1.bf16.msra.mxu0 0
  %758 = vmatprep.mubr.bf16.mxu0 0
  %759 = vmatmul.mubr.bf16.gmra.mrb[0].mxu0 %v550
  %v760 = vpop.f32.mrb[0].mxu0
  %v761 = vadd.f32 %v547, %v760
  %v762 = vpop.f32.mrb[0].mxu0
  %v763 = vpop.f32.mrb[0].mxu0
  %v764 = vpop.f32.mrb[0].mxu0
  %765 = vdwg.mxu0
  %v766 = vmax.f32 %v590, %v647
  %vm767 = vcmp.ge.f32.partialorder %v590, %v647
  %v768 = vsel %vm767, 0, 1
  %v769 = vmax.f32 %v704, %v761
  %vm770 = vcmp.ge.f32.partialorder %v704, %v761
  %v771 = vsel %vm770, 0, 1
  %vm772 = vcmp.ge.f32.partialorder %v766, %v769
  %v773 = vmax.f32 %v766, %v769
  %v774 = vsel %vm772, 0, 1
  %v775 = vsel %vm772, %v768, %v771
  %776 = vst [vmem:[%s6] sm:$0xff] %v773
  %v777 = vmul.u32 %v774, 16
  %v778 = vlaneseq
  %v779 = vshrl.u32 %v778, 7
  %v780 = vsub.s32 0, %v779
  %v781 = vrot.slane %v28, %v780
  %v782 = vadd.s32 %v781, %v777
  %v783 = vadd.s32 %v782, %v775
  %784 = vst [vmem:[%s7] sm:$0xff] %v783
  // Predicated region
  $region26: #{segnet_encoder_forward.2} parent=0 // pred_check
    _
  $region27: #{segnet_encoder_forward.2} parent=0 // pred_check_branch
    %786 = sbr.rel (0) target = $region29
  $region28: #{segnet_encoder_forward.2} parent=0 // pred_region
    _
  $region29: #{segnet_encoder_forward.2} parent=0 // pred_fallthru
    _
  // Predicated region
  $region30: #{segnet_encoder_forward.2} parent=0 // pred_check
    _
  $region31: #{segnet_encoder_forward.2} parent=0 // pred_check_branch
    %788 = sbr.rel (0) target = $region33
  $region32: #{segnet_encoder_forward.2} parent=0 // pred_region
    _
  $region33: #{segnet_encoder_forward.2} parent=0 // pred_fallthru
    _
  // Predicated region
  $region34: #{segnet_encoder_forward.2} parent=0 // pred_check
    _
  $region35: #{segnet_encoder_forward.2} parent=0 // pred_check_branch
    %790 = sbr.rel (0) target = $region37
  $region36: #{segnet_encoder_forward.2} parent=0 // pred_region
    _
  $region37: #{segnet_encoder_forward.2} parent=0 // pred_fallthru
    _
  // Predicated region
  $region38: #{segnet_encoder_forward.2} parent=0 // pred_check
    _
  $region39: #{segnet_encoder_forward.2} parent=0 // pred_check_branch
    %792 = sbr.rel (0) target = $region41
  $region40: #{segnet_encoder_forward.2} parent=0 // pred_region
    _
  $region41: #{segnet_encoder_forward.2} parent=0 // pred_fallthru
    _

// kernel: segnet_encoder_forward.3
$region0: #{segnet_encoder_forward.3}
  #allocation0 [shape = 'u32[]', space=smem, size = 0x4, offset = 0x4, fixed_abs, tag = 'smem constant byte address 0x4 - core index']
  #allocation1 [shape = 'u32[144,128]{1,0:T(1,128)}', space=vmem, size = 0x12000, scoped, tag = 'internal scratch']
  #allocation2 [shape = 'f32[288,128]{1,0:T(8,128)}', space=vmem, size = 0x24000, scoped, tag = 'scratch operand']
  #allocation3 [shape = 'f32[576,128]{1,0:T(8,128)}', space=vmem, size = 0x48000, scoped, tag = 'scratch operand']
  %s0 = inlined_call_operand.vmem [shape: s32[8,128], index: 0, kind: input, shape index: {}]
  %s1 = inlined_call_operand.vmem [shape: f32[1,4,8,128], index: 1, kind: input, shape index: {}]
  %s2 = inlined_call_operand.vmem [shape: bf16[16,72], index: 2, kind: input, shape index: {}]
  %s3 = inlined_call_operand.vmem [shape: f32[16,1], index: 3, kind: input, shape index: {}]
  %s4 = inlined_call_operand.vmem [shape: bf16[16,144], index: 4, kind: input, shape index: {}]
  %s5 = inlined_call_operand.vmem [shape: f32[16,1], index: 5, kind: input, shape index: {}]
  %s6 = inlined_call_operand.vmem [shape: f32[1,16,128], index: 6, kind: output, shape index: {0}]
  %s7 = inlined_call_operand.vmem [shape: s32[1,16,128], index: 7, kind: output, shape index: {1}]
  %8 = xla_tuple %s6, %s7
  %s9 = sld [smem:[#allocation0]]
  $region42: #{segnet_encoder_forward.3} parent=0
    _
  %s11 = ssub.s32 1, %s9
  %s12 = scalar_select 0, %s11, %s9
  // Predicated region
  $region2: #{segnet_encoder_forward.3} parent=0 // pred_check
    _
  $region3: #{segnet_encoder_forward.3} parent=0 // pred_check_branch
    %14 = sbr.rel (0) target = $region5
  $region4: #{segnet_encoder_forward.3} parent=0 // pred_region
    _
  $region5: #{segnet_encoder_forward.3} parent=0 // pred_fallthru
    _
  // Predicated region
  $region6: #{segnet_encoder_forward.3} parent=0 // pred_check
    _
  $region7: #{segnet_encoder_forward.3} parent=0 // pred_check_branch
    %16 = sbr.rel (0) target = $region9
  $region8: #{segnet_encoder_forward.3} parent=0 // pred_region
    _
  $region9: #{segnet_encoder_forward.3} parent=0 // pred_fallthru
    _
  // Predicated region
  $region10: #{segnet_encoder_forward.3} parent=0 // pred_check
    _
  $region11: #{segnet_encoder_forward.3} parent=0 // pred_check_branch
    %18 = sbr.rel (0) target = $region13
  $region12: #{segnet_encoder_forward.3} parent=0 // pred_region
    _
  $region13: #{segnet_encoder_forward.3} parent=0 // pred_fallthru
    _
  // Predicated region
  $region14: #{segnet_encoder_forward.3} parent=0 // pred_check
    _
  $region15: #{segnet_encoder_forward.3} parent=0 // pred_check_branch
    %20 = sbr.rel (0) target = $region17
  $region16: #{segnet_encoder_forward.3} parent=0 // pred_region
    _
  $region17: #{segnet_encoder_forward.3} parent=0 // pred_fallthru
    _
  // Predicated region
  $region18: #{segnet_encoder_forward.3} parent=0 // pred_check
    _
  $region19: #{segnet_encoder_forward.3} parent=0 // pred_check_branch
    %22 = sbr.rel (0) target = $region21
  $region20: #{segnet_encoder_forward.3} parent=0 // pred_region
    _
  $region21: #{segnet_encoder_forward.3} parent=0 // pred_fallthru
    _
  // Predicated region
  $region22: #{segnet_encoder_forward.3} parent=0 // pred_check
    _
  $region23: #{segnet_encoder_forward.3} parent=0 // pred_check_branch
    %24 = sbr.rel (0) target = $region25
  $region24: #{segnet_encoder_forward.3} parent=0 // pred_region
    _
  $region25: #{segnet_encoder_forward.3} parent=0 // pred_fallthru
    _
  %v26 = vld [vmem:[%s0] sm:$0x1]
  %v27 = vld [vmem:[%s0 + $0x1] sm:$0x1]
  %v28 = vld [vmem:[%s0 + $0x2] sm:$0x1]
  %v29 = vld [vmem:[%s0 + $0x3] sm:$0x1]
  %vm30 = vcmp.gt.s32.totalorder %v29, 0
  %v31 = vld [vmem:[%s1] sm:$0xff]
  %s32 = scalar_lea.vmem %s1, 8
  %v33 = vld [vmem:[%s32] sm:$0xff]
  %s34 = scalar_lea.vmem %s1, 16
  %v35 = vld [vmem:[%s34] sm:$0xff]
  %s36 = scalar_lea.vmem %s1, 24
  %v37 = vld [vmem:[%s36] sm:$0xff]
  %38 = vrot.lane.b32.xlu0 %v37, 5
  %v39 = vpop.permute.xlu0 %38
  %v40 = vadd.s32 %v26, 4294967295
  %vm41 = vcmp.ge.s32.totalorder %v40, 0
  %vm42 = vmand %vm30, %vm41
  %vm43 = vcmp.lt.s32.totalorder %v40, 4
  %vm44 = vmand %vm42, %vm43
  %v45 = vadd.s32 %v27, 4294967295
  %vm46 = vcmp.ge.s32.totalorder %v45, 0
  %vm47 = vmand %vm44, %vm46
  %vm48 = vcmp.lt.s32.totalorder %v45, 4
  %vm49 = vmand %vm47, %vm48
  %v50 = vsel %vm49, 1, 0
  %v51 = vlaneseq
  %v52 = vshrl.u32 %v51, 7
  %v53 = vsub.s32 0, %v52
  %v54 = vrot.slane %v50, %v53
  %vm55 = vcmp.eq.s32.totalorder %v54, 1
  %v56 = vsel %vm55, %v39, 0.0
  %57 = vst [vmem:[#allocation2] sm:$0xff] %v56
  %58 = vrot.lane.b32.xlu0 %v35, 4
  %v59 = vpop.permute.xlu0 %58
  %vm60 = vcmp.ge.s32.totalorder %v27, 0
  %vm61 = vmand %vm44, %vm60
  %vm62 = vcmp.lt.s32.totalorder %v27, 4
  %vm63 = vmand %vm61, %vm62
  %v64 = vsel %vm63, 1, 0
  %v65 = vlaneseq
  %v66 = vshrl.u32 %v65, 7
  %v67 = vsub.s32 0, %v66
  %v68 = vrot.slane %v64, %v67
  %vm69 = vcmp.eq.s32.totalorder %v68, 1
  %v70 = vsel %vm69, %v59, 0.0
  %71 = vst [vmem:[#allocation2 + $0x8] sm:$0xff] %v70
  %72 = vrot.lane.b32.xlu0 %v37, 4
  %v73 = vpop.permute.xlu0 %72
  %v74 = vsel %vm69, %v73, 0.0
  %75 = vst [vmem:[#allocation2 + $0x10] sm:$0xff] %v74
  %76 = vrot.lane.b32.xlu0 %v33, 1
  %v77 = vpop.permute.xlu0 %76
  %vm78 = vcmp.ge.s32.totalorder %v26, 0
  %vm79 = vmand %vm30, %vm78
  %vm80 = vcmp.lt.s32.totalorder %v26, 4
  %vm81 = vmand %vm79, %vm80
  %vm82 = vmand %vm81, %vm46
  %vm83 = vmand %vm82, %vm48
  %v84 = vsel %vm83, 1, 0
  %v85 = vlaneseq
  %v86 = vshrl.u32 %v85, 7
  %v87 = vsub.s32 0, %v86
  %v88 = vrot.slane %v84, %v87
  %vm89 = vcmp.eq.s32.totalorder %v88, 1
  %v90 = vsel %vm89, %v77, 0.0
  %91 = vst [vmem:[#allocation2 + $0x18] sm:$0xff] %v90
  %vm92 = vmand %vm81, %vm60
  %vm93 = vmand %vm92, %vm62
  %v94 = vsel %vm93, 1, 0
  %v95 = vlaneseq
  %v96 = vshrl.u32 %v95, 7
  %v97 = vsub.s32 0, %v96
  %v98 = vrot.slane %v94, %v97
  %vm99 = vcmp.eq.s32.totalorder %v98, 1
  %v100 = vsel %vm99, %v31, 0.0
  %101 = vst [vmem:[#allocation2 + $0x20] sm:$0xff] %v100
  %v102 = vsel %vm99, %v33, 0.0
  %103 = vst [vmem:[#allocation2 + $0x28] sm:$0xff] %v102
  %104 = vrot.lane.b32.xlu0 %v37, 1
  %v105 = vpop.permute.xlu0 %104
  %v106 = vsel %vm89, %v105, 0.0
  %107 = vst [vmem:[#allocation2 + $0x30] sm:$0xff] %v106
  %v108 = vsel %vm99, %v35, 0.0
  %109 = vst [vmem:[#allocation2 + $0x38] sm:$0xff] %v108
  %v110 = vsel %vm99, %v37, 0.0
  %111 = vst [vmem:[#allocation2 + $0x40] sm:$0xff] %v110
  %112 = vst [vmem:[#allocation2 + $0x48] sm:$0xff] %v70
  %113 = vst [vmem:[#allocation2 + $0x50] sm:$0xff] %v74
  %114 = vrot.lane.b32.xlu0 %v35, 3
  %v115 = vpop.permute.xlu0 %114
  %v116 = vadd.s32 %v27, 1
  %vm117 = vcmp.ge.s32.totalorder %v116, 0
  %vm118 = vmand %vm44, %vm117
  %vm119 = vcmp.lt.s32.totalorder %v116, 4
  %vm120 = vmand %vm118, %vm119
  %v121 = vsel %vm120, 1, 0
  %v122 = vlaneseq
  %v123 = vshrl.u32 %v122, 7
  %v124 = vsub.s32 0, %v123
  %v125 = vrot.slane %v121, %v124
  %vm126 = vcmp.eq.s32.totalorder %v125, 1
  %v127 = vsel %vm126, %v115, 0.0
  %128 = vst [vmem:[#allocation2 + $0x58] sm:$0xff] %v127
  %129 = vst [vmem:[#allocation2 + $0x60] sm:$0xff] %v100
  %130 = vst [vmem:[#allocation2 + $0x68] sm:$0xff] %v102
  %131 = vrot.lane.b32.xlu0 %v31, 127
  %v132 = vpop.permute.xlu0 %131
  %vm133 = vmand %vm81, %vm117
  %vm134 = vmand %vm133, %vm119
  %v135 = vsel %vm134, 1, 0
  %v136 = vlaneseq
  %v137 = vshrl.u32 %v136, 7
  %v138 = vsub.s32 0, %v137
  %v139 = vrot.slane %v135, %v138
  %vm140 = vcmp.eq.s32.totalorder %v139, 1
  %v141 = vsel %vm140, %v132, 0.0
  %142 = vst [vmem:[#allocation2 + $0x70] sm:$0xff] %v141
  %143 = vst [vmem:[#allocation2 + $0x78] sm:$0xff] %v108
  %144 = vst [vmem:[#allocation2 + $0x80] sm:$0xff] %v110
  %145 = vrot.lane.b32.xlu0 %v35, 127
  %v146 = vpop.permute.xlu0 %145
  %v147 = vsel %vm140, %v146, 0.0
  %148 = vst [vmem:[#allocation2 + $0x88] sm:$0xff] %v147
  %149 = vst [vmem:[#allocation2 + $0x90] sm:$0xff] %v90
  %150 = vst [vmem:[#allocation2 + $0x98] sm:$0xff] %v100
  %151 = vst [vmem:[#allocation2 + $0xa0] sm:$0xff] %v102
  %152 = vst [vmem:[#allocation2 + $0xa8] sm:$0xff] %v106
  %153 = vst [vmem:[#allocation2 + $0xb0] sm:$0xff] %v108
  %154 = vst [vmem:[#allocation2 + $0xb8] sm:$0xff] %v110
  %155 = vrot.lane.b32.xlu0 %v33, 125
  %v156 = vpop.permute.xlu0 %155
  %v157 = vadd.s32 %v26, 1
  %vm158 = vcmp.ge.s32.totalorder %v157, 0
  %vm159 = vmand %vm30, %vm158
  %vm160 = vcmp.lt.s32.totalorder %v157, 4
  %vm161 = vmand %vm159, %vm160
  %vm162 = vmand %vm161, %vm46
  %vm163 = vmand %vm162, %vm48
  %v164 = vsel %vm163, 1, 0
  %v165 = vlaneseq
  %v166 = vshrl.u32 %v165, 7
  %v167 = vsub.s32 0, %v166
  %v168 = vrot.slane %v164, %v167
  %vm169 = vcmp.eq.s32.totalorder %v168, 1
  %v170 = vsel %vm169, %v156, 0.0
  %171 = vst [vmem:[#allocation2 + $0xc0] sm:$0xff] %v170
  %172 = vrot.lane.b32.xlu0 %v31, 124
  %v173 = vpop.permute.xlu0 %172
  %vm174 = vmand %vm161, %vm60
  %vm175 = vmand %vm174, %vm62
  %v176 = vsel %vm175, 1, 0
  %v177 = vlaneseq
  %v178 = vshrl.u32 %v177, 7
  %v179 = vsub.s32 0, %v178
  %v180 = vrot.slane %v176, %v179
  %vm181 = vcmp.eq.s32.totalorder %v180, 1
  %v182 = vsel %vm181, %v173, 0.0
  %183 = vst [vmem:[#allocation2 + $0xc8] sm:$0xff] %v182
  %184 = vrot.lane.b32.xlu0 %v33, 124
  %v185 = vpop.permute.xlu0 %184
  %v186 = vsel %vm181, %v185, 0.0
  %187 = vst [vmem:[#allocation2 + $0xd0] sm:$0xff] %v186
  %188 = vst [vmem:[#allocation2 + $0xd8] sm:$0xff] %v100
  %189 = vst [vmem:[#allocation2 + $0xe0] sm:$0xff] %v102
  %190 = vst [vmem:[#allocation2 + $0xe8] sm:$0xff] %v141
  %191 = vst [vmem:[#allocation2 + $0xf0] sm:$0xff] %v108
  %192 = vst [vmem:[#allocation2 + $0xf8] sm:$0xff] %v110
  %193 = vst [vmem:[#allocation2 + $0x100] sm:$0xff] %v147
  %194 = vst [vmem:[#allocation2 + $0x108] sm:$0xff] %v182
  %195 = vst [vmem:[#allocation2 + $0x110] sm:$0xff] %v186
  %196 = vrot.lane.b32.xlu0 %v31, 123
  %v197 = vpop.permute.xlu0 %196
  %vm198 = vmand %vm161, %vm117
  %vm199 = vmand %vm198, %vm119
  %v200 = vsel %vm199, 1, 0
  %v201 = vlaneseq
  %v202 = vshrl.u32 %v201, 7
  %v203 = vsub.s32 0, %v202
  %v204 = vrot.slane %v200, %v203
  %vm205 = vcmp.eq.s32.totalorder %v204, 1
  %v206 = vsel %vm205, %v197, 0.0
  %207 = vst [vmem:[#allocation2 + $0x118] sm:$0xff] %v206
  %v208 = vld [vmem:[%s2] sm:$0xf]
  %v209 = vld [vmem:[%s2 + $0x4] sm:$0xf]
  %v210 = vld [vmem:[%s3] sm:$0xff]
  %v211 = vld [vmem:[%s3 + $0x8] sm:$0xff]
  %v212 = vld [vmem:[#allocation2] sm:$0xff]
  %v213 = vld [vmem:[#allocation2 + $0x8] sm:$0xff]
  %v214 = vld [vmem:[#allocation2 + $0x10] sm:$0xff]
  %v215 = vld [vmem:[#allocation2 + $0x18] sm:$0xff]
  %v216 = vld [vmem:[#allocation2 + $0x20] sm:$0xff]
  %v217 = vld [vmem:[#allocation2 + $0x28] sm:$0xff]
  %v218 = vld [vmem:[#allocation2 + $0x30] sm:$0xff]
  %v219 = vld [vmem:[#allocation2 + $0x38] sm:$0xff]
  %v220 = vld [vmem:[#allocation2 + $0x40] sm:$0xff]
  %v221 = vpack.c.bf16 %v213, %v212
  %v222 = vpack.c.bf16 %v215, %v214
  %v223 = vpack.c.bf16 %v217, %v216
  %v224 = vpack.c.bf16 %v219, %v218
  %v225 = vpack.c.bf16 %v220, %v220
  %227 = vset.pattern.permute.xlu0 0
  %228 = vperm.xlu0 %227, %v210
  %v229 = vpop.permute.xlu0 %228
  %232 = vset.pattern.permute.xlu0 0
  %233 = vperm.xlu0 %232, %v211
  %v234 = vpop.permute.xlu0 %233
  %v238 = vunpack.c.l.b16 %v208
  %v239 = vunpack.c.l.b16 %v209
  %v240 = vpack.c.b16 %v239, %v238
  %vm241 = vcmask 588800
  %v243 = vsel %vm241, %v240, 0
  %vm245 = vcmask 1043456
  %v247 = vsel %vm245, %v225, 0
  %249 = vmatprep.subr.bf16.mxu0 0
  %250 = vmatpush1.bf16.msra.mxu0 %v221
  %251 = vmatprep.subr.bf16.mxu0 0
  %252 = vmatpush1.bf16.msra.mxu0 %v222
  %253 = vmatprep.subr.bf16.mxu0 0
  %254 = vmatpush1.bf16.msra.mxu0 %v223
  %255 = vmatprep.subr.bf16.mxu0 0
  %256 = vmatpush1.bf16.msra.mxu0 %v224
  %257 = vmatprep.subr.bf16.mxu0 0
  %258 = vmatpush1.bf16.msra.mxu0 %v247
  %259 = vmatprep.subr.bf16.mxu0 0
  %260 = vmatpush1.bf16.msra.mxu0 0
  %261 = vmatprep.subr.bf16.mxu0 0
  %262 = vmatpush1.bf16.msra.mxu0 0
  %263 = vmatprep.subr.bf16.mxu0 0
  %264 = vmatpush1.bf16.msra.mxu0 0
  %265 = vmatprep.subr.bf16.mxu0 0
  %266 = vmatpush1.bf16.msra.mxu0 0
  %267 = vmatprep.subr.bf16.mxu0 0
  %268 = vmatpush1.bf16.msra.mxu0 0
  %269 = vmatprep.subr.bf16.mxu0 0
  %270 = vmatpush1.bf16.msra.mxu0 0
  %271 = vmatprep.subr.bf16.mxu0 0
  %272 = vmatpush1.bf16.msra.mxu0 0
  %273 = vmatprep.subr.bf16.mxu0 0
  %274 = vmatpush1.bf16.msra.mxu0 0
  %275 = vmatprep.subr.bf16.mxu0 0
  %276 = vmatpush1.bf16.msra.mxu0 0
  %277 = vmatprep.subr.bf16.mxu0 0
  %278 = vmatpush1.bf16.msra.mxu0 0
  %279 = vmatprep.subr.bf16.mxu0 0
  %280 = vmatpush1.bf16.msra.mxu0 0
  %281 = vmatprep.mubr.bf16.mxu0 0
  %282 = vmatmul.mubr.bf16.gmra.mrb[0].mxu0 %v243
  %v283 = vpop.f32.mrb[0].mxu0
  %v284 = vadd.f32 %v229, %v283
  %v285 = vpop.f32.mrb[0].mxu0
  %v286 = vpop.f32.mrb[0].mxu0
  %v287 = vadd.f32 %v234, %v286
  %v288 = vpop.f32.mrb[0].mxu0
  %289 = vdwg.mxu0
  %v290 = vmax.f32 %v284, 0.0
  %v291 = vmax.f32 %v287, 0.0
  %v292 = vld [vmem:[#allocation2 + $0x48] sm:$0xff]
  %v293 = vld [vmem:[#allocation2 + $0x50] sm:$0xff]
  %v294 = vld [vmem:[#allocation2 + $0x58] sm:$0xff]
  %v295 = vld [vmem:[#allocation2 + $0x60] sm:$0xff]
  %v296 = vld [vmem:[#allocation2 + $0x68] sm:$0xff]
  %v297 = vld [vmem:[#allocation2 + $0x70] sm:$0xff]
  %v298 = vld [vmem:[#allocation2 + $0x78] sm:$0xff]
  %v299 = vld [vmem:[#allocation2 + $0x80] sm:$0xff]
  %v300 = vld [vmem:[#allocation2 + $0x88] sm:$0xff]
  %v301 = vpack.c.bf16 %v293, %v292
  %v302 = vpack.c.bf16 %v295, %v294
  %v303 = vpack.c.bf16 %v297, %v296
  %v304 = vpack.c.bf16 %v299, %v298
  %v305 = vpack.c.bf16 %v300, %v300
  %v307 = vsel %vm245, %v305, 0
  %309 = vmatprep.subr.bf16.mxu0 0
  %310 = vmatpush1.bf16.msra.mxu0 %v301
  %311 = vmatprep.subr.bf16.mxu0 0
  %312 = vmatpush1.bf16.msra.mxu0 %v302
  %313 = vmatprep.subr.bf16.mxu0 0
  %314 = vmatpush1.bf16.msra.mxu0 %v303
  %315 = vmatprep.subr.bf16.mxu0 0
  %316 = vmatpush1.bf16.msra.mxu0 %v304
  %317 = vmatprep.subr.bf16.mxu0 0
  %318 = vmatpush1.bf16.msra.mxu0 %v307
  %319 = vmatprep.subr.bf16.mxu0 0
  %320 = vmatpush1.bf16.msra.mxu0 0
  %321 = vmatprep.subr.bf16.mxu0 0
  %322 = vmatpush1.bf16.msra.mxu0 0
  %323 = vmatprep.subr.bf16.mxu0 0
  %324 = vmatpush1.bf16.msra.mxu0 0
  %325 = vmatprep.subr.bf16.mxu0 0
  %326 = vmatpush1.bf16.msra.mxu0 0
  %327 = vmatprep.subr.bf16.mxu0 0
  %328 = vmatpush1.bf16.msra.mxu0 0
  %329 = vmatprep.subr.bf16.mxu0 0
  %330 = vmatpush1.bf16.msra.mxu0 0
  %331 = vmatprep.subr.bf16.mxu0 0
  %332 = vmatpush1.bf16.msra.mxu0 0
  %333 = vmatprep.subr.bf16.mxu0 0
  %334 = vmatpush1.bf16.msra.mxu0 0
  %335 = vmatprep.subr.bf16.mxu0 0
  %336 = vmatpush1.bf16.msra.mxu0 0
  %337 = vmatprep.subr.bf16.mxu0 0
  %338 = vmatpush1.bf16.msra.mxu0 0
  %339 = vmatprep.subr.bf16.mxu0 0
  %340 = vmatpush1.bf16.msra.mxu0 0
  %341 = vmatprep.mubr.bf16.mxu0 0
  %342 = vmatmul.mubr.bf16.gmra.mrb[0].mxu0 %v243
  %v343 = vpop.f32.mrb[0].mxu0
  %v344 = vadd.f32 %v229, %v343
  %v345 = vpop.f32.mrb[0].mxu0
  %v346 = vpop.f32.mrb[0].mxu0
  %v347 = vadd.f32 %v234, %v346
  %v348 = vpop.f32.mrb[0].mxu0
  %349 = vdwg.mxu0
  %v350 = vmax.f32 %v344, 0.0
  %v351 = vmax.f32 %v347, 0.0
  %v352 = vld [vmem:[#allocation2 + $0x90] sm:$0xff]
  %v353 = vld [vmem:[#allocation2 + $0x98] sm:$0xff]
  %v354 = vld [vmem:[#allocation2 + $0xa0] sm:$0xff]
  %v355 = vld [vmem:[#allocation2 + $0xa8] sm:$0xff]
  %v356 = vld [vmem:[#allocation2 + $0xb0] sm:$0xff]
  %v357 = vld [vmem:[#allocation2 + $0xb8] sm:$0xff]
  %v358 = vld [vmem:[#allocation2 + $0xc0] sm:$0xff]
  %v359 = vld [vmem:[#allocation2 + $0xc8] sm:$0xff]
  %v360 = vld [vmem:[#allocation2 + $0xd0] sm:$0xff]
  %v361 = vpack.c.bf16 %v353, %v352
  %v362 = vpack.c.bf16 %v355, %v354
  %v363 = vpack.c.bf16 %v357, %v356
  %v364 = vpack.c.bf16 %v359, %v358
  %v365 = vpack.c.bf16 %v360, %v360
  %v367 = vsel %vm245, %v365, 0
  %369 = vmatprep.subr.bf16.mxu0 0
  %370 = vmatpush1.bf16.msra.mxu0 %v361
  %371 = vmatprep.subr.bf16.mxu0 0
  %372 = vmatpush1.bf16.msra.mxu0 %v362
  %373 = vmatprep.subr.bf16.mxu0 0
  %374 = vmatpush1.bf16.msra.mxu0 %v363
  %375 = vmatprep.subr.bf16.mxu0 0
  %376 = vmatpush1.bf16.msra.mxu0 %v364
  %377 = vmatprep.subr.bf16.mxu0 0
  %378 = vmatpush1.bf16.msra.mxu0 %v367
  %379 = vmatprep.subr.bf16.mxu0 0
  %380 = vmatpush1.bf16.msra.mxu0 0
  %381 = vmatprep.subr.bf16.mxu0 0
  %382 = vmatpush1.bf16.msra.mxu0 0
  %383 = vmatprep.subr.bf16.mxu0 0
  %384 = vmatpush1.bf16.msra.mxu0 0
  %385 = vmatprep.subr.bf16.mxu0 0
  %386 = vmatpush1.bf16.msra.mxu0 0
  %387 = vmatprep.subr.bf16.mxu0 0
  %388 = vmatpush1.bf16.msra.mxu0 0
  %389 = vmatprep.subr.bf16.mxu0 0
  %390 = vmatpush1.bf16.msra.mxu0 0
  %391 = vmatprep.subr.bf16.mxu0 0
  %392 = vmatpush1.bf16.msra.mxu0 0
  %393 = vmatprep.subr.bf16.mxu0 0
  %394 = vmatpush1.bf16.msra.mxu0 0
  %395 = vmatprep.subr.bf16.mxu0 0
  %396 = vmatpush1.bf16.msra.mxu0 0
  %397 = vmatprep.subr.bf16.mxu0 0
  %398 = vmatpush1.bf16.msra.mxu0 0
  %399 = vmatprep.subr.bf16.mxu0 0
  %400 = vmatpush1.bf16.msra.mxu0 0
  %401 = vmatprep.mubr.bf16.mxu0 0
  %402 = vmatmul.mubr.bf16.gmra.mrb[0].mxu0 %v243
  %v403 = vpop.f32.mrb[0].mxu0
  %v404 = vadd.f32 %v229, %v403
  %v405 = vpop.f32.mrb[0].mxu0
  %v406 = vpop.f32.mrb[0].mxu0
  %v407 = vadd.f32 %v234, %v406
  %v408 = vpop.f32.mrb[0].mxu0
  %409 = vdwg.mxu0
  %v410 = vmax.f32 %v404, 0.0
  %v411 = vmax.f32 %v407, 0.0
  %v412 = vld [vmem:[#allocation2 + $0xd8] sm:$0xff]
  %v413 = vld [vmem:[#allocation2 + $0xe0] sm:$0xff]
  %v414 = vld [vmem:[#allocation2 + $0xe8] sm:$0xff]
  %v415 = vld [vmem:[#allocation2 + $0xf0] sm:$0xff]
  %v416 = vld [vmem:[#allocation2 + $0xf8] sm:$0xff]
  %v417 = vld [vmem:[#allocation2 + $0x100] sm:$0xff]
  %v418 = vld [vmem:[#allocation2 + $0x108] sm:$0xff]
  %v419 = vld [vmem:[#allocation2 + $0x110] sm:$0xff]
  %v420 = vld [vmem:[#allocation2 + $0x118] sm:$0xff]
  %v421 = vpack.c.bf16 %v413, %v412
  %v422 = vpack.c.bf16 %v415, %v414
  %v423 = vpack.c.bf16 %v417, %v416
  %v424 = vpack.c.bf16 %v419, %v418
  %v425 = vpack.c.bf16 %v420, %v420
  %v427 = vsel %vm245, %v425, 0
  %429 = vmatprep.subr.bf16.mxu0 0
  %430 = vmatpush1.bf16.msra.mxu0 %v421
  %431 = vmatprep.subr.bf16.mxu0 0
  %432 = vmatpush1.bf16.msra.mxu0 %v422
  %433 = vmatprep.subr.bf16.mxu0 0
  %434 = vmatpush1.bf16.msra.mxu0 %v423
  %435 = vmatprep.subr.bf16.mxu0 0
  %436 = vmatpush1.bf16.msra.mxu0 %v424
  %437 = vmatprep.subr.bf16.mxu0 0
  %438 = vmatpush1.bf16.msra.mxu0 %v427
  %439 = vmatprep.subr.bf16.mxu0 0
  %440 = vmatpush1.bf16.msra.mxu0 0
  %441 = vmatprep.subr.bf16.mxu0 0
  %442 = vmatpush1.bf16.msra.mxu0 0
  %443 = vmatprep.subr.bf16.mxu0 0
  %444 = vmatpush1.bf16.msra.mxu0 0
  %445 = vmatprep.subr.bf16.mxu0 0
  %446 = vmatpush1.bf16.msra.mxu0 0
  %447 = vmatprep.subr.bf16.mxu0 0
  %448 = vmatpush1.bf16.msra.mxu0 0
  %449 = vmatprep.subr.bf16.mxu0 0
  %450 = vmatpush1.bf16.msra.mxu0 0
  %451 = vmatprep.subr.bf16.mxu0 0
  %452 = vmatpush1.bf16.msra.mxu0 0
  %453 = vmatprep.subr.bf16.mxu0 0
  %454 = vmatpush1.bf16.msra.mxu0 0
  %455 = vmatprep.subr.bf16.mxu0 0
  %456 = vmatpush1.bf16.msra.mxu0 0
  %457 = vmatprep.subr.bf16.mxu0 0
  %458 = vmatpush1.bf16.msra.mxu0 0
  %459 = vmatprep.subr.bf16.mxu0 0
  %460 = vmatpush1.bf16.msra.mxu0 0
  %461 = vmatprep.mubr.bf16.mxu0 0
  %462 = vmatmul.mubr.bf16.gmra.mrb[0].mxu0 %v243
  %v463 = vpop.f32.mrb[0].mxu0
  %v464 = vadd.f32 %v229, %v463
  %v465 = vpop.f32.mrb[0].mxu0
  %v466 = vpop.f32.mrb[0].mxu0
  %v467 = vadd.f32 %v234, %v466
  %v468 = vpop.f32.mrb[0].mxu0
  %469 = vdwg.mxu0
  %v470 = vmax.f32 %v464, 0.0
  %v471 = vmax.f32 %v467, 0.0
  %472 = vrot.lane.b32.xlu0 %v470, 5
  %v473 = vpop.permute.xlu0 %472
  %474 = vrot.lane.b32.xlu0 %v471, 5
  %v475 = vpop.permute.xlu0 %474
  %v476 = vsel %vm55, %v473, 0.0
  %v477 = vsel %vm55, %v475, 0.0
  %478 = vst [vmem:[#allocation3] sm:$0xff] %v476
  %479 = vst [vmem:[#allocation3 + $0x8] sm:$0xff] %v477
  %480 = vrot.lane.b32.xlu0 %v410, 4
  %v481 = vpop.permute.xlu0 %480
  %482 = vrot.lane.b32.xlu0 %v411, 4
  %v483 = vpop.permute.xlu0 %482
  %v484 = vsel %vm69, %v481, 0.0
  %v485 = vsel %vm69, %v483, 0.0
  %486 = vst [vmem:[#allocation3 + $0x10] sm:$0xff] %v484
  %487 = vst [vmem:[#allocation3 + $0x18] sm:$0xff] %v485
  %488 = vrot.lane.b32.xlu0 %v470, 4
  %v489 = vpop.permute.xlu0 %488
  %490 = vrot.lane.b32.xlu0 %v471, 4
  %v491 = vpop.permute.xlu0 %490
  %v492 = vsel %vm69, %v489, 0.0
  %v493 = vsel %vm69, %v491, 0.0
  %494 = vst [vmem:[#allocation3 + $0x20] sm:$0xff] %v492
  %495 = vst [vmem:[#allocation3 + $0x28] sm:$0xff] %v493
  %496 = vrot.lane.b32.xlu0 %v350, 1
  %v497 = vpop.permute.xlu0 %496
  %498 = vrot.lane.b32.xlu0 %v351, 1
  %v499 = vpop.permute.xlu0 %498
  %v500 = vsel %vm89, %v497, 0.0
  %v501 = vsel %vm89, %v499, 0.0
  %502 = vst [vmem:[#allocation3 + $0x30] sm:$0xff] %v500
  %503 = vst [vmem:[#allocation3 + $0x38] sm:$0xff] %v501
  %v504 = vsel %vm99, %v290, 0.0
  %v505 = vsel %vm99, %v291, 0.0
  %506 = vst [vmem:[#allocation3 + $0x40] sm:$0xff] %v504
  %507 = vst [vmem:[#allocation3 + $0x48] sm:$0xff] %v505
  %v508 = vsel %vm99, %v350, 0.0
  %v509 = vsel %vm99, %v351, 0.0
  %510 = vst [vmem:[#allocation3 + $0x50] sm:$0xff] %v508
  %511 = vst [vmem:[#allocation3 + $0x58] sm:$0xff] %v509
  %512 = vrot.lane.b32.xlu0 %v470, 1
  %v513 = vpop.permute.xlu0 %512
  %514 = vrot.lane.b32.xlu0 %v471, 1
  %v515 = vpop.permute.xlu0 %514
  %v516 = vsel %vm89, %v513, 0.0
  %v517 = vsel %vm89, %v515, 0.0
  %518 = vst [vmem:[#allocation3 + $0x60] sm:$0xff] %v516
  %519 = vst [vmem:[#allocation3 + $0x68] sm:$0xff] %v517
  %v520 = vsel %vm99, %v410, 0.0
  %v521 = vsel %vm99, %v411, 0.0
  %522 = vst [vmem:[#allocation3 + $0x70] sm:$0xff] %v520
  %523 = vst [vmem:[#allocation3 + $0x78] sm:$0xff] %v521
  %v524 = vsel %vm99, %v470, 0.0
  %v525 = vsel %vm99, %v471, 0.0
  %526 = vst [vmem:[#allocation3 + $0x80] sm:$0xff] %v524
  %527 = vst [vmem:[#allocation3 + $0x88] sm:$0xff] %v525
  %528 = vst [vmem:[#allocation3 + $0x90] sm:$0xff] %v484
  %529 = vst [vmem:[#allocation3 + $0x98] sm:$0xff] %v485
  %530 = vst [vmem:[#allocation3 + $0xa0] sm:$0xff] %v492
  %531 = vst [vmem:[#allocation3 + $0xa8] sm:$0xff] %v493
  %532 = vrot.lane.b32.xlu0 %v410, 3
  %v533 = vpop.permute.xlu0 %532
  %534 = vrot.lane.b32.xlu0 %v411, 3
  %v535 = vpop.permute.xlu0 %534
  %v536 = vsel %vm126, %v533, 0.0
  %v537 = vsel %vm126, %v535, 0.0
  %538 = vst [vmem:[#allocation3 + $0xb0] sm:$0xff] %v536
  %539 = vst [vmem:[#allocation3 + $0xb8] sm:$0xff] %v537
  %540 = vst [vmem:[#allocation3 + $0xc0] sm:$0xff] %v504
  %541 = vst [vmem:[#allocation3 + $0xc8] sm:$0xff] %v505
  %542 = vst [vmem:[#allocation3 + $0xd0] sm:$0xff] %v508
  %543 = vst [vmem:[#allocation3 + $0xd8] sm:$0xff] %v509
  %544 = vrot.lane.b32.xlu0 %v290, 127
  %v545 = vpop.permute.xlu0 %544
  %546 = vrot.lane.b32.xlu0 %v291, 127
  %v547 = vpop.permute.xlu0 %546
  %v548 = vsel %vm140, %v545, 0.0
  %v549 = vsel %vm140, %v547, 0.0
  %550 = vst [vmem:[#allocation3 + $0xe0] sm:$0xff] %v548
  %551 = vst [vmem:[#allocation3 + $0xe8] sm:$0xff] %v549
  %552 = vst [vmem:[#allocation3 + $0xf0] sm:$0xff] %v520
  %553 = vst [vmem:[#allocation3 + $0xf8] sm:$0xff] %v521
  %554 = vst [vmem:[#allocation3 + $0x100] sm:$0xff] %v524
  %555 = vst [vmem:[#allocation3 + $0x108] sm:$0xff] %v525
  %556 = vrot.lane.b32.xlu0 %v410, 127
  %v557 = vpop.permute.xlu0 %556
  %558 = vrot.lane.b32.xlu0 %v411, 127
  %v559 = vpop.permute.xlu0 %558
  %v560 = vsel %vm140, %v557, 0.0
  %v561 = vsel %vm140, %v559, 0.0
  %562 = vst [vmem:[#allocation3 + $0x110] sm:$0xff] %v560
  %563 = vst [vmem:[#allocation3 + $0x118] sm:$0xff] %v561
  %564 = vst [vmem:[#allocation3 + $0x120] sm:$0xff] %v500
  %565 = vst [vmem:[#allocation3 + $0x128] sm:$0xff] %v501
  %566 = vst [vmem:[#allocation3 + $0x130] sm:$0xff] %v504
  %567 = vst [vmem:[#allocation3 + $0x138] sm:$0xff] %v505
  %568 = vst [vmem:[#allocation3 + $0x140] sm:$0xff] %v508
  %569 = vst [vmem:[#allocation3 + $0x148] sm:$0xff] %v509
  %570 = vst [vmem:[#allocation3 + $0x150] sm:$0xff] %v516
  %571 = vst [vmem:[#allocation3 + $0x158] sm:$0xff] %v517
  %572 = vst [vmem:[#allocation3 + $0x160] sm:$0xff] %v520
  %573 = vst [vmem:[#allocation3 + $0x168] sm:$0xff] %v521
  %574 = vst [vmem:[#allocation3 + $0x170] sm:$0xff] %v524
  %575 = vst [vmem:[#allocation3 + $0x178] sm:$0xff] %v525
  %576 = vrot.lane.b32.xlu0 %v350, 125
  %v577 = vpop.permute.xlu0 %576
  %578 = vrot.lane.b32.xlu0 %v351, 125
  %v579 = vpop.permute.xlu0 %578
  %v580 = vsel %vm169, %v577, 0.0
  %v581 = vsel %vm169, %v579, 0.0
  %582 = vst [vmem:[#allocation3 + $0x180] sm:$0xff] %v580
  %583 = vst [vmem:[#allocation3 + $0x188] sm:$0xff] %v581
  %584 = vrot.lane.b32.xlu0 %v290, 124
  %v585 = vpop.permute.xlu0 %584
  %586 = vrot.lane.b32.xlu0 %v291, 124
  %v587 = vpop.permute.xlu0 %586
  %v588 = vsel %vm181, %v585, 0.0
  %v589 = vsel %vm181, %v587, 0.0
  %590 = vst [vmem:[#allocation3 + $0x190] sm:$0xff] %v588
  %591 = vst [vmem:[#allocation3 + $0x198] sm:$0xff] %v589
  %592 = vrot.lane.b32.xlu0 %v350, 124
  %v593 = vpop.permute.xlu0 %592
  %594 = vrot.lane.b32.xlu0 %v351, 124
  %v595 = vpop.permute.xlu0 %594
  %v596 = vsel %vm181, %v593, 0.0
  %v597 = vsel %vm181, %v595, 0.0
  %598 = vst [vmem:[#allocation3 + $0x1a0] sm:$0xff] %v596
  %599 = vst [vmem:[#allocation3 + $0x1a8] sm:$0xff] %v597
  %600 = vst [vmem:[#allocation3 + $0x1b0] sm:$0xff] %v504
  %601 = vst [vmem:[#allocation3 + $0x1b8] sm:$0xff] %v505
  %602 = vst [vmem:[#allocation3 + $0x1c0] sm:$0xff] %v508
  %603 = vst [vmem:[#allocation3 + $0x1c8] sm:$0xff] %v509
  %604 = vst [vmem:[#allocation3 + $0x1d0] sm:$0xff] %v548
  %605 = vst [vmem:[#allocation3 + $0x1d8] sm:$0xff] %v549
  %606 = vst [vmem:[#allocation3 + $0x1e0] sm:$0xff] %v520
  %607 = vst [vmem:[#allocation3 + $0x1e8] sm:$0xff] %v521
  %608 = vst [vmem:[#allocation3 + $0x1f0] sm:$0xff] %v524
  %609 = vst [vmem:[#allocation3 + $0x1f8] sm:$0xff] %v525
  %610 = vst [vmem:[#allocation3 + $0x200] sm:$0xff] %v560
  %611 = vst [vmem:[#allocation3 + $0x208] sm:$0xff] %v561
  %612 = vst [vmem:[#allocation3 + $0x210] sm:$0xff] %v588
  %613 = vst [vmem:[#allocation3 + $0x218] sm:$0xff] %v589
  %614 = vst [vmem:[#allocation3 + $0x220] sm:$0xff] %v596
  %615 = vst [vmem:[#allocation3 + $0x228] sm:$0xff] %v597
  %616 = vrot.lane.b32.xlu0 %v290, 123
  %v617 = vpop.permute.xlu0 %616
  %618 = vrot.lane.b32.xlu0 %v291, 123
  %v619 = vpop.permute.xlu0 %618
  %v620 = vsel %vm205, %v617, 0.0
  %v621 = vsel %vm205, %v619, 0.0
  %622 = vst [vmem:[#allocation3 + $0x230] sm:$0xff] %v620
  %623 = vst [vmem:[#allocation3 + $0x238] sm:$0xff] %v621
  %v624 = vld [vmem:[%s4] sm:$0xff]
  %v625 = vld [vmem:[%s4 + $0x8] sm:$0xff]
  %v626 = vld [vmem:[%s5] sm:$0xff]
  %v627 = vld [vmem:[%s5 + $0x8] sm:$0xff]
  %v628 = vld [vmem:[#allocation3] sm:$0xff]
  %v629 = vld [vmem:[#allocation3 + $0x8] sm:$0xff]
  %v630 = vld [vmem:[#allocation3 + $0x10] sm:$0xff]
  %v631 = vld [vmem:[#allocation3 + $0x18] sm:$0xff]
  %v632 = vld [vmem:[#allocation3 + $0x20] sm:$0xff]
  %v633 = vld [vmem:[#allocation3 + $0x28] sm:$0xff]
  %v634 = vld [vmem:[#allocation3 + $0x30] sm:$0xff]
  %v635 = vld [vmem:[#allocation3 + $0x38] sm:$0xff]
  %v636 = vld [vmem:[#allocation3 + $0x40] sm:$0xff]
  %v637 = vld [vmem:[#allocation3 + $0x48] sm:$0xff]
  %v638 = vld [vmem:[#allocation3 + $0x50] sm:$0xff]
  %v639 = vld [vmem:[#allocation3 + $0x58] sm:$0xff]
  %v640 = vld [vmem:[#allocation3 + $0x60] sm:$0xff]
  %v641 = vld [vmem:[#allocation3 + $0x68] sm:$0xff]
  %v642 = vld [vmem:[#allocation3 + $0x70] sm:$0xff]
  %v643 = vld [vmem:[#allocation3 + $0x78] sm:$0xff]
  %v644 = vld [vmem:[#allocation3 + $0x80] sm:$0xff]
  %v645 = vld [vmem:[#allocation3 + $0x88] sm:$0xff]
  %v646 = vpack.c.bf16 %v629, %v628
  %v647 = vpack.c.bf16 %v631, %v630
  %v648 = vpack.c.bf16 %v633, %v632
  %v649 = vpack.c.bf16 %v635, %v634
  %v650 = vpack.c.bf16 %v637, %v636
  %v651 = vpack.c.bf16 %v639, %v638
  %v652 = vpack.c.bf16 %v641, %v640
  %v653 = vpack.c.bf16 %v643, %v642
  %v654 = vpack.c.bf16 %v645, %v644
  %656 = vset.pattern.permute.xlu0 0
  %657 = vperm.xlu0 %656, %v626
  %v658 = vpop.permute.xlu0 %657
  %661 = vset.pattern.permute.xlu0 0
  %662 = vperm.xlu0 %661, %v627
  %v663 = vpop.permute.xlu0 %662
  %v667 = vunpack.c.l.b16 %v624
  %v668 = vunpack.c.h.b16 %v624
  %v669 = vunpack.c.l.b16 %v625
  %v670 = vunpack.c.h.b16 %v625
  %v671 = vpack.c.b16 %v669, %v667
  %v672 = vpack.c.b16 %v670, %v668
  %vm674 = vcmask 130048
  %v676 = vsel %vm674, %v672, 0
  %678 = vmatprep.subr.bf16.mxu0 0
  %679 = vmatpush1.bf16.msra.mxu0 %v646
  %680 = vmatprep.subr.bf16.mxu0 0
  %681 = vmatpush1.bf16.msra.mxu0 %v647
  %682 = vmatprep.subr.bf16.mxu0 0
  %683 = vmatpush1.bf16.msra.mxu0 %v648
  %684 = vmatprep.subr.bf16.mxu0 0
  %685 = vmatpush1.bf16.msra.mxu0 %v649
  %686 = vmatprep.subr.bf16.mxu0 0
  %687 = vmatpush1.bf16.msra.mxu0 %v650
  %688 = vmatprep.subr.bf16.mxu0 0
  %689 = vmatpush1.bf16.msra.mxu0 %v651
  %690 = vmatprep.subr.bf16.mxu0 0
  %691 = vmatpush1.bf16.msra.mxu0 %v652
  %692 = vmatprep.subr.bf16.mxu0 0
  %693 = vmatpush1.bf16.msra.mxu0 %v653
  %694 = vmatprep.subr.bf16.mxu0 0
  %695 = vmatpush1.bf16.msra.mxu0 %v654
  %696 = vmatprep.subr.bf16.mxu0 0
  %697 = vmatpush1.bf16.msra.mxu0 0
  %698 = vmatprep.subr.bf16.mxu0 0
  %699 = vmatpush1.bf16.msra.mxu0 0
  %700 = vmatprep.subr.bf16.mxu0 0
  %701 = vmatpush1.bf16.msra.mxu0 0
  %702 = vmatprep.subr.bf16.mxu0 0
  %703 = vmatpush1.bf16.msra.mxu0 0
  %704 = vmatprep.subr.bf16.mxu0 0
  %705 = vmatpush1.bf16.msra.mxu0 0
  %706 = vmatprep.subr.bf16.mxu0 0
  %707 = vmatpush1.bf16.msra.mxu0 0
  %708 = vmatprep.subr.bf16.mxu0 0
  %709 = vmatpush1.bf16.msra.mxu0 0
  %710 = vmatprep.mubr.bf16.mxu0 %v676
  %711 = vmatmul.mubr.bf16.gmra.mrb[0].mxu0 %v671
  %v712 = vpop.f32.mrb[0].mxu0
  %v713 = vadd.f32 %v658, %v712
  %v714 = vpop.f32.mrb[0].mxu0
  %v715 = vpop.f32.mrb[0].mxu0
  %v716 = vadd.f32 %v663, %v715
  %v717 = vpop.f32.mrb[0].mxu0
  %718 = vdwg.mxu0
  %v719 = vld [vmem:[#allocation3 + $0x90] sm:$0xff]
  %v720 = vld [vmem:[#allocation3 + $0x98] sm:$0xff]
  %v721 = vld [vmem:[#allocation3 + $0xa0] sm:$0xff]
  %v722 = vld [vmem:[#allocation3 + $0xa8] sm:$0xff]
  %v723 = vld [vmem:[#allocation3 + $0xb0] sm:$0xff]
  %v724 = vld [vmem:[#allocation3 + $0xb8] sm:$0xff]
  %v725 = vld [vmem:[#allocation3 + $0xc0] sm:$0xff]
  %v726 = vld [vmem:[#allocation3 + $0xc8] sm:$0xff]
  %v727 = vld [vmem:[#allocation3 + $0xd0] sm:$0xff]
  %v728 = vld [vmem:[#allocation3 + $0xd8] sm:$0xff]
  %v729 = vld [vmem:[#allocation3 + $0xe0] sm:$0xff]
  %v730 = vld [vmem:[#allocation3 + $0xe8] sm:$0xff]
  %v731 = vld [vmem:[#allocation3 + $0xf0] sm:$0xff]
  %v732 = vld [vmem:[#allocation3 + $0xf8] sm:$0xff]
  %v733 = vld [vmem:[#allocation3 + $0x100] sm:$0xff]
  %v734 = vld [vmem:[#allocation3 + $0x108] sm:$0xff]
  %v735 = vld [vmem:[#allocation3 + $0x110] sm:$0xff]
  %v736 = vld [vmem:[#allocation3 + $0x118] sm:$0xff]
  %v737 = vpack.c.bf16 %v720, %v719
  %v738 = vpack.c.bf16 %v722, %v721
  %v739 = vpack.c.bf16 %v724, %v723
  %v740 = vpack.c.bf16 %v726, %v725
  %v741 = vpack.c.bf16 %v728, %v727
  %v742 = vpack.c.bf16 %v730, %v729
  %v743 = vpack.c.bf16 %v732, %v731
  %v744 = vpack.c.bf16 %v734, %v733
  %v745 = vpack.c.bf16 %v736, %v735
  %746 = vmatprep.subr.bf16.mxu0 0
  %747 = vmatpush1.bf16.msra.mxu0 %v737
  %748 = vmatprep.subr.bf16.mxu0 0
  %749 = vmatpush1.bf16.msra.mxu0 %v738
  %750 = vmatprep.subr.bf16.mxu0 0
  %751 = vmatpush1.bf16.msra.mxu0 %v739
  %752 = vmatprep.subr.bf16.mxu0 0
  %753 = vmatpush1.bf16.msra.mxu0 %v740
  %754 = vmatprep.subr.bf16.mxu0 0
  %755 = vmatpush1.bf16.msra.mxu0 %v741
  %756 = vmatprep.subr.bf16.mxu0 0
  %757 = vmatpush1.bf16.msra.mxu0 %v742
  %758 = vmatprep.subr.bf16.mxu0 0
  %759 = vmatpush1.bf16.msra.mxu0 %v743
  %760 = vmatprep.subr.bf16.mxu0 0
  %761 = vmatpush1.bf16.msra.mxu0 %v744
  %762 = vmatprep.subr.bf16.mxu0 0
  %763 = vmatpush1.bf16.msra.mxu0 %v745
  %764 = vmatprep.subr.bf16.mxu0 0
  %765 = vmatpush1.bf16.msra.mxu0 0
  %766 = vmatprep.subr.bf16.mxu0 0
  %767 = vmatpush1.bf16.msra.mxu0 0
  %768 = vmatprep.subr.bf16.mxu0 0
  %769 = vmatpush1.bf16.msra.mxu0 0
  %770 = vmatprep.subr.bf16.mxu0 0
  %771 = vmatpush1.bf16.msra.mxu0 0
  %772 = vmatprep.subr.bf16.mxu0 0
  %773 = vmatpush1.bf16.msra.mxu0 0
  %774 = vmatprep.subr.bf16.mxu0 0
  %775 = vmatpush1.bf16.msra.mxu0 0
  %776 = vmatprep.subr.bf16.mxu0 0
  %777 = vmatpush1.bf16.msra.mxu0 0
  %778 = vmatprep.mubr.bf16.mxu0 %v676
  %779 = vmatmul.mubr.bf16.gmra.mrb[0].mxu0 %v671
  %v780 = vpop.f32.mrb[0].mxu0
  %v781 = vadd.f32 %v658, %v780
  %v782 = vpop.f32.mrb[0].mxu0
  %v783 = vpop.f32.mrb[0].mxu0
  %v784 = vadd.f32 %v663, %v783
  %v785 = vpop.f32.mrb[0].mxu0
  %786 = vdwg.mxu0
  %v787 = vld [vmem:[#allocation3 + $0x120] sm:$0xff]
  %v788 = vld [vmem:[#allocation3 + $0x128] sm:$0xff]
  %v789 = vld [vmem:[#allocation3 + $0x130] sm:$0xff]
  %v790 = vld [vmem:[#allocation3 + $0x138] sm:$0xff]
  %v791 = vld [vmem:[#allocation3 + $0x140] sm:$0xff]
  %v792 = vld [vmem:[#allocation3 + $0x148] sm:$0xff]
  %v793 = vld [vmem:[#allocation3 + $0x150] sm:$0xff]
  %v794 = vld [vmem:[#allocation3 + $0x158] sm:$0xff]
  %v795 = vld [vmem:[#allocation3 + $0x160] sm:$0xff]
  %v796 = vld [vmem:[#allocation3 + $0x168] sm:$0xff]
  %v797 = vld [vmem:[#allocation3 + $0x170] sm:$0xff]
  %v798 = vld [vmem:[#allocation3 + $0x178] sm:$0xff]
  %v799 = vld [vmem:[#allocation3 + $0x180] sm:$0xff]
  %v800 = vld [vmem:[#allocation3 + $0x188] sm:$0xff]
  %v801 = vld [vmem:[#allocation3 + $0x190] sm:$0xff]
  %v802 = vld [vmem:[#allocation3 + $0x198] sm:$0xff]
  %v803 = vld [vmem:[#allocation3 + $0x1a0] sm:$0xff]
  %v804 = vld [vmem:[#allocation3 + $0x1a8] sm:$0xff]
  %v805 = vpack.c.bf16 %v788, %v787
  %v806 = vpack.c.bf16 %v790, %v789
  %v807 = vpack.c.bf16 %v792, %v791
  %v808 = vpack.c.bf16 %v794, %v793
  %v809 = vpack.c.bf16 %v796, %v795
  %v810 = vpack.c.bf16 %v798, %v797
  %v811 = vpack.c.bf16 %v800, %v799
  %v812 = vpack.c.bf16 %v802, %v801
  %v813 = vpack.c.bf16 %v804, %v803
  %814 = vmatprep.subr.bf16.mxu0 0
  %815 = vmatpush1.bf16.msra.mxu0 %v805
  %816 = vmatprep.subr.bf16.mxu0 0
  %817 = vmatpush1.bf16.msra.mxu0 %v806
  %818 = vmatprep.subr.bf16.mxu0 0
  %819 = vmatpush1.bf16.msra.mxu0 %v807
  %820 = vmatprep.subr.bf16.mxu0 0
  %821 = vmatpush1.bf16.msra.mxu0 %v808
  %822 = vmatprep.subr.bf16.mxu0 0
  %823 = vmatpush1.bf16.msra.mxu0 %v809
  %824 = vmatprep.subr.bf16.mxu0 0
  %825 = vmatpush1.bf16.msra.mxu0 %v810
  %826 = vmatprep.subr.bf16.mxu0 0
  %827 = vmatpush1.bf16.msra.mxu0 %v811
  %828 = vmatprep.subr.bf16.mxu0 0
  %829 = vmatpush1.bf16.msra.mxu0 %v812
  %830 = vmatprep.subr.bf16.mxu0 0
  %831 = vmatpush1.bf16.msra.mxu0 %v813
  %832 = vmatprep.subr.bf16.mxu0 0
  %833 = vmatpush1.bf16.msra.mxu0 0
  %834 = vmatprep.subr.bf16.mxu0 0
  %835 = vmatpush1.bf16.msra.mxu0 0
  %836 = vmatprep.subr.bf16.mxu0 0
  %837 = vmatpush1.bf16.msra.mxu0 0
  %838 = vmatprep.subr.bf16.mxu0 0
  %839 = vmatpush1.bf16.msra.mxu0 0
  %840 = vmatprep.subr.bf16.mxu0 0
  %841 = vmatpush1.bf16.msra.mxu0 0
  %842 = vmatprep.subr.bf16.mxu0 0
  %843 = vmatpush1.bf16.msra.mxu0 0
  %844 = vmatprep.subr.bf16.mxu0 0
  %845 = vmatpush1.bf16.msra.mxu0 0
  %846 = vmatprep.mubr.bf16.mxu0 %v676
  %847 = vmatmul.mubr.bf16.gmra.mrb[0].mxu0 %v671
  %v848 = vpop.f32.mrb[0].mxu0
  %v849 = vadd.f32 %v658, %v848
  %v850 = vpop.f32.mrb[0].mxu0
  %v851 = vpop.f32.mrb[0].mxu0
  %v852 = vadd.f32 %v663, %v851
  %v853 = vpop.f32.mrb[0].mxu0
  %854 = vdwg.mxu0
  %v855 = vld [vmem:[#allocation3 + $0x1b0] sm:$0xff]
  %v856 = vld [vmem:[#allocation3 + $0x1b8] sm:$0xff]
  %v857 = vld [vmem:[#allocation3 + $0x1c0] sm:$0xff]
  %v858 = vld [vmem:[#allocation3 + $0x1c8] sm:$0xff]
  %v859 = vld [vmem:[#allocation3 + $0x1d0] sm:$0xff]
  %v860 = vld [vmem:[#allocation3 + $0x1d8] sm:$0xff]
  %v861 = vld [vmem:[#allocation3 + $0x1e0] sm:$0xff]
  %v862 = vld [vmem:[#allocation3 + $0x1e8] sm:$0xff]
  %v863 = vld [vmem:[#allocation3 + $0x1f0] sm:$0xff]
  %v864 = vld [vmem:[#allocation3 + $0x1f8] sm:$0xff]
  %v865 = vld [vmem:[#allocation3 + $0x200] sm:$0xff]
  %v866 = vld [vmem:[#allocation3 + $0x208] sm:$0xff]
  %v867 = vld [vmem:[#allocation3 + $0x210] sm:$0xff]
  %v868 = vld [vmem:[#allocation3 + $0x218] sm:$0xff]
  %v869 = vld [vmem:[#allocation3 + $0x220] sm:$0xff]
  %v870 = vld [vmem:[#allocation3 + $0x228] sm:$0xff]
  %v871 = vld [vmem:[#allocation3 + $0x230] sm:$0xff]
  %v872 = vld [vmem:[#allocation3 + $0x238] sm:$0xff]
  %v873 = vpack.c.bf16 %v856, %v855
  %v874 = vpack.c.bf16 %v858, %v857
  %v875 = vpack.c.bf16 %v860, %v859
  %v876 = vpack.c.bf16 %v862, %v861
  %v877 = vpack.c.bf16 %v864, %v863
  %v878 = vpack.c.bf16 %v866, %v865
  %v879 = vpack.c.bf16 %v868, %v867
  %v880 = vpack.c.bf16 %v870, %v869
  %v881 = vpack.c.bf16 %v872, %v871
  %882 = vmatprep.subr.bf16.mxu0 0
  %883 = vmatpush1.bf16.msra.mxu0 %v873
  %884 = vmatprep.subr.bf16.mxu0 0
  %885 = vmatpush1.bf16.msra.mxu0 %v874
  %886 = vmatprep.subr.bf16.mxu0 0
  %887 = vmatpush1.bf16.msra.mxu0 %v875
  %888 = vmatprep.subr.bf16.mxu0 0
  %889 = vmatpush1.bf16.msra.mxu0 %v876
  %890 = vmatprep.subr.bf16.mxu0 0
  %891 = vmatpush1.bf16.msra.mxu0 %v877
  %892 = vmatprep.subr.bf16.mxu0 0
  %893 = vmatpush1.bf16.msra.mxu0 %v878
  %894 = vmatprep.subr.bf16.mxu0 0
  %895 = vmatpush1.bf16.msra.mxu0 %v879
  %896 = vmatprep.subr.bf16.mxu0 0
  %897 = vmatpush1.bf16.msra.mxu0 %v880
  %898 = vmatprep.subr.bf16.mxu0 0
  %899 = vmatpush1.bf16.msra.mxu0 %v881
  %900 = vmatprep.subr.bf16.mxu0 0
  %901 = vmatpush1.bf16.msra.mxu0 0
  %902 = vmatprep.subr.bf16.mxu0 0
  %903 = vmatpush1.bf16.msra.mxu0 0
  %904 = vmatprep.subr.bf16.mxu0 0
  %905 = vmatpush1.bf16.msra.mxu0 0
  %906 = vmatprep.subr.bf16.mxu0 0
  %907 = vmatpush1.bf16.msra.mxu0 0
  %908 = vmatprep.subr.bf16.mxu0 0
  %909 = vmatpush1.bf16.msra.mxu0 0
  %910 = vmatprep.subr.bf16.mxu0 0
  %911 = vmatpush1.bf16.msra.mxu0 0
  %912 = vmatprep.subr.bf16.mxu0 0
  %913 = vmatpush1.bf16.msra.mxu0 0
  %914 = vmatprep.mubr.bf16.mxu0 %v676
  %915 = vmatmul.mubr.bf16.gmra.mrb[0].mxu0 %v671
  %v916 = vpop.f32.mrb[0].mxu0
  %v917 = vadd.f32 %v658, %v916
  %v918 = vpop.f32.mrb[0].mxu0
  %v919 = vpop.f32.mrb[0].mxu0
  %v920 = vadd.f32 %v663, %v919
  %v921 = vpop.f32.mrb[0].mxu0
  %922 = vdwg.mxu0
  %v923 = vmax.f32 %v713, %v781
  %v924 = vmax.f32 %v716, %v784
  %vm925 = vcmp.ge.f32.partialorder %v713, %v781
  %vm926 = vcmp.ge.f32.partialorder %v716, %v784
  %v927 = vsel %vm925, 0, 1
  %v928 = vsel %vm926, 0, 1
  %v929 = vmax.f32 %v849, %v917
  %v930 = vmax.f32 %v852, %v920
  %vm931 = vcmp.ge.f32.partialorder %v849, %v917
  %vm932 = vcmp.ge.f32.partialorder %v852, %v920
  %v933 = vsel %vm931, 0, 1
  %v934 = vsel %vm932, 0, 1
  %vm935 = vcmp.ge.f32.partialorder %v923, %v929
  %vm936 = vcmp.ge.f32.partialorder %v924, %v930
  %v937 = vmax.f32 %v923, %v929
  %v938 = vmax.f32 %v924, %v930
  %v939 = vsel %vm935, 0, 1
  %v940 = vsel %vm936, 0, 1
  %v941 = vsel %vm935, %v927, %v933
  %v942 = vsel %vm936, %v928, %v934
  %943 = vst [vmem:[%s6] sm:$0xff] %v937
  %944 = vst [vmem:[%s6 + $0x8] sm:$0xff] %v938
  %v945 = vmul.u32 %v939, 8
  %v946 = vmul.u32 %v940, 8
  %v947 = vlaneseq
  %v948 = vshrl.u32 %v947, 7
  %v949 = vsub.s32 0, %v948
  %v950 = vrot.slane %v28, %v949
  %v951 = vadd.s32 %v950, %v945
  %v952 = vadd.s32 %v950, %v946
  %v953 = vadd.s32 %v951, %v941
  %v954 = vadd.s32 %v952, %v942
  %955 = vst [vmem:[%s7] sm:$0xff] %v953
  %956 = vst [vmem:[%s7 + $0x8] sm:$0xff] %v954
  // Predicated region
  $region26: #{segnet_encoder_forward.3} parent=0 // pred_check
    _
  $region27: #{segnet_encoder_forward.3} parent=0 // pred_check_branch
    %958 = sbr.rel (0) target = $region29
  $region28: #{segnet_encoder_forward.3} parent=0 // pred_region
    _
  $region29: #{segnet_encoder_forward.3} parent=0 // pred_fallthru
    _
  // Predicated region
  $region30: #{segnet_encoder_forward.3} parent=0 // pred_check
    _
  $region31: #{segnet_encoder_forward.3} parent=0 // pred_check_branch
    %960 = sbr.rel (0) target = $region33
  $region32: #{segnet_encoder_forward.3} parent=0 // pred_region
    _
  $region33: #{segnet_encoder_forward.3} parent=0 // pred_fallthru
    _
  // Predicated region
  $region34: #{segnet_encoder_forward.3} parent=0 // pred_check
    _
  $region35: #{segnet_encoder_forward.3} parent=0 // pred_check_branch
    %962 = sbr.rel (0) target = $region37
  $region36: #{segnet_encoder_forward.3} parent=0 // pred_region
    _
  $region37: #{segnet_encoder_forward.3} parent=0 // pred_fallthru
    _
  // Predicated region
  $region38: #{segnet_encoder_forward.3} parent=0 // pred_check
    _
  $region39: #{segnet_encoder_forward.3} parent=0 // pred_check_branch
    %964 = sbr.rel (0) target = $region41
  $region40: #{segnet_encoder_forward.3} parent=0 // pred_region
    _
  $region41: #{segnet_encoder_forward.3} parent=0 // pred_fallthru
    _

</llo_original>
